<compile_context>
chip_gen: v6e
topology: v6e:2x2x1
jax: 0.10.0
libtpu: 0.0.40
codegen_flags: <defaults>
</compile_context>

<pallas_src>
import jax
import jax.numpy as jnp
from jax.experimental import pallas as pl
from jax.experimental.pallas import tpu as pltpu

# ----------------------- configuration (opts) -----------------------
B = 4                 # batch
N_FEATURES = 16       # opts.n_features
N_CANDIDATES = 4      # receiver candidates (visa setting)
VOCAB = 8             # opts.vocab_size
EMB = 16              # opts.embedding
SENDER_HIDDEN = 32    # opts.sender_hidden
RECEIVER_HIDDEN = 32  # opts.receiver_hidden
MAX_LEN = 6           # opts.max_len
TEMPERATURE = 1.0     # opts.temperature
LENGTH_COST = 0.01    # opts.length_cost
LABEL_COEFF = 1.0     # opts.label_coeff
FEATURES_COEFF = 0.5  # opts.features_coeff
L1 = MAX_LEN + 1      # message length after eos append

HID = SENDER_HIDDEN   # packed-buffer column width (== RECEIVER_HIDDEN)
assert SENDER_HIDDEN == RECEIVER_HIDDEN == HID

_NEG_BIG = -1.0e30    # stands in for log(0) in the appended eos logits row (avoids -inf/NaN)

# packed weight-buffer row offsets (all multiples of 8 -> clean sublane slices)
R_SENC = 0                              # sender encoder          (F,  Hs)
R_SHH = R_SENC + N_FEATURES             # sender W_hh             (Hs, Hs)
R_SEMBIH = R_SHH + SENDER_HIDDEN        # W_emb @ W_ih            (V,  Hs)
R_SOUT = R_SEMBIH + VOCAB               # hidden_to_output (padded to Hs cols)
R_RIN = R_SOUT + SENDER_HIDDEN          # receiver input encoder  (F,  Hr)
R_RMSGIH = R_RIN + N_FEATURES           # W_msg @ W_ih_r          (V,  Hr)
R_RHH = R_RMSGIH + VOCAB                # receiver W_hh           (Hr, Hr)
R_END = R_RHH + RECEIVER_HIDDEN         # == 144

# packed output layout (one lane-dense (B, 256) store)
OUT_MSG = L1 * VOCAB                    # 56
OUT_ROUT = L1 * N_CANDIDATES            # 28
OUT_STATS = 4                           # [loss, length, z, acc]
OUT_USED = 2 * OUT_MSG + OUT_ROUT + OUT_STATS   # 144
OUT_WIDTH = 256                         # padded to a full 128-lane multiple


# ----------------------- small numeric helpers (in-kernel, f32) -----------------------
def _log_softmax(x):
    m = jnp.max(x, axis=-1, keepdims=True)
    s = x - m
    return s - jnp.log(jnp.sum(jnp.exp(s), axis=-1, keepdims=True))


def _softmax(x):
    m = jnp.max(x, axis=-1, keepdims=True)
    e = jnp.exp(x - m)
    return e / jnp.sum(e, axis=-1, keepdims=True)


def _bf16(x):
    return x.astype(jnp.bfloat16)


# ----------------------- fused Pallas kernel -----------------------
def game_kernel(x_ref,      # (B, F)            f32   sender input
                rin_ref,    # (B, C, F)         f32   receiver input
                lab_ref,    # (B, 1)            int32 labels
                gum_ref,    # (B, MAX_LEN*V)    f32   Gumbel(0,1) noise
                w_ref,      # (144, HID)        bf16  packed weights
                b_ref,      # (8, HID)          f32   packed (fused) biases
                out_ref):   # (B, OUT_WIDTH)    f32   packed outputs
    x = x_ref[...]                                   # (B, F)
    bsz = x.shape[0]

    # -------- hoisted weight / bias loads (one static slice load each) --------
    w_enc = w_ref[R_SENC:R_SHH, :]                   # (F,  Hs)
    w_hh_s = w_ref[R_SHH:R_SEMBIH, :]                # (Hs, Hs)
    w_embih = w_ref[R_SEMBIH:R_SOUT, :]              # (V,  Hs)  = W_emb @ W_ih
    w_out = w_ref[R_SOUT:R_RIN, :]                   # (Hs, Hs)  cols >= V are zero
    w_in_r = w_ref[R_RIN:R_RMSGIH, :]                # (F,  Hr)
    w_msgih = w_ref[R_RMSGIH:R_RHH, :]               # (V,  Hr)  = W_msg @ W_ih_r
    w_hh_r = w_ref[R_RHH:R_END, :]                   # (Hr, Hr)

    b_all = b_ref[...]                               # (8, HID) f32
    b_enc = b_all[0:1, :]
    b_sos = b_all[1:2, :]                            # sos @ W_ih + b_ih + b_hh
    b_cell_s = b_all[2:3, :]                         # b_emb @ W_ih + b_ih + b_hh
    b_out = b_all[3:4, 0:VOCAB]
    b_in_r = b_all[4:5, :]
    b_cell_r = b_all[5:6, :]                         # b_msg @ W_ih_r + b_ih_r + b_hh_r

    # ---------------- sender: encoder -> unrolled RNN -> Gumbel-Softmax ----------------
    prev_h = jnp.tanh(
        jnp.dot(_bf16(x), w_enc, preferred_element_type=jnp.float32) + b_enc)
    gum = gum_ref[...]                               # (B, MAX_LEN*V)

    msg_steps, lg_steps = [], []
    ih = b_sos                                       # step-0 (sos) input contribution
    for t in range(MAX_LEN):                         # static unroll (6 steps)
        h = jnp.tanh(
            ih + jnp.dot(_bf16(prev_h), w_hh_s, preferred_element_type=jnp.float32))
        lg_full = jnp.dot(_bf16(h), w_out, preferred_element_type=jnp.float32)
        logits_t = lg_full[:, 0:VOCAB] + b_out       # (B, V)
        g_t = gum[:, t * VOCAB:(t + 1) * VOCAB]
        # RelaxedOneHotCategorical(logits, T).rsample() == softmax((logits + gumbel)/T)
        sample = _softmax((logits_t + g_t) / TEMPERATURE)
        msg_steps.append(sample)
        lg_steps.append(_log_softmax(logits_t / TEMPERATURE))
        prev_h = h
        # embedding Linear folded into next step's ih weight (no concat, one matmul)
        ih = jnp.dot(_bf16(sample), w_embih, preferred_element_type=jnp.float32) + b_cell_s

    # ---------------- eos append (in-kernel) ----------------
    col = jax.lax.broadcasted_iota(jnp.int32, (bsz, VOCAB), 1)
    eos = (col == 0).astype(jnp.float32)
    log_eos = jnp.where(col == 0, 0.0, _NEG_BIG)     # clamped log(eos)
    msg_steps.append(eos)
    lg_steps.append(log_eos)

    # ---------------- receiver: tanh(Linear(input)), unrolled RNN, log-softmax ----------
    rin = rin_ref[...]                               # (B, C, F)
    c = rin.shape[1]
    f = rin.shape[2]
    hr = RECEIVER_HIDDEN
    emb_in = jnp.tanh(
        jnp.dot(_bf16(rin.reshape(bsz * c, f)), w_in_r,
                preferred_element_type=jnp.float32) + b_in_r
    ).reshape(bsz, c, hr)                            # (B, C, Hr)

    # message-embedding (folded) contributions have no recurrence dependence -> hoist
    m_ih = [jnp.dot(_bf16(m), w_msgih, preferred_element_type=jnp.float32) + b_cell_r
            for m in msg_steps]                      # L1 x (B, Hr)

    rout_steps = []
    prev_hr = None                                   # PyTorch RNNCell: None -> zeros
    for t in range(L1):                              # static unroll (7 steps)
        if prev_hr is None:
            h_r = jnp.tanh(m_ih[t])
        else:
            h_r = jnp.tanh(m_ih[t] + jnp.dot(_bf16(prev_hr), w_hh_r,
                                             preferred_element_type=jnp.float32))
        # (B,C,H)x(B,H) contraction stays on VPU/XLU; at B=C=4 an MXU einsum buys nothing
        energies = jnp.sum(emb_in * h_r[:, None, :], axis=-1)       # (B, C)
        rout_steps.append(_log_softmax(energies))                   # LogSoftmax(dim=1)
        prev_hr = h_r

    # ---------------- loss_visa + accuracy, vectorized over all L1 steps ----------------
    lab = lab_ref[...]                               # (B, 1) int32
    cand = jax.lax.broadcasted_iota(jnp.int32, (bsz, c), 1)
    oh = (cand == lab).astype(jnp.float32)           # (B, C) one-hot labels
    target_feat = jnp.sum(oh[:, :, None] * rin, axis=1)             # r_input[arange, labels]

    r3 = jnp.stack(rout_steps, axis=1)               # (B, L1, C) — already log-softmax
    sm3 = jnp.exp(r3)                                # softmax(r) since sum(exp(r)) == 1
    ce_labels = -jnp.sum(r3 * oh[:, None, :], axis=-1)              # (B, L1)
    # binary_cross_entropy(clamp(softmax(r) @ r_input, 0, 1), target).sum(-1)
    p3 = jnp.clip(jnp.sum(sm3[:, :, :, None] * rin[:, None, :, :], axis=2), 0.0, 1.0)
    log_p = jnp.maximum(jnp.log(p3), -100.0)         # torch BCE log clamp
    log_1mp = jnp.maximum(jnp.log(1.0 - p3), -100.0)
    tgt = target_feat[:, None, :]
    ce_features = jnp.sum(-(tgt * log_p + (1.0 - tgt) * log_1mp), axis=-1)  # (B, L1)
    step_loss3 = LABEL_COEFF * ce_labels + FEATURES_COEFF * ce_features     # (B, L1)
    # accuracy: 100 if value at label equals the row max (argmax proxy; ties count)
    acc3 = jnp.where(jnp.sum(r3 * oh[:, None, :], axis=-1)
                     >= jnp.max(r3, axis=-1), 100.0, 0.0)                   # (B, L1)
    sym0 = jnp.concatenate([m[:, 0:1] for m in msg_steps], axis=-1)         # (B, L1)

    # ---------------- cheap eos-mask scan (unrolled, (B,1) values only) ----------------
    not_eosed = jnp.ones((bsz, 1), jnp.float32)
    loss = jnp.zeros((bsz, 1), jnp.float32)
    z = jnp.zeros((bsz, 1), jnp.float32)
    length = jnp.zeros((bsz, 1), jnp.float32)
    acc_sum = jnp.zeros((bsz, 1), jnp.float32)
    for t in range(L1):
        s0 = sym0[:, t:t + 1]
        add = s0 * not_eosed
        z = z + add
        loss = loss + (step_loss3[:, t:t + 1] + LENGTH_COST * (t + 1)) * add
        length = length + (t + 1) * add
        acc_sum = acc_sum + acc3[:, t:t + 1] * add
        not_eosed = not_eosed * (1.0 - s0)
    z = z + not_eosed
    loss = loss + (step_loss3[:, L1 - 1:L1] + LENGTH_COST * L1) * not_eosed
    length = length + L1 * not_eosed
    acc_sum = acc_sum + acc3[:, L1 - 1:L1] * not_eosed

    # ---------------- single packed, lane-dense store ----------------
    msg_flat = jnp.concatenate(msg_steps, axis=-1)                   # (B, L1*V)
    lg_flat = jnp.concatenate(lg_steps, axis=-1)                     # (B, L1*V)
    rout_flat = jnp.concatenate(rout_steps, axis=-1)                 # (B, L1*C)
    stats = jnp.concatenate([loss, length, z, acc_sum], axis=-1)     # (B, 4)
    pad = jnp.zeros((bsz, OUT_WIDTH - OUT_USED), jnp.float32)
    out_ref[...] = jnp.concatenate([msg_flat, lg_flat, rout_flat, stats, pad], axis=-1)


# ----------------------- wrapper -----------------------
_VMEM = pl.BlockSpec(memory_space=pltpu.MemorySpace.VMEM)


def run_game(w_packed, b_packed, sender_input, receiver_input, labels2d, gumbel):
    return pl.pallas_call(
        game_kernel,
        out_shape=jax.ShapeDtypeStruct((B, OUT_WIDTH), jnp.float32),
        in_specs=[_VMEM] * 6,
        out_specs=_VMEM,
    )(sender_input, receiver_input, labels2d, gumbel, w_packed, b_packed)


@jax.jit
def forward(params, sender_input, labels, receiver_input, key):
    labels2d = labels.astype(jnp.int32).reshape(B, 1)
    # TODO(synk): in-kernel TPU PRNG (pltpu.prng_*) lacks an interpret lowering;
    #             Gumbel noise is drawn here and passed in as a small f32 input.
    gumbel = jax.random.gumbel(key, (B, MAX_LEN * VOCAB), jnp.float32)

    out = run_game(params["w"], params["b"], sender_input, receiver_input,
                   labels2d, gumbel)

    o0 = OUT_MSG
    o1 = 2 * OUT_MSG
    o2 = o1 + OUT_ROUT
    message = out[:, :o0].reshape(B, L1, VOCAB)
    logits = out[:, o0:o1].reshape(B, L1, VOCAB)
    receiver_output = out[:, o1:o2].reshape(B, L1, N_CANDIDATES)
    loss_per_ex = out[:, o2 + 0]
    length = out[:, o2 + 1]
    z = out[:, o2 + 2]
    acc = out[:, o2 + 3]

    # NoChannel: message_nn/logits_nn/receiver_output_nn equal the non-detached tensors,
    # so length_nn == length and accuracy_nn == accuracy.
    return {
        "loss": jnp.mean(loss_per_ex),
        "z": z,
        "length": length,
        "length_nn": length,
        "accuracy": acc,
        "accuracy_nn": acc,
        "message": message,
        "logits": logits,
        "receiver_output": receiver_output,
        "temperature": jnp.array([TEMPERATURE], jnp.float32),
    }


# ----------------------- deterministic parameter init (pre-folded, packed) -------------
def _linear(key, fan_in, fan_out):
    k1, k2 = jax.random.split(key)
    bound = 1.0 / float(fan_in) ** 0.5
    w = jax.random.uniform(k1, (fan_in, fan_out), jnp.float32, -bound, bound)
    b = jax.random.uniform(k2, (1, fan_out), jnp.float32, -bound, bound)
    return w, b


def init_params(key):
    ks = jax.random.split(key, 10)
    s_w_enc, s_b_enc = _linear(ks[0], N_FEATURES, SENDER_HIDDEN)     # sender encoder
    s_w_ih, s_b_ih = _linear(ks[1], EMB, SENDER_HIDDEN)              # sender RNNCell ih
    s_w_hh, s_b_hh = _linear(ks[2], SENDER_HIDDEN, SENDER_HIDDEN)    # sender RNNCell hh
    s_w_out, s_b_out = _linear(ks[3], SENDER_HIDDEN, VOCAB)          # hidden_to_output
    s_w_emb, s_b_emb = _linear(ks[4], VOCAB, EMB)                    # symbol embedding
    sos = 0.01 * jax.random.normal(ks[5], (1, EMB), jnp.float32)     # sos_embedding
    r_w_msg, r_b_msg = _linear(ks[6], VOCAB, EMB)                    # message_encoder
    r_w_in, r_b_in = _linear(ks[7], N_FEATURES, RECEIVER_HIDDEN)     # input_encoder
    r_w_ih, r_b_ih = _linear(ks[8], EMB, RECEIVER_HIDDEN)            # receiver RNNCell ih
    r_w_hh, r_b_hh = _linear(ks[9], RECEIVER_HIDDEN, RECEIVER_HIDDEN)

    # Algebraic folds: embedding Linear folded into the RNN ih weight (exact in f32).
    s_w_embih = s_w_emb @ s_w_ih                                     # (V, Hs)
    b_cell_s = s_b_emb @ s_w_ih + s_b_ih + s_b_hh                    # (1, Hs)
    b_sos = sos @ s_w_ih + s_b_ih + s_b_hh                           # (1, Hs) step-0 term
    r_w_msgih = r_w_msg @ r_w_ih                                     # (V, Hr)
    b_cell_r = r_b_msg @ r_w_ih + r_b_ih + r_b_hh                    # (1, Hr)

    w_packed = jnp.concatenate([
        s_w_enc,                                                     # rows   0: 16
        s_w_hh,                                                      # rows  16: 48
        s_w_embih,                                                   # rows  48: 56
        jnp.pad(s_w_out, ((0, 0), (0, HID - VOCAB))),                # rows  56: 88
        r_w_in,                                                      # rows  88:104
        r_w_msgih,                                                   # rows 104:112
        r_w_hh,                                                      # rows 112:144
    ], axis=0).astype(jnp.bfloat16)                                  # bf16 MXU operands
    assert w_packed.shape == (R_END, HID)

    b_packed = jnp.concatenate([
        s_b_enc,                                                     # row 0
        b_sos,                                                       # row 1
        b_cell_s,                                                    # row 2
        jnp.pad(s_b_out, ((0, 0), (0, HID - VOCAB))),                # row 3
        r_b_in,                                                      # row 4
        b_cell_r,                                                    # row 5
        jnp.zeros((2, HID), jnp.float32),                            # rows 6-7 (pad to 8)
    ], axis=0)                                                       # f32 (elementwise)
    assert b_packed.shape == (8, HID)

    return {"w": w_packed, "b": b_packed}


if __name__ == "__main__":
    key = jax.random.PRNGKey(0)
    k_params, k_rin, k_lab, k_noise = jax.random.split(key, 4)

    params = init_params(k_params)
    receiver_input = jax.random.bernoulli(
        k_rin, 0.5, (B, N_CANDIDATES, N_FEATURES)).astype(jnp.float32)
    labels = jax.random.randint(k_lab, (B,), 0, N_CANDIDATES)
    sender_input = receiver_input[jnp.arange(B), labels]             # sender sees the target

    out = forward(params, sender_input, labels, receiver_input, k_noise)
    out = jax.block_until_ready(out)

    assert bool(jnp.allclose(out["z"], 1.0, atol=1e-3)), "lost probability mass"
    assert bool(jnp.isfinite(out["loss"])), "non-finite loss"
    assert out["message"].shape == (B, L1, VOCAB)
    assert out["receiver_output"].shape == (B, L1, N_CANDIDATES)
    print("KERNEL_OK")
</pallas_src>

<mosaic_0001>
module attributes {stable_mosaic.version = 11 : i64} {
  func.func @game_kernel(%arg0: memref<4x16xf32, #tpu.memory_space<vmem>>, %arg1: memref<4x4x16xf32, #tpu.memory_space<vmem>>, %arg2: memref<4x1xi32, #tpu.memory_space<vmem>>, %arg3: memref<4x48xf32, #tpu.memory_space<vmem>>, %arg4: memref<144x32xbf16, #tpu.memory_space<vmem>>, %arg5: memref<8x32xf32, #tpu.memory_space<vmem>>, %arg6: memref<4x256xf32, #tpu.memory_space<vmem>>) attributes {dimension_semantics = [], scalar_prefetch = 0 : i64, scratch_operands = 0 : i64, tpu.core_type = #tpu.core_type<tc>} {
    %c0 = arith.constant 0 : index
    %c0_0 = arith.constant 0 : index
    %0 = vector.load %arg0[%c0, %c0_0] : memref<4x16xf32, #tpu.memory_space<vmem>>, vector<4x16xf32>
    %c0_1 = arith.constant 0 : index
    %c0_2 = arith.constant 0 : index
    %1 = vector.load %arg4[%c0_1, %c0_2] : memref<144x32xbf16, #tpu.memory_space<vmem>>, vector<16x32xbf16>
    %c16 = arith.constant 16 : index
    %c0_3 = arith.constant 0 : index
    %2 = vector.load %arg4[%c16, %c0_3] : memref<144x32xbf16, #tpu.memory_space<vmem>>, vector<32x32xbf16>
    %c48 = arith.constant 48 : index
    %c0_4 = arith.constant 0 : index
    %3 = vector.load %arg4[%c48, %c0_4] : memref<144x32xbf16, #tpu.memory_space<vmem>>, vector<8x32xbf16>
    %c56 = arith.constant 56 : index
    %c0_5 = arith.constant 0 : index
    %4 = vector.load %arg4[%c56, %c0_5] : memref<144x32xbf16, #tpu.memory_space<vmem>>, vector<32x32xbf16>
    %c88 = arith.constant 88 : index
    %c0_6 = arith.constant 0 : index
    %5 = vector.load %arg4[%c88, %c0_6] : memref<144x32xbf16, #tpu.memory_space<vmem>>, vector<16x32xbf16>
    %c104 = arith.constant 104 : index
    %c0_7 = arith.constant 0 : index
    %6 = vector.load %arg4[%c104, %c0_7] : memref<144x32xbf16, #tpu.memory_space<vmem>>, vector<8x32xbf16>
    %c112 = arith.constant 112 : index
    %c0_8 = arith.constant 0 : index
    %7 = vector.load %arg4[%c112, %c0_8] : memref<144x32xbf16, #tpu.memory_space<vmem>>, vector<32x32xbf16>
    %c0_9 = arith.constant 0 : index
    %c0_10 = arith.constant 0 : index
    %8 = vector.load %arg5[%c0_9, %c0_10] : memref<8x32xf32, #tpu.memory_space<vmem>>, vector<8x32xf32>
    %9 = vector.extract_strided_slice %8 {offsets = [0, 0], sizes = [1, 32], strides = [1, 1]} : vector<8x32xf32> to vector<1x32xf32>
    %10 = vector.extract_strided_slice %8 {offsets = [1, 0], sizes = [1, 32], strides = [1, 1]} : vector<8x32xf32> to vector<1x32xf32>
    %11 = vector.extract_strided_slice %8 {offsets = [2, 0], sizes = [1, 32], strides = [1, 1]} : vector<8x32xf32> to vector<1x32xf32>
    %12 = vector.extract_strided_slice %8 {offsets = [3, 0], sizes = [1, 8], strides = [1, 1]} : vector<8x32xf32> to vector<1x8xf32>
    %13 = vector.extract_strided_slice %8 {offsets = [4, 0], sizes = [1, 32], strides = [1, 1]} : vector<8x32xf32> to vector<1x32xf32>
    %14 = vector.extract_strided_slice %8 {offsets = [5, 0], sizes = [1, 32], strides = [1, 1]} : vector<8x32xf32> to vector<1x32xf32>
    %15 = arith.truncf %0 : vector<4x16xf32> to vector<4x16xbf16>
    %cst = arith.constant dense<0.000000e+00> : vector<4x32xf32>
    %16 = tpu.matmul %15, %1, %cst {dimension_numbers = #tpu.dot_dimension_numbers<[1], [0], [0], [1], [0, 0, 1, 1], [], []>} : vector<4x16xbf16>, vector<16x32xbf16>, vector<4x32xf32> -> vector<4x32xf32>
    %17 = vector.broadcast %9 : vector<1x32xf32> to vector<4x32xf32>
    %18 = arith.addf %16, %17 : vector<4x32xf32>
    %19 = math.tanh %18 : vector<4x32xf32>
    %c0_11 = arith.constant 0 : index
    %c0_12 = arith.constant 0 : index
    %20 = vector.load %arg3[%c0_11, %c0_12] : memref<4x48xf32, #tpu.memory_space<vmem>>, vector<4x48xf32>
    %21 = arith.truncf %19 : vector<4x32xf32> to vector<4x32xbf16>
    %cst_13 = arith.constant dense<0.000000e+00> : vector<4x32xf32>
    %22 = tpu.matmul %21, %2, %cst_13 {dimension_numbers = #tpu.dot_dimension_numbers<[1], [0], [0], [1], [0, 0, 1, 1], [], []>} : vector<4x32xbf16>, vector<32x32xbf16>, vector<4x32xf32> -> vector<4x32xf32>
    %23 = vector.broadcast %10 : vector<1x32xf32> to vector<4x32xf32>
    %24 = arith.addf %23, %22 : vector<4x32xf32>
    %25 = math.tanh %24 : vector<4x32xf32>
    %26 = arith.truncf %25 : vector<4x32xf32> to vector<4x32xbf16>
    %cst_14 = arith.constant dense<0.000000e+00> : vector<4x32xf32>
    %27 = tpu.matmul %26, %4, %cst_14 {dimension_numbers = #tpu.dot_dimension_numbers<[1], [0], [0], [1], [0, 0, 1, 1], [], []>} : vector<4x32xbf16>, vector<32x32xbf16>, vector<4x32xf32> -> vector<4x32xf32>
    %28 = vector.extract_strided_slice %27 {offsets = [0, 0], sizes = [4, 8], strides = [1, 1]} : vector<4x32xf32> to vector<4x8xf32>
    %29 = vector.broadcast %12 : vector<1x8xf32> to vector<4x8xf32>
    %30 = arith.addf %28, %29 : vector<4x8xf32>
    %31 = vector.extract_strided_slice %20 {offsets = [0, 0], sizes = [4, 8], strides = [1, 1]} : vector<4x48xf32> to vector<4x8xf32>
    %32 = arith.addf %30, %31 : vector<4x8xf32>
    %cst_15 = arith.constant 1.000000e+00 : f32
    %33 = vector.broadcast %cst_15 : f32 to vector<4x8xf32>
    %34 = arith.divf %32, %33 : vector<4x8xf32>
    %cst_16 = arith.constant dense<0xFF800000> : vector<4xf32>
    %35 = vector.multi_reduction <maximumf>, %34, %cst_16 [1] : vector<4x8xf32> to vector<4xf32>
    %36 = vector.shape_cast %35 : vector<4xf32> to vector<4x1xf32>
    %37 = vector.broadcast %36 : vector<4x1xf32> to vector<4x8xf32>
    %38 = arith.subf %34, %37 : vector<4x8xf32>
    %39 = math.exp %38 : vector<4x8xf32>
    %cst_17 = arith.constant dense<0.000000e+00> : vector<4xf32>
    %40 = vector.multi_reduction <add>, %39, %cst_17 [1] : vector<4x8xf32> to vector<4xf32>
    %41 = vector.shape_cast %40 : vector<4xf32> to vector<4x1xf32>
    %42 = vector.broadcast %41 : vector<4x1xf32> to vector<4x8xf32>
    %43 = arith.divf %39, %42 : vector<4x8xf32>
    %cst_18 = arith.constant 1.000000e+00 : f32
    %44 = vector.broadcast %cst_18 : f32 to vector<4x8xf32>
    %45 = arith.divf %30, %44 : vector<4x8xf32>
    %cst_19 = arith.constant dense<0xFF800000> : vector<4xf32>
    %46 = vector.multi_reduction <maximumf>, %45, %cst_19 [1] : vector<4x8xf32> to vector<4xf32>
    %47 = vector.shape_cast %46 : vector<4xf32> to vector<4x1xf32>
    %48 = vector.broadcast %47 : vector<4x1xf32> to vector<4x8xf32>
    %49 = arith.subf %45, %48 : vector<4x8xf32>
    %50 = math.exp %49 : vector<4x8xf32>
    %cst_20 = arith.constant dense<0.000000e+00> : vector<4xf32>
    %51 = vector.multi_reduction <add>, %50, %cst_20 [1] : vector<4x8xf32> to vector<4xf32>
    %52 = vector.shape_cast %51 : vector<4xf32> to vector<4x1xf32>
    %53 = math.log %52 : vector<4x1xf32>
    %54 = vector.broadcast %53 : vector<4x1xf32> to vector<4x8xf32>
    %55 = arith.subf %49, %54 : vector<4x8xf32>
    %56 = arith.truncf %43 : vector<4x8xf32> to vector<4x8xbf16>
    %cst_21 = arith.constant dense<0.000000e+00> : vector<4x32xf32>
    %57 = tpu.matmul %56, %3, %cst_21 {dimension_numbers = #tpu.dot_dimension_numbers<[1], [0], [0], [1], [0, 0, 1, 1], [], []>} : vector<4x8xbf16>, vector<8x32xbf16>, vector<4x32xf32> -> vector<4x32xf32>
    %58 = vector.broadcast %11 : vector<1x32xf32> to vector<4x32xf32>
    %59 = arith.addf %57, %58 : vector<4x32xf32>
    %60 = arith.truncf %25 : vector<4x32xf32> to vector<4x32xbf16>
    %cst_22 = arith.constant dense<0.000000e+00> : vector<4x32xf32>
    %61 = tpu.matmul %60, %2, %cst_22 {dimension_numbers = #tpu.dot_dimension_numbers<[1], [0], [0], [1], [0, 0, 1, 1], [], []>} : vector<4x32xbf16>, vector<32x32xbf16>, vector<4x32xf32> -> vector<4x32xf32>
    %62 = arith.addf %59, %61 : vector<4x32xf32>
    %63 = math.tanh %62 : vector<4x32xf32>
    %64 = arith.truncf %63 : vector<4x32xf32> to vector<4x32xbf16>
    %cst_23 = arith.constant dense<0.000000e+00> : vector<4x32xf32>
    %65 = tpu.matmul %64, %4, %cst_23 {dimension_numbers = #tpu.dot_dimension_numbers<[1], [0], [0], [1], [0, 0, 1, 1], [], []>} : vector<4x32xbf16>, vector<32x32xbf16>, vector<4x32xf32> -> vector<4x32xf32>
    %66 = vector.extract_strided_slice %65 {offsets = [0, 0], sizes = [4, 8], strides = [1, 1]} : vector<4x32xf32> to vector<4x8xf32>
    %67 = vector.broadcast %12 : vector<1x8xf32> to vector<4x8xf32>
    %68 = arith.addf %66, %67 : vector<4x8xf32>
    %69 = vector.extract_strided_slice %20 {offsets = [0, 8], sizes = [4, 8], strides = [1, 1]} : vector<4x48xf32> to vector<4x8xf32>
    %70 = arith.addf %68, %69 : vector<4x8xf32>
    %cst_24 = arith.constant 1.000000e+00 : f32
    %71 = vector.broadcast %cst_24 : f32 to vector<4x8xf32>
    %72 = arith.divf %70, %71 : vector<4x8xf32>
    %cst_25 = arith.constant dense<0xFF800000> : vector<4xf32>
    %73 = vector.multi_reduction <maximumf>, %72, %cst_25 [1] : vector<4x8xf32> to vector<4xf32>
    %74 = vector.shape_cast %73 : vector<4xf32> to vector<4x1xf32>
    %75 = vector.broadcast %74 : vector<4x1xf32> to vector<4x8xf32>
    %76 = arith.subf %72, %75 : vector<4x8xf32>
    %77 = math.exp %76 : vector<4x8xf32>
    %cst_26 = arith.constant dense<0.000000e+00> : vector<4xf32>
    %78 = vector.multi_reduction <add>, %77, %cst_26 [1] : vector<4x8xf32> to vector<4xf32>
    %79 = vector.shape_cast %78 : vector<4xf32> to vector<4x1xf32>
    %80 = vector.broadcast %79 : vector<4x1xf32> to vector<4x8xf32>
    %81 = arith.divf %77, %80 : vector<4x8xf32>
    %cst_27 = arith.constant 1.000000e+00 : f32
    %82 = vector.broadcast %cst_27 : f32 to vector<4x8xf32>
    %83 = arith.divf %68, %82 : vector<4x8xf32>
    %cst_28 = arith.constant dense<0xFF800000> : vector<4xf32>
    %84 = vector.multi_reduction <maximumf>, %83, %cst_28 [1] : vector<4x8xf32> to vector<4xf32>
    %85 = vector.shape_cast %84 : vector<4xf32> to vector<4x1xf32>
    %86 = vector.broadcast %85 : vector<4x1xf32> to vector<4x8xf32>
    %87 = arith.subf %83, %86 : vector<4x8xf32>
    %88 = math.exp %87 : vector<4x8xf32>
    %cst_29 = arith.constant dense<0.000000e+00> : vector<4xf32>
    %89 = vector.multi_reduction <add>, %88, %cst_29 [1] : vector<4x8xf32> to vector<4xf32>
    %90 = vector.shape_cast %89 : vector<4xf32> to vector<4x1xf32>
    %91 = math.log %90 : vector<4x1xf32>
    %92 = vector.broadcast %91 : vector<4x1xf32> to vector<4x8xf32>
    %93 = arith.subf %87, %92 : vector<4x8xf32>
    %94 = arith.truncf %81 : vector<4x8xf32> to vector<4x8xbf16>
    %cst_30 = arith.constant dense<0.000000e+00> : vector<4x32xf32>
    %95 = tpu.matmul %94, %3, %cst_30 {dimension_numbers = #tpu.dot_dimension_numbers<[1], [0], [0], [1], [0, 0, 1, 1], [], []>} : vector<4x8xbf16>, vector<8x32xbf16>, vector<4x32xf32> -> vector<4x32xf32>
    %96 = vector.broadcast %11 : vector<1x32xf32> to vector<4x32xf32>
    %97 = arith.addf %95, %96 : vector<4x32xf32>
    %98 = arith.truncf %63 : vector<4x32xf32> to vector<4x32xbf16>
    %cst_31 = arith.constant dense<0.000000e+00> : vector<4x32xf32>
    %99 = tpu.matmul %98, %2, %cst_31 {dimension_numbers = #tpu.dot_dimension_numbers<[1], [0], [0], [1], [0, 0, 1, 1], [], []>} : vector<4x32xbf16>, vector<32x32xbf16>, vector<4x32xf32> -> vector<4x32xf32>
    %100 = arith.addf %97, %99 : vector<4x32xf32>
    %101 = math.tanh %100 : vector<4x32xf32>
    %102 = arith.truncf %101 : vector<4x32xf32> to vector<4x32xbf16>
    %cst_32 = arith.constant dense<0.000000e+00> : vector<4x32xf32>
    %103 = tpu.matmul %102, %4, %cst_32 {dimension_numbers = #tpu.dot_dimension_numbers<[1], [0], [0], [1], [0, 0, 1, 1], [], []>} : vector<4x32xbf16>, vector<32x32xbf16>, vector<4x32xf32> -> vector<4x32xf32>
    %104 = vector.extract_strided_slice %103 {offsets = [0, 0], sizes = [4, 8], strides = [1, 1]} : vector<4x32xf32> to vector<4x8xf32>
    %105 = vector.broadcast %12 : vector<1x8xf32> to vector<4x8xf32>
    %106 = arith.addf %104, %105 : vector<4x8xf32>
    %107 = vector.extract_strided_slice %20 {offsets = [0, 16], sizes = [4, 8], strides = [1, 1]} : vector<4x48xf32> to vector<4x8xf32>
    %108 = arith.addf %106, %107 : vector<4x8xf32>
    %cst_33 = arith.constant 1.000000e+00 : f32
    %109 = vector.broadcast %cst_33 : f32 to vector<4x8xf32>
    %110 = arith.divf %108, %109 : vector<4x8xf32>
    %cst_34 = arith.constant dense<0xFF800000> : vector<4xf32>
    %111 = vector.multi_reduction <maximumf>, %110, %cst_34 [1] : vector<4x8xf32> to vector<4xf32>
    %112 = vector.shape_cast %111 : vector<4xf32> to vector<4x1xf32>
    %113 = vector.broadcast %112 : vector<4x1xf32> to vector<4x8xf32>
    %114 = arith.subf %110, %113 : vector<4x8xf32>
    %115 = math.exp %114 : vector<4x8xf32>
    %cst_35 = arith.constant dense<0.000000e+00> : vector<4xf32>
    %116 = vector.multi_reduction <add>, %115, %cst_35 [1] : vector<4x8xf32> to vector<4xf32>
    %117 = vector.shape_cast %116 : vector<4xf32> to vector<4x1xf32>
    %118 = vector.broadcast %117 : vector<4x1xf32> to vector<4x8xf32>
    %119 = arith.divf %115, %118 : vector<4x8xf32>
    %cst_36 = arith.constant 1.000000e+00 : f32
    %120 = vector.broadcast %cst_36 : f32 to vector<4x8xf32>
    %121 = arith.divf %106, %120 : vector<4x8xf32>
    %cst_37 = arith.constant dense<0xFF800000> : vector<4xf32>
    %122 = vector.multi_reduction <maximumf>, %121, %cst_37 [1] : vector<4x8xf32> to vector<4xf32>
    %123 = vector.shape_cast %122 : vector<4xf32> to vector<4x1xf32>
    %124 = vector.broadcast %123 : vector<4x1xf32> to vector<4x8xf32>
    %125 = arith.subf %121, %124 : vector<4x8xf32>
    %126 = math.exp %125 : vector<4x8xf32>
    %cst_38 = arith.constant dense<0.000000e+00> : vector<4xf32>
    %127 = vector.multi_reduction <add>, %126, %cst_38 [1] : vector<4x8xf32> to vector<4xf32>
    %128 = vector.shape_cast %127 : vector<4xf32> to vector<4x1xf32>
    %129 = math.log %128 : vector<4x1xf32>
    %130 = vector.broadcast %129 : vector<4x1xf32> to vector<4x8xf32>
    %131 = arith.subf %125, %130 : vector<4x8xf32>
    %132 = arith.truncf %119 : vector<4x8xf32> to vector<4x8xbf16>
    %cst_39 = arith.constant dense<0.000000e+00> : vector<4x32xf32>
    %133 = tpu.matmul %132, %3, %cst_39 {dimension_numbers = #tpu.dot_dimension_numbers<[1], [0], [0], [1], [0, 0, 1, 1], [], []>} : vector<4x8xbf16>, vector<8x32xbf16>, vector<4x32xf32> -> vector<4x32xf32>
    %134 = vector.broadcast %11 : vector<1x32xf32> to vector<4x32xf32>
    %135 = arith.addf %133, %134 : vector<4x32xf32>
    %136 = arith.truncf %101 : vector<4x32xf32> to vector<4x32xbf16>
    %cst_40 = arith.constant dense<0.000000e+00> : vector<4x32xf32>
    %137 = tpu.matmul %136, %2, %cst_40 {dimension_numbers = #tpu.dot_dimension_numbers<[1], [0], [0], [1], [0, 0, 1, 1], [], []>} : vector<4x32xbf16>, vector<32x32xbf16>, vector<4x32xf32> -> vector<4x32xf32>
    %138 = arith.addf %135, %137 : vector<4x32xf32>
    %139 = math.tanh %138 : vector<4x32xf32>
    %140 = arith.truncf %139 : vector<4x32xf32> to vector<4x32xbf16>
    %cst_41 = arith.constant dense<0.000000e+00> : vector<4x32xf32>
    %141 = tpu.matmul %140, %4, %cst_41 {dimension_numbers = #tpu.dot_dimension_numbers<[1], [0], [0], [1], [0, 0, 1, 1], [], []>} : vector<4x32xbf16>, vector<32x32xbf16>, vector<4x32xf32> -> vector<4x32xf32>
    %142 = vector.extract_strided_slice %141 {offsets = [0, 0], sizes = [4, 8], strides = [1, 1]} : vector<4x32xf32> to vector<4x8xf32>
    %143 = vector.broadcast %12 : vector<1x8xf32> to vector<4x8xf32>
    %144 = arith.addf %142, %143 : vector<4x8xf32>
    %145 = vector.extract_strided_slice %20 {offsets = [0, 24], sizes = [4, 8], strides = [1, 1]} : vector<4x48xf32> to vector<4x8xf32>
    %146 = arith.addf %144, %145 : vector<4x8xf32>
    %cst_42 = arith.constant 1.000000e+00 : f32
    %147 = vector.broadcast %cst_42 : f32 to vector<4x8xf32>
    %148 = arith.divf %146, %147 : vector<4x8xf32>
    %cst_43 = arith.constant dense<0xFF800000> : vector<4xf32>
    %149 = vector.multi_reduction <maximumf>, %148, %cst_43 [1] : vector<4x8xf32> to vector<4xf32>
    %150 = vector.shape_cast %149 : vector<4xf32> to vector<4x1xf32>
    %151 = vector.broadcast %150 : vector<4x1xf32> to vector<4x8xf32>
    %152 = arith.subf %148, %151 : vector<4x8xf32>
    %153 = math.exp %152 : vector<4x8xf32>
    %cst_44 = arith.constant dense<0.000000e+00> : vector<4xf32>
    %154 = vector.multi_reduction <add>, %153, %cst_44 [1] : vector<4x8xf32> to vector<4xf32>
    %155 = vector.shape_cast %154 : vector<4xf32> to vector<4x1xf32>
    %156 = vector.broadcast %155 : vector<4x1xf32> to vector<4x8xf32>
    %157 = arith.divf %153, %156 : vector<4x8xf32>
    %cst_45 = arith.constant 1.000000e+00 : f32
    %158 = vector.broadcast %cst_45 : f32 to vector<4x8xf32>
    %159 = arith.divf %144, %158 : vector<4x8xf32>
    %cst_46 = arith.constant dense<0xFF800000> : vector<4xf32>
    %160 = vector.multi_reduction <maximumf>, %159, %cst_46 [1] : vector<4x8xf32> to vector<4xf32>
    %161 = vector.shape_cast %160 : vector<4xf32> to vector<4x1xf32>
    %162 = vector.broadcast %161 : vector<4x1xf32> to vector<4x8xf32>
    %163 = arith.subf %159, %162 : vector<4x8xf32>
    %164 = math.exp %163 : vector<4x8xf32>
    %cst_47 = arith.constant dense<0.000000e+00> : vector<4xf32>
    %165 = vector.multi_reduction <add>, %164, %cst_47 [1] : vector<4x8xf32> to vector<4xf32>
    %166 = vector.shape_cast %165 : vector<4xf32> to vector<4x1xf32>
    %167 = math.log %166 : vector<4x1xf32>
    %168 = vector.broadcast %167 : vector<4x1xf32> to vector<4x8xf32>
    %169 = arith.subf %163, %168 : vector<4x8xf32>
    %170 = arith.truncf %157 : vector<4x8xf32> to vector<4x8xbf16>
    %cst_48 = arith.constant dense<0.000000e+00> : vector<4x32xf32>
    %171 = tpu.matmul %170, %3, %cst_48 {dimension_numbers = #tpu.dot_dimension_numbers<[1], [0], [0], [1], [0, 0, 1, 1], [], []>} : vector<4x8xbf16>, vector<8x32xbf16>, vector<4x32xf32> -> vector<4x32xf32>
    %172 = vector.broadcast %11 : vector<1x32xf32> to vector<4x32xf32>
    %173 = arith.addf %171, %172 : vector<4x32xf32>
    %174 = arith.truncf %139 : vector<4x32xf32> to vector<4x32xbf16>
    %cst_49 = arith.constant dense<0.000000e+00> : vector<4x32xf32>
    %175 = tpu.matmul %174, %2, %cst_49 {dimension_numbers = #tpu.dot_dimension_numbers<[1], [0], [0], [1], [0, 0, 1, 1], [], []>} : vector<4x32xbf16>, vector<32x32xbf16>, vector<4x32xf32> -> vector<4x32xf32>
    %176 = arith.addf %173, %175 : vector<4x32xf32>
    %177 = math.tanh %176 : vector<4x32xf32>
    %178 = arith.truncf %177 : vector<4x32xf32> to vector<4x32xbf16>
    %cst_50 = arith.constant dense<0.000000e+00> : vector<4x32xf32>
    %179 = tpu.matmul %178, %4, %cst_50 {dimension_numbers = #tpu.dot_dimension_numbers<[1], [0], [0], [1], [0, 0, 1, 1], [], []>} : vector<4x32xbf16>, vector<32x32xbf16>, vector<4x32xf32> -> vector<4x32xf32>
    %180 = vector.extract_strided_slice %179 {offsets = [0, 0], sizes = [4, 8], strides = [1, 1]} : vector<4x32xf32> to vector<4x8xf32>
    %181 = vector.broadcast %12 : vector<1x8xf32> to vector<4x8xf32>
    %182 = arith.addf %180, %181 : vector<4x8xf32>
    %183 = vector.extract_strided_slice %20 {offsets = [0, 32], sizes = [4, 8], strides = [1, 1]} : vector<4x48xf32> to vector<4x8xf32>
    %184 = arith.addf %182, %183 : vector<4x8xf32>
    %cst_51 = arith.constant 1.000000e+00 : f32
    %185 = vector.broadcast %cst_51 : f32 to vector<4x8xf32>
    %186 = arith.divf %184, %185 : vector<4x8xf32>
    %cst_52 = arith.constant dense<0xFF800000> : vector<4xf32>
    %187 = vector.multi_reduction <maximumf>, %186, %cst_52 [1] : vector<4x8xf32> to vector<4xf32>
    %188 = vector.shape_cast %187 : vector<4xf32> to vector<4x1xf32>
    %189 = vector.broadcast %188 : vector<4x1xf32> to vector<4x8xf32>
    %190 = arith.subf %186, %189 : vector<4x8xf32>
    %191 = math.exp %190 : vector<4x8xf32>
    %cst_53 = arith.constant dense<0.000000e+00> : vector<4xf32>
    %192 = vector.multi_reduction <add>, %191, %cst_53 [1] : vector<4x8xf32> to vector<4xf32>
    %193 = vector.shape_cast %192 : vector<4xf32> to vector<4x1xf32>
    %194 = vector.broadcast %193 : vector<4x1xf32> to vector<4x8xf32>
    %195 = arith.divf %191, %194 : vector<4x8xf32>
    %cst_54 = arith.constant 1.000000e+00 : f32
    %196 = vector.broadcast %cst_54 : f32 to vector<4x8xf32>
    %197 = arith.divf %182, %196 : vector<4x8xf32>
    %cst_55 = arith.constant dense<0xFF800000> : vector<4xf32>
    %198 = vector.multi_reduction <maximumf>, %197, %cst_55 [1] : vector<4x8xf32> to vector<4xf32>
    %199 = vector.shape_cast %198 : vector<4xf32> to vector<4x1xf32>
    %200 = vector.broadcast %199 : vector<4x1xf32> to vector<4x8xf32>
    %201 = arith.subf %197, %200 : vector<4x8xf32>
    %202 = math.exp %201 : vector<4x8xf32>
    %cst_56 = arith.constant dense<0.000000e+00> : vector<4xf32>
    %203 = vector.multi_reduction <add>, %202, %cst_56 [1] : vector<4x8xf32> to vector<4xf32>
    %204 = vector.shape_cast %203 : vector<4xf32> to vector<4x1xf32>
    %205 = math.log %204 : vector<4x1xf32>
    %206 = vector.broadcast %205 : vector<4x1xf32> to vector<4x8xf32>
    %207 = arith.subf %201, %206 : vector<4x8xf32>
    %208 = arith.truncf %195 : vector<4x8xf32> to vector<4x8xbf16>
    %cst_57 = arith.constant dense<0.000000e+00> : vector<4x32xf32>
    %209 = tpu.matmul %208, %3, %cst_57 {dimension_numbers = #tpu.dot_dimension_numbers<[1], [0], [0], [1], [0, 0, 1, 1], [], []>} : vector<4x8xbf16>, vector<8x32xbf16>, vector<4x32xf32> -> vector<4x32xf32>
    %210 = vector.broadcast %11 : vector<1x32xf32> to vector<4x32xf32>
    %211 = arith.addf %209, %210 : vector<4x32xf32>
    %212 = arith.truncf %177 : vector<4x32xf32> to vector<4x32xbf16>
    %cst_58 = arith.constant dense<0.000000e+00> : vector<4x32xf32>
    %213 = tpu.matmul %212, %2, %cst_58 {dimension_numbers = #tpu.dot_dimension_numbers<[1], [0], [0], [1], [0, 0, 1, 1], [], []>} : vector<4x32xbf16>, vector<32x32xbf16>, vector<4x32xf32> -> vector<4x32xf32>
    %214 = arith.addf %211, %213 : vector<4x32xf32>
    %215 = math.tanh %214 : vector<4x32xf32>
    %216 = arith.truncf %215 : vector<4x32xf32> to vector<4x32xbf16>
    %cst_59 = arith.constant dense<0.000000e+00> : vector<4x32xf32>
    %217 = tpu.matmul %216, %4, %cst_59 {dimension_numbers = #tpu.dot_dimension_numbers<[1], [0], [0], [1], [0, 0, 1, 1], [], []>} : vector<4x32xbf16>, vector<32x32xbf16>, vector<4x32xf32> -> vector<4x32xf32>
    %218 = vector.extract_strided_slice %217 {offsets = [0, 0], sizes = [4, 8], strides = [1, 1]} : vector<4x32xf32> to vector<4x8xf32>
    %219 = vector.broadcast %12 : vector<1x8xf32> to vector<4x8xf32>
    %220 = arith.addf %218, %219 : vector<4x8xf32>
    %221 = vector.extract_strided_slice %20 {offsets = [0, 40], sizes = [4, 8], strides = [1, 1]} : vector<4x48xf32> to vector<4x8xf32>
    %222 = arith.addf %220, %221 : vector<4x8xf32>
    %cst_60 = arith.constant 1.000000e+00 : f32
    %223 = vector.broadcast %cst_60 : f32 to vector<4x8xf32>
    %224 = arith.divf %222, %223 : vector<4x8xf32>
    %cst_61 = arith.constant dense<0xFF800000> : vector<4xf32>
    %225 = vector.multi_reduction <maximumf>, %224, %cst_61 [1] : vector<4x8xf32> to vector<4xf32>
    %226 = vector.shape_cast %225 : vector<4xf32> to vector<4x1xf32>
    %227 = vector.broadcast %226 : vector<4x1xf32> to vector<4x8xf32>
    %228 = arith.subf %224, %227 : vector<4x8xf32>
    %229 = math.exp %228 : vector<4x8xf32>
    %cst_62 = arith.constant dense<0.000000e+00> : vector<4xf32>
    %230 = vector.multi_reduction <add>, %229, %cst_62 [1] : vector<4x8xf32> to vector<4xf32>
    %231 = vector.shape_cast %230 : vector<4xf32> to vector<4x1xf32>
    %232 = vector.broadcast %231 : vector<4x1xf32> to vector<4x8xf32>
    %233 = arith.divf %229, %232 : vector<4x8xf32>
    %cst_63 = arith.constant 1.000000e+00 : f32
    %234 = vector.broadcast %cst_63 : f32 to vector<4x8xf32>
    %235 = arith.divf %220, %234 : vector<4x8xf32>
    %cst_64 = arith.constant dense<0xFF800000> : vector<4xf32>
    %236 = vector.multi_reduction <maximumf>, %235, %cst_64 [1] : vector<4x8xf32> to vector<4xf32>
    %237 = vector.shape_cast %236 : vector<4xf32> to vector<4x1xf32>
    %238 = vector.broadcast %237 : vector<4x1xf32> to vector<4x8xf32>
    %239 = arith.subf %235, %238 : vector<4x8xf32>
    %240 = math.exp %239 : vector<4x8xf32>
    %cst_65 = arith.constant dense<0.000000e+00> : vector<4xf32>
    %241 = vector.multi_reduction <add>, %240, %cst_65 [1] : vector<4x8xf32> to vector<4xf32>
    %242 = vector.shape_cast %241 : vector<4xf32> to vector<4x1xf32>
    %243 = math.log %242 : vector<4x1xf32>
    %244 = vector.broadcast %243 : vector<4x1xf32> to vector<4x8xf32>
    %245 = arith.subf %239, %244 : vector<4x8xf32>
    %246 = tpu.iota {dimensions = array<i32: 1>} : vector<4x8xi32>
    %c0_i32 = arith.constant 0 : i32
    %247 = vector.broadcast %c0_i32 : i32 to vector<4x8xi32>
    %248 = arith.cmpi eq, %246, %247 : vector<4x8xi32>
    %249 = arith.extui %248 : vector<4x8xi1> to vector<4x8xi32>
    %250 = arith.sitofp %249 : vector<4x8xi32> to vector<4x8xf32>
    %c0_i32_66 = arith.constant 0 : i32
    %251 = vector.broadcast %c0_i32_66 : i32 to vector<4x8xi32>
    %252 = arith.cmpi eq, %246, %251 : vector<4x8xi32>
    %cst_67 = arith.constant 0.000000e+00 : f32
    %cst_68 = arith.constant -1.000000e+30 : f32
    %253 = vector.broadcast %cst_67 : f32 to vector<4x8xf32>
    %254 = vector.broadcast %cst_68 : f32 to vector<4x8xf32>
    %255 = arith.select %252, %253, %254 : vector<4x8xi1>, vector<4x8xf32>
    %c0_69 = arith.constant 0 : index
    %c0_70 = arith.constant 0 : index
    %c0_71 = arith.constant 0 : index
    %256 = vector.load %arg1[%c0_69, %c0_70, %c0_71] : memref<4x4x16xf32, #tpu.memory_space<vmem>>, vector<4x4x16xf32>
    %257 = vector.shape_cast %256 : vector<4x4x16xf32> to vector<16x16xf32>
    %258 = arith.truncf %257 : vector<16x16xf32> to vector<16x16xbf16>
    %cst_72 = arith.constant dense<0.000000e+00> : vector<16x32xf32>
    %259 = tpu.matmul %258, %5, %cst_72 {dimension_numbers = #tpu.dot_dimension_numbers<[1], [0], [0], [1], [0, 0, 1, 1], [], []>} : vector<16x16xbf16>, vector<16x32xbf16>, vector<16x32xf32> -> vector<16x32xf32>
    %260 = vector.broadcast %13 : vector<1x32xf32> to vector<16x32xf32>
    %261 = arith.addf %259, %260 : vector<16x32xf32>
    %262 = math.tanh %261 : vector<16x32xf32>
    %263 = vector.shape_cast %262 : vector<16x32xf32> to vector<4x4x32xf32>
    %264 = arith.truncf %43 : vector<4x8xf32> to vector<4x8xbf16>
    %cst_73 = arith.constant dense<0.000000e+00> : vector<4x32xf32>
    %265 = tpu.matmul %264, %6, %cst_73 {dimension_numbers = #tpu.dot_dimension_numbers<[1], [0], [0], [1], [0, 0, 1, 1], [], []>} : vector<4x8xbf16>, vector<8x32xbf16>, vector<4x32xf32> -> vector<4x32xf32>
    %266 = vector.broadcast %14 : vector<1x32xf32> to vector<4x32xf32>
    %267 = arith.addf %265, %266 : vector<4x32xf32>
    %268 = arith.truncf %81 : vector<4x8xf32> to vector<4x8xbf16>
    %cst_74 = arith.constant dense<0.000000e+00> : vector<4x32xf32>
    %269 = tpu.matmul %268, %6, %cst_74 {dimension_numbers = #tpu.dot_dimension_numbers<[1], [0], [0], [1], [0, 0, 1, 1], [], []>} : vector<4x8xbf16>, vector<8x32xbf16>, vector<4x32xf32> -> vector<4x32xf32>
    %270 = vector.broadcast %14 : vector<1x32xf32> to vector<4x32xf32>
    %271 = arith.addf %269, %270 : vector<4x32xf32>
    %272 = arith.truncf %119 : vector<4x8xf32> to vector<4x8xbf16>
    %cst_75 = arith.constant dense<0.000000e+00> : vector<4x32xf32>
    %273 = tpu.matmul %272, %6, %cst_75 {dimension_numbers = #tpu.dot_dimension_numbers<[1], [0], [0], [1], [0, 0, 1, 1], [], []>} : vector<4x8xbf16>, vector<8x32xbf16>, vector<4x32xf32> -> vector<4x32xf32>
    %274 = vector.broadcast %14 : vector<1x32xf32> to vector<4x32xf32>
    %275 = arith.addf %273, %274 : vector<4x32xf32>
    %276 = arith.truncf %157 : vector<4x8xf32> to vector<4x8xbf16>
    %cst_76 = arith.constant dense<0.000000e+00> : vector<4x32xf32>
    %277 = tpu.matmul %276, %6, %cst_76 {dimension_numbers = #tpu.dot_dimension_numbers<[1], [0], [0], [1], [0, 0, 1, 1], [], []>} : vector<4x8xbf16>, vector<8x32xbf16>, vector<4x32xf32> -> vector<4x32xf32>
    %278 = vector.broadcast %14 : vector<1x32xf32> to vector<4x32xf32>
    %279 = arith.addf %277, %278 : vector<4x32xf32>
    %280 = arith.truncf %195 : vector<4x8xf32> to vector<4x8xbf16>
    %cst_77 = arith.constant dense<0.000000e+00> : vector<4x32xf32>
    %281 = tpu.matmul %280, %6, %cst_77 {dimension_numbers = #tpu.dot_dimension_numbers<[1], [0], [0], [1], [0, 0, 1, 1], [], []>} : vector<4x8xbf16>, vector<8x32xbf16>, vector<4x32xf32> -> vector<4x32xf32>
    %282 = vector.broadcast %14 : vector<1x32xf32> to vector<4x32xf32>
    %283 = arith.addf %281, %282 : vector<4x32xf32>
    %284 = arith.truncf %233 : vector<4x8xf32> to vector<4x8xbf16>
    %cst_78 = arith.constant dense<0.000000e+00> : vector<4x32xf32>
    %285 = tpu.matmul %284, %6, %cst_78 {dimension_numbers = #tpu.dot_dimension_numbers<[1], [0], [0], [1], [0, 0, 1, 1], [], []>} : vector<4x8xbf16>, vector<8x32xbf16>, vector<4x32xf32> -> vector<4x32xf32>
    %286 = vector.broadcast %14 : vector<1x32xf32> to vector<4x32xf32>
    %287 = arith.addf %285, %286 : vector<4x32xf32>
    %288 = arith.truncf %250 : vector<4x8xf32> to vector<4x8xbf16>
    %cst_79 = arith.constant dense<0.000000e+00> : vector<4x32xf32>
    %289 = tpu.matmul %288, %6, %cst_79 {dimension_numbers = #tpu.dot_dimension_numbers<[1], [0], [0], [1], [0, 0, 1, 1], [], []>} : vector<4x8xbf16>, vector<8x32xbf16>, vector<4x32xf32> -> vector<4x32xf32>
    %290 = vector.broadcast %14 : vector<1x32xf32> to vector<4x32xf32>
    %291 = arith.addf %289, %290 : vector<4x32xf32>
    %292 = math.tanh %267 : vector<4x32xf32>
    %293 = vector.shape_cast %292 : vector<4x32xf32> to vector<4x1x32xf32>
    %294 = vector.broadcast %293 : vector<4x1x32xf32> to vector<4x4x32xf32>
    %295 = arith.mulf %263, %294 : vector<4x4x32xf32>
    %cst_80 = arith.constant dense<0.000000e+00> : vector<4x4xf32>
    %296 = vector.multi_reduction <add>, %295, %cst_80 [2] : vector<4x4x32xf32> to vector<4x4xf32>
    %cst_81 = arith.constant dense<0xFF800000> : vector<4xf32>
    %297 = vector.multi_reduction <maximumf>, %296, %cst_81 [1] : vector<4x4xf32> to vector<4xf32>
    %298 = vector.shape_cast %297 : vector<4xf32> to vector<4x1xf32>
    %299 = vector.broadcast %298 : vector<4x1xf32> to vector<4x4xf32>
    %300 = arith.subf %296, %299 : vector<4x4xf32>
    %301 = math.exp %300 : vector<4x4xf32>
    %cst_82 = arith.constant dense<0.000000e+00> : vector<4xf32>
    %302 = vector.multi_reduction <add>, %301, %cst_82 [1] : vector<4x4xf32> to vector<4xf32>
    %303 = vector.shape_cast %302 : vector<4xf32> to vector<4x1xf32>
    %304 = math.log %303 : vector<4x1xf32>
    %305 = vector.broadcast %304 : vector<4x1xf32> to vector<4x4xf32>
    %306 = arith.subf %300, %305 : vector<4x4xf32>
    %307 = arith.truncf %292 : vector<4x32xf32> to vector<4x32xbf16>
    %cst_83 = arith.constant dense<0.000000e+00> : vector<4x32xf32>
    %308 = tpu.matmul %307, %7, %cst_83 {dimension_numbers = #tpu.dot_dimension_numbers<[1], [0], [0], [1], [0, 0, 1, 1], [], []>} : vector<4x32xbf16>, vector<32x32xbf16>, vector<4x32xf32> -> vector<4x32xf32>
    %309 = arith.addf %271, %308 : vector<4x32xf32>
    %310 = math.tanh %309 : vector<4x32xf32>
    %311 = vector.shape_cast %310 : vector<4x32xf32> to vector<4x1x32xf32>
    %312 = vector.broadcast %311 : vector<4x1x32xf32> to vector<4x4x32xf32>
    %313 = arith.mulf %263, %312 : vector<4x4x32xf32>
    %cst_84 = arith.constant dense<0.000000e+00> : vector<4x4xf32>
    %314 = vector.multi_reduction <add>, %313, %cst_84 [2] : vector<4x4x32xf32> to vector<4x4xf32>
    %cst_85 = arith.constant dense<0xFF800000> : vector<4xf32>
    %315 = vector.multi_reduction <maximumf>, %314, %cst_85 [1] : vector<4x4xf32> to vector<4xf32>
    %316 = vector.shape_cast %315 : vector<4xf32> to vector<4x1xf32>
    %317 = vector.broadcast %316 : vector<4x1xf32> to vector<4x4xf32>
    %318 = arith.subf %314, %317 : vector<4x4xf32>
    %319 = math.exp %318 : vector<4x4xf32>
    %cst_86 = arith.constant dense<0.000000e+00> : vector<4xf32>
    %320 = vector.multi_reduction <add>, %319, %cst_86 [1] : vector<4x4xf32> to vector<4xf32>
    %321 = vector.shape_cast %320 : vector<4xf32> to vector<4x1xf32>
    %322 = math.log %321 : vector<4x1xf32>
    %323 = vector.broadcast %322 : vector<4x1xf32> to vector<4x4xf32>
    %324 = arith.subf %318, %323 : vector<4x4xf32>
    %325 = arith.truncf %310 : vector<4x32xf32> to vector<4x32xbf16>
    %cst_87 = arith.constant dense<0.000000e+00> : vector<4x32xf32>
    %326 = tpu.matmul %325, %7, %cst_87 {dimension_numbers = #tpu.dot_dimension_numbers<[1], [0], [0], [1], [0, 0, 1, 1], [], []>} : vector<4x32xbf16>, vector<32x32xbf16>, vector<4x32xf32> -> vector<4x32xf32>
    %327 = arith.addf %275, %326 : vector<4x32xf32>
    %328 = math.tanh %327 : vector<4x32xf32>
    %329 = vector.shape_cast %328 : vector<4x32xf32> to vector<4x1x32xf32>
    %330 = vector.broadcast %329 : vector<4x1x32xf32> to vector<4x4x32xf32>
    %331 = arith.mulf %263, %330 : vector<4x4x32xf32>
    %cst_88 = arith.constant dense<0.000000e+00> : vector<4x4xf32>
    %332 = vector.multi_reduction <add>, %331, %cst_88 [2] : vector<4x4x32xf32> to vector<4x4xf32>
    %cst_89 = arith.constant dense<0xFF800000> : vector<4xf32>
    %333 = vector.multi_reduction <maximumf>, %332, %cst_89 [1] : vector<4x4xf32> to vector<4xf32>
    %334 = vector.shape_cast %333 : vector<4xf32> to vector<4x1xf32>
    %335 = vector.broadcast %334 : vector<4x1xf32> to vector<4x4xf32>
    %336 = arith.subf %332, %335 : vector<4x4xf32>
    %337 = math.exp %336 : vector<4x4xf32>
    %cst_90 = arith.constant dense<0.000000e+00> : vector<4xf32>
    %338 = vector.multi_reduction <add>, %337, %cst_90 [1] : vector<4x4xf32> to vector<4xf32>
    %339 = vector.shape_cast %338 : vector<4xf32> to vector<4x1xf32>
    %340 = math.log %339 : vector<4x1xf32>
    %341 = vector.broadcast %340 : vector<4x1xf32> to vector<4x4xf32>
    %342 = arith.subf %336, %341 : vector<4x4xf32>
    %343 = arith.truncf %328 : vector<4x32xf32> to vector<4x32xbf16>
    %cst_91 = arith.constant dense<0.000000e+00> : vector<4x32xf32>
    %344 = tpu.matmul %343, %7, %cst_91 {dimension_numbers = #tpu.dot_dimension_numbers<[1], [0], [0], [1], [0, 0, 1, 1], [], []>} : vector<4x32xbf16>, vector<32x32xbf16>, vector<4x32xf32> -> vector<4x32xf32>
    %345 = arith.addf %279, %344 : vector<4x32xf32>
    %346 = math.tanh %345 : vector<4x32xf32>
    %347 = vector.shape_cast %346 : vector<4x32xf32> to vector<4x1x32xf32>
    %348 = vector.broadcast %347 : vector<4x1x32xf32> to vector<4x4x32xf32>
    %349 = arith.mulf %263, %348 : vector<4x4x32xf32>
    %cst_92 = arith.constant dense<0.000000e+00> : vector<4x4xf32>
    %350 = vector.multi_reduction <add>, %349, %cst_92 [2] : vector<4x4x32xf32> to vector<4x4xf32>
    %cst_93 = arith.constant dense<0xFF800000> : vector<4xf32>
    %351 = vector.multi_reduction <maximumf>, %350, %cst_93 [1] : vector<4x4xf32> to vector<4xf32>
    %352 = vector.shape_cast %351 : vector<4xf32> to vector<4x1xf32>
    %353 = vector.broadcast %352 : vector<4x1xf32> to vector<4x4xf32>
    %354 = arith.subf %350, %353 : vector<4x4xf32>
    %355 = math.exp %354 : vector<4x4xf32>
    %cst_94 = arith.constant dense<0.000000e+00> : vector<4xf32>
    %356 = vector.multi_reduction <add>, %355, %cst_94 [1] : vector<4x4xf32> to vector<4xf32>
    %357 = vector.shape_cast %356 : vector<4xf32> to vector<4x1xf32>
    %358 = math.log %357 : vector<4x1xf32>
    %359 = vector.broadcast %358 : vector<4x1xf32> to vector<4x4xf32>
    %360 = arith.subf %354, %359 : vector<4x4xf32>
    %361 = arith.truncf %346 : vector<4x32xf32> to vector<4x32xbf16>
    %cst_95 = arith.constant dense<0.000000e+00> : vector<4x32xf32>
    %362 = tpu.matmul %361, %7, %cst_95 {dimension_numbers = #tpu.dot_dimension_numbers<[1], [0], [0], [1], [0, 0, 1, 1], [], []>} : vector<4x32xbf16>, vector<32x32xbf16>, vector<4x32xf32> -> vector<4x32xf32>
    %363 = arith.addf %283, %362 : vector<4x32xf32>
    %364 = math.tanh %363 : vector<4x32xf32>
    %365 = vector.shape_cast %364 : vector<4x32xf32> to vector<4x1x32xf32>
    %366 = vector.broadcast %365 : vector<4x1x32xf32> to vector<4x4x32xf32>
    %367 = arith.mulf %263, %366 : vector<4x4x32xf32>
    %cst_96 = arith.constant dense<0.000000e+00> : vector<4x4xf32>
    %368 = vector.multi_reduction <add>, %367, %cst_96 [2] : vector<4x4x32xf32> to vector<4x4xf32>
    %cst_97 = arith.constant dense<0xFF800000> : vector<4xf32>
    %369 = vector.multi_reduction <maximumf>, %368, %cst_97 [1] : vector<4x4xf32> to vector<4xf32>
    %370 = vector.shape_cast %369 : vector<4xf32> to vector<4x1xf32>
    %371 = vector.broadcast %370 : vector<4x1xf32> to vector<4x4xf32>
    %372 = arith.subf %368, %371 : vector<4x4xf32>
    %373 = math.exp %372 : vector<4x4xf32>
    %cst_98 = arith.constant dense<0.000000e+00> : vector<4xf32>
    %374 = vector.multi_reduction <add>, %373, %cst_98 [1] : vector<4x4xf32> to vector<4xf32>
    %375 = vector.shape_cast %374 : vector<4xf32> to vector<4x1xf32>
    %376 = math.log %375 : vector<4x1xf32>
    %377 = vector.broadcast %376 : vector<4x1xf32> to vector<4x4xf32>
    %378 = arith.subf %372, %377 : vector<4x4xf32>
    %379 = arith.truncf %364 : vector<4x32xf32> to vector<4x32xbf16>
    %cst_99 = arith.constant dense<0.000000e+00> : vector<4x32xf32>
    %380 = tpu.matmul %379, %7, %cst_99 {dimension_numbers = #tpu.dot_dimension_numbers<[1], [0], [0], [1], [0, 0, 1, 1], [], []>} : vector<4x32xbf16>, vector<32x32xbf16>, vector<4x32xf32> -> vector<4x32xf32>
    %381 = arith.addf %287, %380 : vector<4x32xf32>
    %382 = math.tanh %381 : vector<4x32xf32>
    %383 = vector.shape_cast %382 : vector<4x32xf32> to vector<4x1x32xf32>
    %384 = vector.broadcast %383 : vector<4x1x32xf32> to vector<4x4x32xf32>
    %385 = arith.mulf %263, %384 : vector<4x4x32xf32>
    %cst_100 = arith.constant dense<0.000000e+00> : vector<4x4xf32>
    %386 = vector.multi_reduction <add>, %385, %cst_100 [2] : vector<4x4x32xf32> to vector<4x4xf32>
    %cst_101 = arith.constant dense<0xFF800000> : vector<4xf32>
    %387 = vector.multi_reduction <maximumf>, %386, %cst_101 [1] : vector<4x4xf32> to vector<4xf32>
    %388 = vector.shape_cast %387 : vector<4xf32> to vector<4x1xf32>
    %389 = vector.broadcast %388 : vector<4x1xf32> to vector<4x4xf32>
    %390 = arith.subf %386, %389 : vector<4x4xf32>
    %391 = math.exp %390 : vector<4x4xf32>
    %cst_102 = arith.constant dense<0.000000e+00> : vector<4xf32>
    %392 = vector.multi_reduction <add>, %391, %cst_102 [1] : vector<4x4xf32> to vector<4xf32>
    %393 = vector.shape_cast %392 : vector<4xf32> to vector<4x1xf32>
    %394 = math.log %393 : vector<4x1xf32>
    %395 = vector.broadcast %394 : vector<4x1xf32> to vector<4x4xf32>
    %396 = arith.subf %390, %395 : vector<4x4xf32>
    %397 = arith.truncf %382 : vector<4x32xf32> to vector<4x32xbf16>
    %cst_103 = arith.constant dense<0.000000e+00> : vector<4x32xf32>
    %398 = tpu.matmul %397, %7, %cst_103 {dimension_numbers = #tpu.dot_dimension_numbers<[1], [0], [0], [1], [0, 0, 1, 1], [], []>} : vector<4x32xbf16>, vector<32x32xbf16>, vector<4x32xf32> -> vector<4x32xf32>
    %399 = arith.addf %291, %398 : vector<4x32xf32>
    %400 = math.tanh %399 : vector<4x32xf32>
    %401 = vector.shape_cast %400 : vector<4x32xf32> to vector<4x1x32xf32>
    %402 = vector.broadcast %401 : vector<4x1x32xf32> to vector<4x4x32xf32>
    %403 = arith.mulf %263, %402 : vector<4x4x32xf32>
    %cst_104 = arith.constant dense<0.000000e+00> : vector<4x4xf32>
    %404 = vector.multi_reduction <add>, %403, %cst_104 [2] : vector<4x4x32xf32> to vector<4x4xf32>
    %cst_105 = arith.constant dense<0xFF800000> : vector<4xf32>
    %405 = vector.multi_reduction <maximumf>, %404, %cst_105 [1] : vector<4x4xf32> to vector<4xf32>
    %406 = vector.shape_cast %405 : vector<4xf32> to vector<4x1xf32>
    %407 = vector.broadcast %406 : vector<4x1xf32> to vector<4x4xf32>
    %408 = arith.subf %404, %407 : vector<4x4xf32>
    %409 = math.exp %408 : vector<4x4xf32>
    %cst_106 = arith.constant dense<0.000000e+00> : vector<4xf32>
    %410 = vector.multi_reduction <add>, %409, %cst_106 [1] : vector<4x4xf32> to vector<4xf32>
    %411 = vector.shape_cast %410 : vector<4xf32> to vector<4x1xf32>
    %412 = math.log %411 : vector<4x1xf32>
    %413 = vector.broadcast %412 : vector<4x1xf32> to vector<4x4xf32>
    %414 = arith.subf %408, %413 : vector<4x4xf32>
    %c0_107 = arith.constant 0 : index
    %c0_108 = arith.constant 0 : index
    %415 = vector.load %arg2[%c0_107, %c0_108] : memref<4x1xi32, #tpu.memory_space<vmem>>, vector<4x1xi32>
    %416 = tpu.iota {dimensions = array<i32: 1>} : vector<4x4xi32>
    %417 = vector.broadcast %415 : vector<4x1xi32> to vector<4x4xi32>
    %418 = arith.cmpi eq, %416, %417 : vector<4x4xi32>
    %419 = arith.extui %418 : vector<4x4xi1> to vector<4x4xi32>
    %420 = arith.sitofp %419 : vector<4x4xi32> to vector<4x4xf32>
    %421 = vector.shape_cast %420 : vector<4x4xf32> to vector<4x4x1xf32>
    %422 = vector.broadcast %421 : vector<4x4x1xf32> to vector<4x4x16xf32>
    %423 = arith.mulf %422, %256 : vector<4x4x16xf32>
    %cst_109 = arith.constant dense<0.000000e+00> : vector<4x16xf32>
    %424 = vector.multi_reduction <add>, %423, %cst_109 [1] : vector<4x4x16xf32> to vector<4x16xf32>
    %425 = vector.shape_cast %306 : vector<4x4xf32> to vector<4x1x4xf32>
    %426 = vector.shape_cast %324 : vector<4x4xf32> to vector<4x1x4xf32>
    %427 = vector.shape_cast %342 : vector<4x4xf32> to vector<4x1x4xf32>
    %428 = vector.shape_cast %360 : vector<4x4xf32> to vector<4x1x4xf32>
    %429 = vector.shape_cast %378 : vector<4x4xf32> to vector<4x1x4xf32>
    %430 = vector.shape_cast %396 : vector<4x4xf32> to vector<4x1x4xf32>
    %431 = vector.shape_cast %414 : vector<4x4xf32> to vector<4x1x4xf32>
    %432 = tpu.concatenate %425, %426, %427, %428, %429, %430, %431 in 1 : vector<4x1x4xf32>, vector<4x1x4xf32>, vector<4x1x4xf32>, vector<4x1x4xf32>, vector<4x1x4xf32>, vector<4x1x4xf32>, vector<4x1x4xf32> -> vector<4x7x4xf32>
    %433 = math.exp %432 : vector<4x7x4xf32>
    %434 = vector.shape_cast %420 : vector<4x4xf32> to vector<4x1x4xf32>
    %435 = vector.broadcast %434 : vector<4x1x4xf32> to vector<4x7x4xf32>
    %436 = arith.mulf %432, %435 : vector<4x7x4xf32>
    %cst_110 = arith.constant dense<0.000000e+00> : vector<4x7xf32>
    %437 = vector.multi_reduction <add>, %436, %cst_110 [2] : vector<4x7x4xf32> to vector<4x7xf32>
    %cst_111 = arith.constant 0.000000e+00 : f32
    %438 = vector.broadcast %cst_111 : f32 to vector<4x7xf32>
    %439 = arith.subf %438, %437 : vector<4x7xf32>
    %440 = vector.shape_cast %433 : vector<4x7x4xf32> to vector<4x7x4x1xf32>
    %441 = vector.shape_cast %256 : vector<4x4x16xf32> to vector<4x1x4x16xf32>
    %442 = vector.broadcast %440 : vector<4x7x4x1xf32> to vector<4x7x4x16xf32>
    %443 = vector.broadcast %441 : vector<4x1x4x16xf32> to vector<4x7x4x16xf32>
    %444 = arith.mulf %442, %443 : vector<4x7x4x16xf32>
    %cst_112 = arith.constant dense<0.000000e+00> : vector<4x7x16xf32>
    %445 = vector.multi_reduction <add>, %444, %cst_112 [2] : vector<4x7x4x16xf32> to vector<4x7x16xf32>
    %cst_113 = arith.constant 0.000000e+00 : f32
    %cst_114 = arith.constant 1.000000e+00 : f32
    %446 = vector.broadcast %cst_113 : f32 to vector<4x7x16xf32>
    %447 = arith.maximumf %446, %445 : vector<4x7x16xf32>
    %448 = vector.broadcast %cst_114 : f32 to vector<4x7x16xf32>
    %449 = arith.minimumf %448, %447 : vector<4x7x16xf32>
    %450 = math.log %449 : vector<4x7x16xf32>
    %cst_115 = arith.constant -1.000000e+02 : f32
    %451 = vector.broadcast %cst_115 : f32 to vector<4x7x16xf32>
    %452 = arith.maximumf %450, %451 : vector<4x7x16xf32>
    %cst_116 = arith.constant 1.000000e+00 : f32
    %453 = vector.broadcast %cst_116 : f32 to vector<4x7x16xf32>
    %454 = arith.subf %453, %449 : vector<4x7x16xf32>
    %455 = math.log %454 : vector<4x7x16xf32>
    %cst_117 = arith.constant -1.000000e+02 : f32
    %456 = vector.broadcast %cst_117 : f32 to vector<4x7x16xf32>
    %457 = arith.maximumf %455, %456 : vector<4x7x16xf32>
    %458 = vector.shape_cast %424 : vector<4x16xf32> to vector<4x1x16xf32>
    %459 = vector.broadcast %458 : vector<4x1x16xf32> to vector<4x7x16xf32>
    %460 = arith.mulf %459, %452 : vector<4x7x16xf32>
    %cst_118 = arith.constant 1.000000e+00 : f32
    %461 = vector.broadcast %cst_118 : f32 to vector<4x1x16xf32>
    %462 = arith.subf %461, %458 : vector<4x1x16xf32>
    %463 = vector.broadcast %462 : vector<4x1x16xf32> to vector<4x7x16xf32>
    %464 = arith.mulf %463, %457 : vector<4x7x16xf32>
    %465 = arith.addf %460, %464 : vector<4x7x16xf32>
    %cst_119 = arith.constant 0.000000e+00 : f32
    %466 = vector.broadcast %cst_119 : f32 to vector<4x7x16xf32>
    %467 = arith.subf %466, %465 : vector<4x7x16xf32>
    %cst_120 = arith.constant dense<0.000000e+00> : vector<4x7xf32>
    %468 = vector.multi_reduction <add>, %467, %cst_120 [2] : vector<4x7x16xf32> to vector<4x7xf32>
    %cst_121 = arith.constant 1.000000e+00 : f32
    %469 = vector.broadcast %cst_121 : f32 to vector<4x7xf32>
    %470 = arith.mulf %469, %439 : vector<4x7xf32>
    %cst_122 = arith.constant 5.000000e-01 : f32
    %471 = vector.broadcast %cst_122 : f32 to vector<4x7xf32>
    %472 = arith.mulf %471, %468 : vector<4x7xf32>
    %473 = arith.addf %470, %472 : vector<4x7xf32>
    %474 = vector.shape_cast %420 : vector<4x4xf32> to vector<4x1x4xf32>
    %475 = vector.broadcast %474 : vector<4x1x4xf32> to vector<4x7x4xf32>
    %476 = arith.mulf %432, %475 : vector<4x7x4xf32>
    %cst_123 = arith.constant dense<0.000000e+00> : vector<4x7xf32>
    %477 = vector.multi_reduction <add>, %476, %cst_123 [2] : vector<4x7x4xf32> to vector<4x7xf32>
    %cst_124 = arith.constant dense<0xFF800000> : vector<4x7xf32>
    %478 = vector.multi_reduction <maximumf>, %432, %cst_124 [2] : vector<4x7x4xf32> to vector<4x7xf32>
    %479 = arith.cmpf oge, %477, %478 : vector<4x7xf32>
    %cst_125 = arith.constant 1.000000e+02 : f32
    %cst_126 = arith.constant 0.000000e+00 : f32
    %480 = vector.broadcast %cst_125 : f32 to vector<4x7xf32>
    %481 = vector.broadcast %cst_126 : f32 to vector<4x7xf32>
    %482 = arith.select %479, %480, %481 : vector<4x7xi1>, vector<4x7xf32>
    %483 = vector.extract_strided_slice %43 {offsets = [0, 0], sizes = [4, 1], strides = [1, 1]} : vector<4x8xf32> to vector<4x1xf32>
    %484 = vector.extract_strided_slice %81 {offsets = [0, 0], sizes = [4, 1], strides = [1, 1]} : vector<4x8xf32> to vector<4x1xf32>
    %485 = vector.extract_strided_slice %119 {offsets = [0, 0], sizes = [4, 1], strides = [1, 1]} : vector<4x8xf32> to vector<4x1xf32>
    %486 = vector.extract_strided_slice %157 {offsets = [0, 0], sizes = [4, 1], strides = [1, 1]} : vector<4x8xf32> to vector<4x1xf32>
    %487 = vector.extract_strided_slice %195 {offsets = [0, 0], sizes = [4, 1], strides = [1, 1]} : vector<4x8xf32> to vector<4x1xf32>
    %488 = vector.extract_strided_slice %233 {offsets = [0, 0], sizes = [4, 1], strides = [1, 1]} : vector<4x8xf32> to vector<4x1xf32>
    %489 = vector.extract_strided_slice %250 {offsets = [0, 0], sizes = [4, 1], strides = [1, 1]} : vector<4x8xf32> to vector<4x1xf32>
    %490 = tpu.concatenate %483, %484, %485, %486, %487, %488, %489 in 1 : vector<4x1xf32>, vector<4x1xf32>, vector<4x1xf32>, vector<4x1xf32>, vector<4x1xf32>, vector<4x1xf32>, vector<4x1xf32> -> vector<4x7xf32>
    %cst_127 = arith.constant 1.000000e+00 : f32
    %491 = vector.broadcast %cst_127 : f32 to vector<4x1xf32>
    %cst_128 = arith.constant 0.000000e+00 : f32
    %492 = vector.broadcast %cst_128 : f32 to vector<4x1xf32>
    %cst_129 = arith.constant 0.000000e+00 : f32
    %493 = vector.broadcast %cst_129 : f32 to vector<4x1xf32>
    %cst_130 = arith.constant 0.000000e+00 : f32
    %494 = vector.broadcast %cst_130 : f32 to vector<4x1xf32>
    %cst_131 = arith.constant 0.000000e+00 : f32
    %495 = vector.broadcast %cst_131 : f32 to vector<4x1xf32>
    %496 = vector.extract_strided_slice %490 {offsets = [0, 0], sizes = [4, 1], strides = [1, 1]} : vector<4x7xf32> to vector<4x1xf32>
    %497 = arith.mulf %496, %491 : vector<4x1xf32>
    %498 = arith.addf %493, %497 : vector<4x1xf32>
    %499 = vector.extract_strided_slice %473 {offsets = [0, 0], sizes = [4, 1], strides = [1, 1]} : vector<4x7xf32> to vector<4x1xf32>
    %cst_132 = arith.constant 0.00999999977 : f32
    %500 = vector.broadcast %cst_132 : f32 to vector<4x1xf32>
    %501 = arith.addf %499, %500 : vector<4x1xf32>
    %502 = arith.mulf %501, %497 : vector<4x1xf32>
    %503 = arith.addf %492, %502 : vector<4x1xf32>
    %cst_133 = arith.constant 1.000000e+00 : f32
    %504 = vector.broadcast %cst_133 : f32 to vector<4x1xf32>
    %505 = arith.mulf %504, %497 : vector<4x1xf32>
    %506 = arith.addf %494, %505 : vector<4x1xf32>
    %507 = vector.extract_strided_slice %482 {offsets = [0, 0], sizes = [4, 1], strides = [1, 1]} : vector<4x7xf32> to vector<4x1xf32>
    %508 = arith.mulf %507, %497 : vector<4x1xf32>
    %509 = arith.addf %495, %508 : vector<4x1xf32>
    %cst_134 = arith.constant 1.000000e+00 : f32
    %510 = vector.broadcast %cst_134 : f32 to vector<4x1xf32>
    %511 = arith.subf %510, %496 : vector<4x1xf32>
    %512 = arith.mulf %491, %511 : vector<4x1xf32>
    %513 = vector.extract_strided_slice %490 {offsets = [0, 1], sizes = [4, 1], strides = [1, 1]} : vector<4x7xf32> to vector<4x1xf32>
    %514 = arith.mulf %513, %512 : vector<4x1xf32>
    %515 = arith.addf %498, %514 : vector<4x1xf32>
    %516 = vector.extract_strided_slice %473 {offsets = [0, 1], sizes = [4, 1], strides = [1, 1]} : vector<4x7xf32> to vector<4x1xf32>
    %cst_135 = arith.constant 2.000000e-02 : f32
    %517 = vector.broadcast %cst_135 : f32 to vector<4x1xf32>
    %518 = arith.addf %516, %517 : vector<4x1xf32>
    %519 = arith.mulf %518, %514 : vector<4x1xf32>
    %520 = arith.addf %503, %519 : vector<4x1xf32>
    %cst_136 = arith.constant 2.000000e+00 : f32
    %521 = vector.broadcast %cst_136 : f32 to vector<4x1xf32>
    %522 = arith.mulf %521, %514 : vector<4x1xf32>
    %523 = arith.addf %506, %522 : vector<4x1xf32>
    %524 = vector.extract_strided_slice %482 {offsets = [0, 1], sizes = [4, 1], strides = [1, 1]} : vector<4x7xf32> to vector<4x1xf32>
    %525 = arith.mulf %524, %514 : vector<4x1xf32>
    %526 = arith.addf %509, %525 : vector<4x1xf32>
    %cst_137 = arith.constant 1.000000e+00 : f32
    %527 = vector.broadcast %cst_137 : f32 to vector<4x1xf32>
    %528 = arith.subf %527, %513 : vector<4x1xf32>
    %529 = arith.mulf %512, %528 : vector<4x1xf32>
    %530 = vector.extract_strided_slice %490 {offsets = [0, 2], sizes = [4, 1], strides = [1, 1]} : vector<4x7xf32> to vector<4x1xf32>
    %531 = arith.mulf %530, %529 : vector<4x1xf32>
    %532 = arith.addf %515, %531 : vector<4x1xf32>
    %533 = vector.extract_strided_slice %473 {offsets = [0, 2], sizes = [4, 1], strides = [1, 1]} : vector<4x7xf32> to vector<4x1xf32>
    %cst_138 = arith.constant 3.000000e-02 : f32
    %534 = vector.broadcast %cst_138 : f32 to vector<4x1xf32>
    %535 = arith.addf %533, %534 : vector<4x1xf32>
    %536 = arith.mulf %535, %531 : vector<4x1xf32>
    %537 = arith.addf %520, %536 : vector<4x1xf32>
    %cst_139 = arith.constant 3.000000e+00 : f32
    %538 = vector.broadcast %cst_139 : f32 to vector<4x1xf32>
    %539 = arith.mulf %538, %531 : vector<4x1xf32>
    %540 = arith.addf %523, %539 : vector<4x1xf32>
    %541 = vector.extract_strided_slice %482 {offsets = [0, 2], sizes = [4, 1], strides = [1, 1]} : vector<4x7xf32> to vector<4x1xf32>
    %542 = arith.mulf %541, %531 : vector<4x1xf32>
    %543 = arith.addf %526, %542 : vector<4x1xf32>
    %cst_140 = arith.constant 1.000000e+00 : f32
    %544 = vector.broadcast %cst_140 : f32 to vector<4x1xf32>
    %545 = arith.subf %544, %530 : vector<4x1xf32>
    %546 = arith.mulf %529, %545 : vector<4x1xf32>
    %547 = vector.extract_strided_slice %490 {offsets = [0, 3], sizes = [4, 1], strides = [1, 1]} : vector<4x7xf32> to vector<4x1xf32>
    %548 = arith.mulf %547, %546 : vector<4x1xf32>
    %549 = arith.addf %532, %548 : vector<4x1xf32>
    %550 = vector.extract_strided_slice %473 {offsets = [0, 3], sizes = [4, 1], strides = [1, 1]} : vector<4x7xf32> to vector<4x1xf32>
    %cst_141 = arith.constant 4.000000e-02 : f32
    %551 = vector.broadcast %cst_141 : f32 to vector<4x1xf32>
    %552 = arith.addf %550, %551 : vector<4x1xf32>
    %553 = arith.mulf %552, %548 : vector<4x1xf32>
    %554 = arith.addf %537, %553 : vector<4x1xf32>
    %cst_142 = arith.constant 4.000000e+00 : f32
    %555 = vector.broadcast %cst_142 : f32 to vector<4x1xf32>
    %556 = arith.mulf %555, %548 : vector<4x1xf32>
    %557 = arith.addf %540, %556 : vector<4x1xf32>
    %558 = vector.extract_strided_slice %482 {offsets = [0, 3], sizes = [4, 1], strides = [1, 1]} : vector<4x7xf32> to vector<4x1xf32>
    %559 = arith.mulf %558, %548 : vector<4x1xf32>
    %560 = arith.addf %543, %559 : vector<4x1xf32>
    %cst_143 = arith.constant 1.000000e+00 : f32
    %561 = vector.broadcast %cst_143 : f32 to vector<4x1xf32>
    %562 = arith.subf %561, %547 : vector<4x1xf32>
    %563 = arith.mulf %546, %562 : vector<4x1xf32>
    %564 = vector.extract_strided_slice %490 {offsets = [0, 4], sizes = [4, 1], strides = [1, 1]} : vector<4x7xf32> to vector<4x1xf32>
    %565 = arith.mulf %564, %563 : vector<4x1xf32>
    %566 = arith.addf %549, %565 : vector<4x1xf32>
    %567 = vector.extract_strided_slice %473 {offsets = [0, 4], sizes = [4, 1], strides = [1, 1]} : vector<4x7xf32> to vector<4x1xf32>
    %cst_144 = arith.constant 5.000000e-02 : f32
    %568 = vector.broadcast %cst_144 : f32 to vector<4x1xf32>
    %569 = arith.addf %567, %568 : vector<4x1xf32>
    %570 = arith.mulf %569, %565 : vector<4x1xf32>
    %571 = arith.addf %554, %570 : vector<4x1xf32>
    %cst_145 = arith.constant 5.000000e+00 : f32
    %572 = vector.broadcast %cst_145 : f32 to vector<4x1xf32>
    %573 = arith.mulf %572, %565 : vector<4x1xf32>
    %574 = arith.addf %557, %573 : vector<4x1xf32>
    %575 = vector.extract_strided_slice %482 {offsets = [0, 4], sizes = [4, 1], strides = [1, 1]} : vector<4x7xf32> to vector<4x1xf32>
    %576 = arith.mulf %575, %565 : vector<4x1xf32>
    %577 = arith.addf %560, %576 : vector<4x1xf32>
    %cst_146 = arith.constant 1.000000e+00 : f32
    %578 = vector.broadcast %cst_146 : f32 to vector<4x1xf32>
    %579 = arith.subf %578, %564 : vector<4x1xf32>
    %580 = arith.mulf %563, %579 : vector<4x1xf32>
    %581 = vector.extract_strided_slice %490 {offsets = [0, 5], sizes = [4, 1], strides = [1, 1]} : vector<4x7xf32> to vector<4x1xf32>
    %582 = arith.mulf %581, %580 : vector<4x1xf32>
    %583 = arith.addf %566, %582 : vector<4x1xf32>
    %584 = vector.extract_strided_slice %473 {offsets = [0, 5], sizes = [4, 1], strides = [1, 1]} : vector<4x7xf32> to vector<4x1xf32>
    %cst_147 = arith.constant 6.000000e-02 : f32
    %585 = vector.broadcast %cst_147 : f32 to vector<4x1xf32>
    %586 = arith.addf %584, %585 : vector<4x1xf32>
    %587 = arith.mulf %586, %582 : vector<4x1xf32>
    %588 = arith.addf %571, %587 : vector<4x1xf32>
    %cst_148 = arith.constant 6.000000e+00 : f32
    %589 = vector.broadcast %cst_148 : f32 to vector<4x1xf32>
    %590 = arith.mulf %589, %582 : vector<4x1xf32>
    %591 = arith.addf %574, %590 : vector<4x1xf32>
    %592 = vector.extract_strided_slice %482 {offsets = [0, 5], sizes = [4, 1], strides = [1, 1]} : vector<4x7xf32> to vector<4x1xf32>
    %593 = arith.mulf %592, %582 : vector<4x1xf32>
    %594 = arith.addf %577, %593 : vector<4x1xf32>
    %cst_149 = arith.constant 1.000000e+00 : f32
    %595 = vector.broadcast %cst_149 : f32 to vector<4x1xf32>
    %596 = arith.subf %595, %581 : vector<4x1xf32>
    %597 = arith.mulf %580, %596 : vector<4x1xf32>
    %598 = vector.extract_strided_slice %490 {offsets = [0, 6], sizes = [4, 1], strides = [1, 1]} : vector<4x7xf32> to vector<4x1xf32>
    %599 = arith.mulf %598, %597 : vector<4x1xf32>
    %600 = arith.addf %583, %599 : vector<4x1xf32>
    %601 = vector.extract_strided_slice %473 {offsets = [0, 6], sizes = [4, 1], strides = [1, 1]} : vector<4x7xf32> to vector<4x1xf32>
    %cst_150 = arith.constant 7.000000e-02 : f32
    %602 = vector.broadcast %cst_150 : f32 to vector<4x1xf32>
    %603 = arith.addf %601, %602 : vector<4x1xf32>
    %604 = arith.mulf %603, %599 : vector<4x1xf32>
    %605 = arith.addf %588, %604 : vector<4x1xf32>
    %cst_151 = arith.constant 7.000000e+00 : f32
    %606 = vector.broadcast %cst_151 : f32 to vector<4x1xf32>
    %607 = arith.mulf %606, %599 : vector<4x1xf32>
    %608 = arith.addf %591, %607 : vector<4x1xf32>
    %609 = vector.extract_strided_slice %482 {offsets = [0, 6], sizes = [4, 1], strides = [1, 1]} : vector<4x7xf32> to vector<4x1xf32>
    %610 = arith.mulf %609, %599 : vector<4x1xf32>
    %611 = arith.addf %594, %610 : vector<4x1xf32>
    %cst_152 = arith.constant 1.000000e+00 : f32
    %612 = vector.broadcast %cst_152 : f32 to vector<4x1xf32>
    %613 = arith.subf %612, %598 : vector<4x1xf32>
    %614 = arith.mulf %597, %613 : vector<4x1xf32>
    %615 = arith.addf %600, %614 : vector<4x1xf32>
    %616 = vector.extract_strided_slice %473 {offsets = [0, 6], sizes = [4, 1], strides = [1, 1]} : vector<4x7xf32> to vector<4x1xf32>
    %cst_153 = arith.constant 7.000000e-02 : f32
    %617 = vector.broadcast %cst_153 : f32 to vector<4x1xf32>
    %618 = arith.addf %616, %617 : vector<4x1xf32>
    %619 = arith.mulf %618, %614 : vector<4x1xf32>
    %620 = arith.addf %605, %619 : vector<4x1xf32>
    %cst_154 = arith.constant 7.000000e+00 : f32
    %621 = vector.broadcast %cst_154 : f32 to vector<4x1xf32>
    %622 = arith.mulf %621, %614 : vector<4x1xf32>
    %623 = arith.addf %608, %622 : vector<4x1xf32>
    %624 = vector.extract_strided_slice %482 {offsets = [0, 6], sizes = [4, 1], strides = [1, 1]} : vector<4x7xf32> to vector<4x1xf32>
    %625 = arith.mulf %624, %614 : vector<4x1xf32>
    %626 = arith.addf %611, %625 : vector<4x1xf32>
    %627 = tpu.concatenate %43, %81, %119, %157, %195, %233, %250 in 1 : vector<4x8xf32>, vector<4x8xf32>, vector<4x8xf32>, vector<4x8xf32>, vector<4x8xf32>, vector<4x8xf32>, vector<4x8xf32> -> vector<4x56xf32>
    %628 = tpu.concatenate %55, %93, %131, %169, %207, %245, %255 in 1 : vector<4x8xf32>, vector<4x8xf32>, vector<4x8xf32>, vector<4x8xf32>, vector<4x8xf32>, vector<4x8xf32>, vector<4x8xf32> -> vector<4x56xf32>
    %629 = tpu.concatenate %306, %324, %342, %360, %378, %396, %414 in 1 : vector<4x4xf32>, vector<4x4xf32>, vector<4x4xf32>, vector<4x4xf32>, vector<4x4xf32>, vector<4x4xf32>, vector<4x4xf32> -> vector<4x28xf32>
    %630 = tpu.concatenate %620, %623, %615, %626 in 1 : vector<4x1xf32>, vector<4x1xf32>, vector<4x1xf32>, vector<4x1xf32> -> vector<4x4xf32>
    %cst_155 = arith.constant 0.000000e+00 : f32
    %631 = vector.broadcast %cst_155 : f32 to vector<4x112xf32>
    %632 = tpu.concatenate %627, %628, %629, %630, %631 in 1 : vector<4x56xf32>, vector<4x56xf32>, vector<4x28xf32>, vector<4x4xf32>, vector<4x112xf32> -> vector<4x256xf32>
    %c0_156 = arith.constant 0 : index
    %c0_157 = arith.constant 0 : index
    %633 = vector.load %arg6[%c0_156, %c0_157] : memref<4x256xf32, #tpu.memory_space<vmem>>, vector<4x256xf32>
    tpu.vector_store %arg6[%c0_156, %c0_157], %632 {strides = array<i32>} : memref<4x256xf32, #tpu.memory_space<vmem>>, vector<4x256xf32>,
    return
  }
}

</mosaic_0001>

<llo_original>
// kernel: forward.1
$region0: #{forward.1}
  #allocation0 [shape = 'u32[]', space=smem, size = 0x4, offset = 0x4, fixed_abs, tag = 'smem constant byte address 0x4 - core index']
  #allocation1 [shape = 'u32[144,128]{1,0:T(1,128)}', space=vmem, size = 0x12000, scoped, tag = 'internal scratch']
  %s0 = inlined_call_operand.vmem [shape: f32[4,16], index: 0, kind: input, shape index: {}]
  %s1 = inlined_call_operand.vmem [shape: f32[4,4,16], index: 1, kind: input, shape index: {}]
  %s2 = inlined_call_operand.vmem [shape: s32[4,1], index: 2, kind: input, shape index: {}]
  %s3 = inlined_call_operand.vmem [shape: f32[4,48], index: 3, kind: input, shape index: {}]
  %s4 = inlined_call_operand.vmem [shape: bf16[144,32], index: 4, kind: input, shape index: {}]
  %s5 = inlined_call_operand.vmem [shape: f32[8,32], index: 5, kind: input, shape index: {}]
  %s6 = inlined_call_operand.vmem [shape: f32[4,256], index: 6, kind: output, shape index: {}]
  %s7 = sld [smem:[#allocation0]]
  $region34: #{forward.1} parent=0
    _
  %s9 = ssub.s32 1, %s7
  %s10 = scalar_select 0, %s9, %s7
  // Predicated region
  $region2: #{forward.1} parent=0 // pred_check
    _
  $region3: #{forward.1} parent=0 // pred_check_branch
    %12 = sbr.rel (0) target = $region5
  $region4: #{forward.1} parent=0 // pred_region
    _
  $region5: #{forward.1} parent=0 // pred_fallthru
    _
  // Predicated region
  $region6: #{forward.1} parent=0 // pred_check
    _
  $region7: #{forward.1} parent=0 // pred_check_branch
    %14 = sbr.rel (0) target = $region9
  $region8: #{forward.1} parent=0 // pred_region
    _
  $region9: #{forward.1} parent=0 // pred_fallthru
    _
  // Predicated region
  $region10: #{forward.1} parent=0 // pred_check
    _
  $region11: #{forward.1} parent=0 // pred_check_branch
    %16 = sbr.rel (0) target = $region13
  $region12: #{forward.1} parent=0 // pred_region
    _
  $region13: #{forward.1} parent=0 // pred_fallthru
    _
  // Predicated region
  $region14: #{forward.1} parent=0 // pred_check
    _
  $region15: #{forward.1} parent=0 // pred_check_branch
    %18 = sbr.rel (0) target = $region17
  $region16: #{forward.1} parent=0 // pred_region
    _
  $region17: #{forward.1} parent=0 // pred_fallthru
    _
  // Predicated region
  $region18: #{forward.1} parent=0 // pred_check
    _
  $region19: #{forward.1} parent=0 // pred_check_branch
    %20 = sbr.rel (0) target = $region21
  $region20: #{forward.1} parent=0 // pred_region
    _
  $region21: #{forward.1} parent=0 // pred_fallthru
    _
  // Predicated region
  $region22: #{forward.1} parent=0 // pred_check
    _
  $region23: #{forward.1} parent=0 // pred_check_branch
    %22 = sbr.rel (0) target = $region25
  $region24: #{forward.1} parent=0 // pred_region
    _
  $region25: #{forward.1} parent=0 // pred_fallthru
    _
  %v24 = vld [vmem:[%s0] sm:$0xf]
  %v25 = vld [vmem:[%s4] sm:$0xf]
  %v26 = vld [vmem:[%s4 + $0x4] sm:$0xf]
  %v27 = vld [vmem:[%s4 + $0x8] sm:$0xf]
  %v28 = vld [vmem:[%s4 + $0xc] sm:$0xf]
  %v29 = vld [vmem:[%s4 + $0x10] sm:$0xf]
  %v30 = vld [vmem:[%s4 + $0x14] sm:$0xf]
  %v31 = vld [vmem:[%s4 + $0x18] sm:$0xf]
  %v32 = vld [vmem:[%s4 + $0x1c] sm:$0xf]
  %v33 = vld [vmem:[%s4 + $0x20] sm:$0xf]
  %v34 = vld [vmem:[%s4 + $0x24] sm:$0xf]
  %v35 = vld [vmem:[%s4 + $0x28] sm:$0xf]
  %v36 = vld [vmem:[%s4 + $0x2c] sm:$0xf]
  %v37 = vld [vmem:[%s4 + $0x30] sm:$0xf]
  %v38 = vld [vmem:[%s4 + $0x34] sm:$0xf]
  %v39 = vld [vmem:[%s4 + $0x38] sm:$0xf]
  %v40 = vld [vmem:[%s4 + $0x3c] sm:$0xf]
  %v41 = vld [vmem:[%s4 + $0x40] sm:$0xf]
  %v42 = vld [vmem:[%s4 + $0x44] sm:$0xf]
  %v43 = vld [vmem:[%s5] sm:$0xff]
  %v44 = vpack.c.bf16 %v24, %v24
  %v45 = vlaneseq
  %v46 = vshrl.u32 %v45, 7
  %v47 = vsub.s32 0, %v46
  %v48 = vrot.slane %v43, %v47
  %v51 = vunpack.c.l.b16 %v25
  %v52 = vunpack.c.l.b16 %v26
  %v53 = vpack.c.b16 %v52, %v51
  %vm55 = vcmask 130048
  %v57 = vsel %vm55, %v44, 0
  %59 = vmatprep.subr.bf16.mxu0 0
  %60 = vmatpush1.bf16.msra.mxu0 0
  %61 = vmatprep.subr.bf16.mxu0 0
  %62 = vmatpush1.bf16.msra.mxu0 0
  %63 = vmatprep.subr.bf16.mxu0 0
  %64 = vmatpush1.bf16.msra.mxu0 0
  %65 = vmatprep.subr.bf16.mxu0 0
  %66 = vmatpush1.bf16.msra.mxu0 0
  %67 = vmatprep.subr.bf16.mxu0 0
  %68 = vmatpush1.bf16.msra.mxu0 0
  %69 = vmatprep.subr.bf16.mxu0 0
  %70 = vmatpush1.bf16.msra.mxu0 0
  %71 = vmatprep.subr.bf16.mxu0 0
  %72 = vmatpush1.bf16.msra.mxu0 0
  %73 = vmatprep.subr.bf16.mxu0 0
  %74 = vmatpush1.bf16.msra.mxu0 %v53
  %75 = vmatprep.subr.bf16.mxu0 0
  %76 = vmatpush2.bf16.msra.mxu0 0
  %77 = vmatprep.subr.bf16.mxu0 0
  %78 = vmatpush2.bf16.msra.mxu0 0
  %79 = vmatprep.subr.bf16.mxu0 0
  %80 = vmatpush2.bf16.msra.mxu0 0
  %81 = vmatprep.subr.bf16.mxu0 0
  %82 = vmatpush2.bf16.msra.mxu0 0
  %83 = vmatprep.subr.bf16.mxu0 0
  %84 = vmatpush2.bf16.msra.mxu0 0
  %85 = vmatprep.subr.bf16.mxu0 0
  %86 = vmatpush2.bf16.msra.mxu0 0
  %87 = vmatprep.subr.bf16.mxu0 0
  %88 = vmatpush2.bf16.msra.mxu0 0
  %89 = vmatprep.subr.bf16.mxu0 0
  %90 = vmatpush2.bf16.msra.mxu0 0
  %91 = vmatprep.mubr.bf16.mxu0 0
  %92 = vmatmul.mubr.bf16.gmra.mxu0 %v57
  %v93 = vpop.f32.mrf.mxu0
  %v94 = vadd.f32 %v48, %v93
  %v95 = vpop.f32.mrf.mxu0
  %v96 = vpop.f32.mrf.mxu0
  %v97 = vpop.f32.mrf.mxu0
  %98 = vdwg.mxu0
  %v99 = vtanh.pop %v94
  %v100 = vld [vmem:[%s3] sm:$0xf]
  %v101 = vpack.c.bf16 %v99, %v99
  %v106 = vunpack.c.l.b16 %v27
  %v107 = vunpack.c.l.b16 %v28
  %v108 = vunpack.c.l.b16 %v29
  %v109 = vunpack.c.l.b16 %v30
  %v110 = vpack.c.b16 %v107, %v106
  %v111 = vpack.c.b16 %v109, %v108
  %vm114 = vcmask 261120
  %v116 = vsel %vm114, %v101, 0
  %118 = vmatprep.subr.bf16.mxu0 0
  %119 = vmatpush1.bf16.msra.mxu0 0
  %120 = vmatprep.subr.bf16.mxu0 0
  %121 = vmatpush1.bf16.msra.mxu0 0
  %122 = vmatprep.subr.bf16.mxu0 0
  %123 = vmatpush1.bf16.msra.mxu0 0
  %124 = vmatprep.subr.bf16.mxu0 0
  %125 = vmatpush1.bf16.msra.mxu0 0
  %126 = vmatprep.subr.bf16.mxu0 0
  %127 = vmatpush1.bf16.msra.mxu0 0
  %128 = vmatprep.subr.bf16.mxu0 0
  %129 = vmatpush1.bf16.msra.mxu0 0
  %130 = vmatprep.subr.bf16.mxu0 0
  %131 = vmatpush1.bf16.msra.mxu0 %v111
  %132 = vmatprep.subr.bf16.mxu0 0
  %133 = vmatpush1.bf16.msra.mxu0 %v110
  %134 = vmatprep.subr.bf16.mxu0 0
  %135 = vmatpush2.bf16.msra.mxu0 0
  %136 = vmatprep.subr.bf16.mxu0 0
  %137 = vmatpush2.bf16.msra.mxu0 0
  %138 = vmatprep.subr.bf16.mxu0 0
  %139 = vmatpush2.bf16.msra.mxu0 0
  %140 = vmatprep.subr.bf16.mxu0 0
  %141 = vmatpush2.bf16.msra.mxu0 0
  %142 = vmatprep.subr.bf16.mxu0 0
  %143 = vmatpush2.bf16.msra.mxu0 0
  %144 = vmatprep.subr.bf16.mxu0 0
  %145 = vmatpush2.bf16.msra.mxu0 0
  %146 = vmatprep.subr.bf16.mxu0 0
  %147 = vmatpush2.bf16.msra.mxu0 0
  %148 = vmatprep.subr.bf16.mxu0 0
  %149 = vmatpush2.bf16.msra.mxu0 0
  %150 = vmatprep.mubr.bf16.mxu0 0
  %151 = vmatmul.mubr.bf16.gmra.mxu0 %v116
  %v152 = vpop.f32.mrf.mxu0
  %v153 = vadd.f32 0.0, %v152
  %v154 = vpop.f32.mrf.mxu0
  %v155 = vpop.f32.mrf.mxu0
  %v156 = vpop.f32.mrf.mxu0
  %157 = vdwg.mxu0
  %v158 = vlaneseq
  %v159 = vshrl.u32 %v158, 7
  %v160 = vsub.s32 1, %v159
  %v161 = vrot.slane %v43, %v160
  %v162 = vadd.f32 %v161, %v153
  %v163 = vtanh.pop %v162
  %v164 = vpack.c.bf16 %v163, %v163
  %v169 = vunpack.c.l.b16 %v32
  %v170 = vunpack.c.l.b16 %v33
  %v171 = vunpack.c.l.b16 %v34
  %v172 = vunpack.c.l.b16 %v35
  %v173 = vpack.c.b16 %v170, %v169
  %v174 = vpack.c.b16 %v172, %v171
  %v178 = vsel %vm114, %v164, 0
  %180 = vmatprep.subr.bf16.mxu0 0
  %181 = vmatpush1.bf16.msra.mxu0 0
  %182 = vmatprep.subr.bf16.mxu0 0
  %183 = vmatpush1.bf16.msra.mxu0 0
  %184 = vmatprep.subr.bf16.mxu0 0
  %185 = vmatpush1.bf16.msra.mxu0 0
  %186 = vmatprep.subr.bf16.mxu0 0
  %187 = vmatpush1.bf16.msra.mxu0 0
  %188 = vmatprep.subr.bf16.mxu0 0
  %189 = vmatpush1.bf16.msra.mxu0 0
  %190 = vmatprep.subr.bf16.mxu0 0
  %191 = vmatpush1.bf16.msra.mxu0 0
  %192 = vmatprep.subr.bf16.mxu0 0
  %193 = vmatpush1.bf16.msra.mxu0 %v174
  %194 = vmatprep.subr.bf16.mxu0 0
  %195 = vmatpush1.bf16.msra.mxu0 %v173
  %196 = vmatprep.subr.bf16.mxu0 0
  %197 = vmatpush2.bf16.msra.mxu0 0
  %198 = vmatprep.subr.bf16.mxu0 0
  %199 = vmatpush2.bf16.msra.mxu0 0
  %200 = vmatprep.subr.bf16.mxu0 0
  %201 = vmatpush2.bf16.msra.mxu0 0
  %202 = vmatprep.subr.bf16.mxu0 0
  %203 = vmatpush2.bf16.msra.mxu0 0
  %204 = vmatprep.subr.bf16.mxu0 0
  %205 = vmatpush2.bf16.msra.mxu0 0
  %206 = vmatprep.subr.bf16.mxu0 0
  %207 = vmatpush2.bf16.msra.mxu0 0
  %208 = vmatprep.subr.bf16.mxu0 0
  %209 = vmatpush2.bf16.msra.mxu0 0
  %210 = vmatprep.subr.bf16.mxu0 0
  %211 = vmatpush2.bf16.msra.mxu0 0
  %212 = vmatprep.mubr.bf16.mxu0 0
  %213 = vmatmul.mubr.bf16.gmra.mxu0 %v178
  %v214 = vpop.f32.mrf.mxu0
  %v215 = vadd.f32 0.0, %v214
  %v216 = vpop.f32.mrf.mxu0
  %v217 = vpop.f32.mrf.mxu0
  %v218 = vpop.f32.mrf.mxu0
  %219 = vdwg.mxu0
  %v220 = vlaneseq
  %v221 = vshrl.u32 %v220, 7
  %v222 = vsub.s32 3, %v221
  %v223 = vrot.slane %v43, %v222
  %v224 = vadd.f32 %v215, %v223
  %v225 = vadd.f32 %v224, %v100
  %vm226 = vcmask 60416
  %v227 = vsel %vm226, %v225, -inf
  %228 = vmax.xlane.f32.xlu0 %v227
  %v229 = vpop.xlane.xlu0 %228
  %v230 = vsub.f32 %v225, %v229
  %v231 = vmul.f32 %v230, 1.442695
  %v232 = vpow.pop %v231
  %v233 = vsel %vm226, %v232, 0.0
  %234 = vadd.xlane.f32.xlu0 %v233
  %v235 = vpop.xlane.xlu0 %234
  %v236 = vrcp.pop %v235
  %v237 = vmul.f32 %v232, %v236
  %v238 = vsel %vm226, %v224, -inf
  %239 = vmax.xlane.f32.xlu0 %v238
  %v240 = vpop.xlane.xlu0 %239
  %v241 = vsub.f32 %v224, %v240
  %v242 = vmul.f32 %v241, 1.442695
  %v243 = vpow.pop %v242
  %v244 = vsel %vm226, %v243, 0.0
  %245 = vadd.xlane.f32.xlu0 %v244
  %v246 = vpop.xlane.xlu0 %245
  %v247 = vlog2.pop %v246
  %v248 = vmul.f32 %v247, 0.6931472
  %v249 = vsub.f32 %v241, %v248
  %v250 = vpack.c.bf16 %v237, %v237
  %v251 = vlaneseq
  %v252 = vshrl.u32 %v251, 7
  %v253 = vsub.s32 2, %v252
  %v254 = vrot.slane %v43, %v253
  %vm255 = vcmask 64512
  %v257 = vsel %vm255, %v250, 0
  %vm259 = vcmask 1043456
  %v261 = vsel %vm259, %v31, 0
  %263 = vmatprep.subr.bf16.mxu0 0
  %264 = vmatpush1.bf16.msra.mxu0 0
  %265 = vmatprep.subr.bf16.mxu0 0
  %266 = vmatpush1.bf16.msra.mxu0 0
  %267 = vmatprep.subr.bf16.mxu0 0
  %268 = vmatpush1.bf16.msra.mxu0 0
  %269 = vmatprep.subr.bf16.mxu0 0
  %270 = vmatpush1.bf16.msra.mxu0 0
  %271 = vmatprep.subr.bf16.mxu0 0
  %272 = vmatpush1.bf16.msra.mxu0 0
  %273 = vmatprep.subr.bf16.mxu0 0
  %274 = vmatpush1.bf16.msra.mxu0 0
  %275 = vmatprep.subr.bf16.mxu0 0
  %276 = vmatpush1.bf16.msra.mxu0 0
  %277 = vmatprep.subr.bf16.mxu0 0
  %278 = vmatpush1.bf16.msra.mxu0 %v261
  %279 = vmatprep.subr.bf16.mxu0 0
  %280 = vmatpush2.bf16.msra.mxu0 0
  %281 = vmatprep.subr.bf16.mxu0 0
  %282 = vmatpush2.bf16.msra.mxu0 0
  %283 = vmatprep.subr.bf16.mxu0 0
  %284 = vmatpush2.bf16.msra.mxu0 0
  %285 = vmatprep.subr.bf16.mxu0 0
  %286 = vmatpush2.bf16.msra.mxu0 0
  %287 = vmatprep.subr.bf16.mxu0 0
  %288 = vmatpush2.bf16.msra.mxu0 0
  %289 = vmatprep.subr.bf16.mxu0 0
  %290 = vmatpush2.bf16.msra.mxu0 0
  %291 = vmatprep.subr.bf16.mxu0 0
  %292 = vmatpush2.bf16.msra.mxu0 0
  %293 = vmatprep.subr.bf16.mxu0 0
  %294 = vmatpush2.bf16.msra.mxu0 0
  %295 = vmatprep.mubr.bf16.mxu0 0
  %296 = vmatmul.mubr.bf16.gmra.mxu0 %v257
  %v297 = vpop.f32.mrf.mxu0
  %v298 = vadd.f32 %v254, %v297
  %v299 = vpop.f32.mrf.mxu0
  %v300 = vpop.f32.mrf.mxu0
  %v301 = vpop.f32.mrf.mxu0
  %302 = vdwg.mxu0
  %303 = vmatprep.subr.bf16.mxu0 0
  %304 = vmatpush1.bf16.msra.mxu0 0
  %305 = vmatprep.subr.bf16.mxu0 0
  %306 = vmatpush1.bf16.msra.mxu0 0
  %307 = vmatprep.subr.bf16.mxu0 0
  %308 = vmatpush1.bf16.msra.mxu0 0
  %309 = vmatprep.subr.bf16.mxu0 0
  %310 = vmatpush1.bf16.msra.mxu0 0
  %311 = vmatprep.subr.bf16.mxu0 0
  %312 = vmatpush1.bf16.msra.mxu0 0
  %313 = vmatprep.subr.bf16.mxu0 0
  %314 = vmatpush1.bf16.msra.mxu0 0
  %315 = vmatprep.subr.bf16.mxu0 0
  %316 = vmatpush1.bf16.msra.mxu0 %v111
  %317 = vmatprep.subr.bf16.mxu0 0
  %318 = vmatpush1.bf16.msra.mxu0 %v110
  %319 = vmatprep.subr.bf16.mxu0 0
  %320 = vmatpush2.bf16.msra.mxu0 0
  %321 = vmatprep.subr.bf16.mxu0 0
  %322 = vmatpush2.bf16.msra.mxu0 0
  %323 = vmatprep.subr.bf16.mxu0 0
  %324 = vmatpush2.bf16.msra.mxu0 0
  %325 = vmatprep.subr.bf16.mxu0 0
  %326 = vmatpush2.bf16.msra.mxu0 0
  %327 = vmatprep.subr.bf16.mxu0 0
  %328 = vmatpush2.bf16.msra.mxu0 0
  %329 = vmatprep.subr.bf16.mxu0 0
  %330 = vmatpush2.bf16.msra.mxu0 0
  %331 = vmatprep.subr.bf16.mxu0 0
  %332 = vmatpush2.bf16.msra.mxu0 0
  %333 = vmatprep.subr.bf16.mxu0 0
  %334 = vmatpush2.bf16.msra.mxu0 0
  %335 = vmatprep.mubr.bf16.mxu0 0
  %336 = vmatmul.mubr.bf16.gmra.mxu0 %v178
  %v337 = vpop.f32.mrf.mxu0
  %v338 = vadd.f32 0.0, %v337
  %v339 = vpop.f32.mrf.mxu0
  %v340 = vpop.f32.mrf.mxu0
  %v341 = vpop.f32.mrf.mxu0
  %342 = vdwg.mxu0
  %v343 = vadd.f32 %v298, %v338
  %v344 = vtanh.pop %v343
  %v345 = vpack.c.bf16 %v344, %v344
  %v347 = vsel %vm114, %v345, 0
  %349 = vmatprep.subr.bf16.mxu0 0
  %350 = vmatpush1.bf16.msra.mxu0 0
  %351 = vmatprep.subr.bf16.mxu0 0
  %352 = vmatpush1.bf16.msra.mxu0 0
  %353 = vmatprep.subr.bf16.mxu0 0
  %354 = vmatpush1.bf16.msra.mxu0 0
  %355 = vmatprep.subr.bf16.mxu0 0
  %356 = vmatpush1.bf16.msra.mxu0 0
  %357 = vmatprep.subr.bf16.mxu0 0
  %358 = vmatpush1.bf16.msra.mxu0 0
  %359 = vmatprep.subr.bf16.mxu0 0
  %360 = vmatpush1.bf16.msra.mxu0 0
  %361 = vmatprep.subr.bf16.mxu0 0
  %362 = vmatpush1.bf16.msra.mxu0 %v174
  %363 = vmatprep.subr.bf16.mxu0 0
  %364 = vmatpush1.bf16.msra.mxu0 %v173
  %365 = vmatprep.subr.bf16.mxu0 0
  %366 = vmatpush2.bf16.msra.mxu0 0
  %367 = vmatprep.subr.bf16.mxu0 0
  %368 = vmatpush2.bf16.msra.mxu0 0
  %369 = vmatprep.subr.bf16.mxu0 0
  %370 = vmatpush2.bf16.msra.mxu0 0
  %371 = vmatprep.subr.bf16.mxu0 0
  %372 = vmatpush2.bf16.msra.mxu0 0
  %373 = vmatprep.subr.bf16.mxu0 0
  %374 = vmatpush2.bf16.msra.mxu0 0
  %375 = vmatprep.subr.bf16.mxu0 0
  %376 = vmatpush2.bf16.msra.mxu0 0
  %377 = vmatprep.subr.bf16.mxu0 0
  %378 = vmatpush2.bf16.msra.mxu0 0
  %379 = vmatprep.subr.bf16.mxu0 0
  %380 = vmatpush2.bf16.msra.mxu0 0
  %381 = vmatprep.mubr.bf16.mxu0 0
  %382 = vmatmul.mubr.bf16.gmra.mxu0 %v347
  %v383 = vpop.f32.mrf.mxu0
  %v384 = vadd.f32 0.0, %v383
  %v385 = vpop.f32.mrf.mxu0
  %v386 = vpop.f32.mrf.mxu0
  %v387 = vpop.f32.mrf.mxu0
  %388 = vdwg.mxu0
  %v389 = vadd.f32 %v384, %v223
  %391 = vrot.lane.b32.xlu0 %v100, 120
  %v392 = vpop.permute.xlu0 %391
  %v394 = vadd.f32 %v389, %v392
  %v395 = vsel %vm226, %v394, -inf
  %396 = vmax.xlane.f32.xlu0 %v395
  %v397 = vpop.xlane.xlu0 %396
  %v398 = vsub.f32 %v394, %v397
  %v399 = vmul.f32 %v398, 1.442695
  %v400 = vpow.pop %v399
  %v401 = vsel %vm226, %v400, 0.0
  %402 = vadd.xlane.f32.xlu0 %v401
  %v403 = vpop.xlane.xlu0 %402
  %v404 = vrcp.pop %v403
  %v405 = vmul.f32 %v400, %v404
  %v406 = vsel %vm226, %v389, -inf
  %407 = vmax.xlane.f32.xlu0 %v406
  %v408 = vpop.xlane.xlu0 %407
  %v409 = vsub.f32 %v389, %v408
  %v410 = vmul.f32 %v409, 1.442695
  %v411 = vpow.pop %v410
  %v412 = vsel %vm226, %v411, 0.0
  %413 = vadd.xlane.f32.xlu0 %v412
  %v414 = vpop.xlane.xlu0 %413
  %v415 = vlog2.pop %v414
  %v416 = vmul.f32 %v415, 0.6931472
  %v417 = vsub.f32 %v409, %v416
  %v418 = vpack.c.bf16 %v405, %v405
  %v420 = vsel %vm255, %v418, 0
  %422 = vmatprep.subr.bf16.mxu0 0
  %423 = vmatpush1.bf16.msra.mxu0 0
  %424 = vmatprep.subr.bf16.mxu0 0
  %425 = vmatpush1.bf16.msra.mxu0 0
  %426 = vmatprep.subr.bf16.mxu0 0
  %427 = vmatpush1.bf16.msra.mxu0 0
  %428 = vmatprep.subr.bf16.mxu0 0
  %429 = vmatpush1.bf16.msra.mxu0 0
  %430 = vmatprep.subr.bf16.mxu0 0
  %431 = vmatpush1.bf16.msra.mxu0 0
  %432 = vmatprep.subr.bf16.mxu0 0
  %433 = vmatpush1.bf16.msra.mxu0 0
  %434 = vmatprep.subr.bf16.mxu0 0
  %435 = vmatpush1.bf16.msra.mxu0 0
  %436 = vmatprep.subr.bf16.mxu0 0
  %437 = vmatpush1.bf16.msra.mxu0 %v261
  %438 = vmatprep.subr.bf16.mxu0 0
  %439 = vmatpush2.bf16.msra.mxu0 0
  %440 = vmatprep.subr.bf16.mxu0 0
  %441 = vmatpush2.bf16.msra.mxu0 0
  %442 = vmatprep.subr.bf16.mxu0 0
  %443 = vmatpush2.bf16.msra.mxu0 0
  %444 = vmatprep.subr.bf16.mxu0 0
  %445 = vmatpush2.bf16.msra.mxu0 0
  %446 = vmatprep.subr.bf16.mxu0 0
  %447 = vmatpush2.bf16.msra.mxu0 0
  %448 = vmatprep.subr.bf16.mxu0 0
  %449 = vmatpush2.bf16.msra.mxu0 0
  %450 = vmatprep.subr.bf16.mxu0 0
  %451 = vmatpush2.bf16.msra.mxu0 0
  %452 = vmatprep.subr.bf16.mxu0 0
  %453 = vmatpush2.bf16.msra.mxu0 0
  %454 = vmatprep.mubr.bf16.mxu0 0
  %455 = vmatmul.mubr.bf16.gmra.mxu0 %v420
  %v456 = vpop.f32.mrf.mxu0
  %v457 = vadd.f32 %v254, %v456
  %v458 = vpop.f32.mrf.mxu0
  %v459 = vpop.f32.mrf.mxu0
  %v460 = vpop.f32.mrf.mxu0
  %461 = vdwg.mxu0
  %462 = vmatprep.subr.bf16.mxu0 0
  %463 = vmatpush1.bf16.msra.mxu0 0
  %464 = vmatprep.subr.bf16.mxu0 0
  %465 = vmatpush1.bf16.msra.mxu0 0
  %466 = vmatprep.subr.bf16.mxu0 0
  %467 = vmatpush1.bf16.msra.mxu0 0
  %468 = vmatprep.subr.bf16.mxu0 0
  %469 = vmatpush1.bf16.msra.mxu0 0
  %470 = vmatprep.subr.bf16.mxu0 0
  %471 = vmatpush1.bf16.msra.mxu0 0
  %472 = vmatprep.subr.bf16.mxu0 0
  %473 = vmatpush1.bf16.msra.mxu0 0
  %474 = vmatprep.subr.bf16.mxu0 0
  %475 = vmatpush1.bf16.msra.mxu0 %v111
  %476 = vmatprep.subr.bf16.mxu0 0
  %477 = vmatpush1.bf16.msra.mxu0 %v110
  %478 = vmatprep.subr.bf16.mxu0 0
  %479 = vmatpush2.bf16.msra.mxu0 0
  %480 = vmatprep.subr.bf16.mxu0 0
  %481 = vmatpush2.bf16.msra.mxu0 0
  %482 = vmatprep.subr.bf16.mxu0 0
  %483 = vmatpush2.bf16.msra.mxu0 0
  %484 = vmatprep.subr.bf16.mxu0 0
  %485 = vmatpush2.bf16.msra.mxu0 0
  %486 = vmatprep.subr.bf16.mxu0 0
  %487 = vmatpush2.bf16.msra.mxu0 0
  %488 = vmatprep.subr.bf16.mxu0 0
  %489 = vmatpush2.bf16.msra.mxu0 0
  %490 = vmatprep.subr.bf16.mxu0 0
  %491 = vmatpush2.bf16.msra.mxu0 0
  %492 = vmatprep.subr.bf16.mxu0 0
  %493 = vmatpush2.bf16.msra.mxu0 0
  %494 = vmatprep.mubr.bf16.mxu0 0
  %495 = vmatmul.mubr.bf16.gmra.mxu0 %v347
  %v496 = vpop.f32.mrf.mxu0
  %v497 = vadd.f32 0.0, %v496
  %v498 = vpop.f32.mrf.mxu0
  %v499 = vpop.f32.mrf.mxu0
  %v500 = vpop.f32.mrf.mxu0
  %501 = vdwg.mxu0
  %v502 = vadd.f32 %v457, %v497
  %v503 = vtanh.pop %v502
  %v504 = vpack.c.bf16 %v503, %v503
  %v506 = vsel %vm114, %v504, 0
  %508 = vmatprep.subr.bf16.mxu0 0
  %509 = vmatpush1.bf16.msra.mxu0 0
  %510 = vmatprep.subr.bf16.mxu0 0
  %511 = vmatpush1.bf16.msra.mxu0 0
  %512 = vmatprep.subr.bf16.mxu0 0
  %513 = vmatpush1.bf16.msra.mxu0 0
  %514 = vmatprep.subr.bf16.mxu0 0
  %515 = vmatpush1.bf16.msra.mxu0 0
  %516 = vmatprep.subr.bf16.mxu0 0
  %517 = vmatpush1.bf16.msra.mxu0 0
  %518 = vmatprep.subr.bf16.mxu0 0
  %519 = vmatpush1.bf16.msra.mxu0 0
  %520 = vmatprep.subr.bf16.mxu0 0
  %521 = vmatpush1.bf16.msra.mxu0 %v174
  %522 = vmatprep.subr.bf16.mxu0 0
  %523 = vmatpush1.bf16.msra.mxu0 %v173
  %524 = vmatprep.subr.bf16.mxu0 0
  %525 = vmatpush2.bf16.msra.mxu0 0
  %526 = vmatprep.subr.bf16.mxu0 0
  %527 = vmatpush2.bf16.msra.mxu0 0
  %528 = vmatprep.subr.bf16.mxu0 0
  %529 = vmatpush2.bf16.msra.mxu0 0
  %530 = vmatprep.subr.bf16.mxu0 0
  %531 = vmatpush2.bf16.msra.mxu0 0
  %532 = vmatprep.subr.bf16.mxu0 0
  %533 = vmatpush2.bf16.msra.mxu0 0
  %534 = vmatprep.subr.bf16.mxu0 0
  %535 = vmatpush2.bf16.msra.mxu0 0
  %536 = vmatprep.subr.bf16.mxu0 0
  %537 = vmatpush2.bf16.msra.mxu0 0
  %538 = vmatprep.subr.bf16.mxu0 0
  %539 = vmatpush2.bf16.msra.mxu0 0
  %540 = vmatprep.mubr.bf16.mxu0 0
  %541 = vmatmul.mubr.bf16.gmra.mxu0 %v506
  %v542 = vpop.f32.mrf.mxu0
  %v543 = vadd.f32 0.0, %v542
  %v544 = vpop.f32.mrf.mxu0
  %v545 = vpop.f32.mrf.mxu0
  %v546 = vpop.f32.mrf.mxu0
  %547 = vdwg.mxu0
  %v548 = vadd.f32 %v543, %v223
  %549 = vrot.lane.b32.xlu0 %v100, 112
  %v550 = vpop.permute.xlu0 %549
  %v552 = vadd.f32 %v548, %v550
  %v553 = vsel %vm226, %v552, -inf
  %554 = vmax.xlane.f32.xlu0 %v553
  %v555 = vpop.xlane.xlu0 %554
  %v556 = vsub.f32 %v552, %v555
  %v557 = vmul.f32 %v556, 1.442695
  %v558 = vpow.pop %v557
  %v559 = vsel %vm226, %v558, 0.0
  %560 = vadd.xlane.f32.xlu0 %v559
  %v561 = vpop.xlane.xlu0 %560
  %v562 = vrcp.pop %v561
  %v563 = vmul.f32 %v558, %v562
  %v564 = vsel %vm226, %v548, -inf
  %565 = vmax.xlane.f32.xlu0 %v564
  %v566 = vpop.xlane.xlu0 %565
  %v567 = vsub.f32 %v548, %v566
  %v568 = vmul.f32 %v567, 1.442695
  %v569 = vpow.pop %v568
  %v570 = vsel %vm226, %v569, 0.0
  %571 = vadd.xlane.f32.xlu0 %v570
  %v572 = vpop.xlane.xlu0 %571
  %v573 = vlog2.pop %v572
  %v574 = vmul.f32 %v573, 0.6931472
  %v575 = vsub.f32 %v567, %v574
  %v576 = vpack.c.bf16 %v563, %v563
  %v578 = vsel %vm255, %v576, 0
  %580 = vmatprep.subr.bf16.mxu0 0
  %581 = vmatpush1.bf16.msra.mxu0 0
  %582 = vmatprep.subr.bf16.mxu0 0
  %583 = vmatpush1.bf16.msra.mxu0 0
  %584 = vmatprep.subr.bf16.mxu0 0
  %585 = vmatpush1.bf16.msra.mxu0 0
  %586 = vmatprep.subr.bf16.mxu0 0
  %587 = vmatpush1.bf16.msra.mxu0 0
  %588 = vmatprep.subr.bf16.mxu0 0
  %589 = vmatpush1.bf16.msra.mxu0 0
  %590 = vmatprep.subr.bf16.mxu0 0
  %591 = vmatpush1.bf16.msra.mxu0 0
  %592 = vmatprep.subr.bf16.mxu0 0
  %593 = vmatpush1.bf16.msra.mxu0 0
  %594 = vmatprep.subr.bf16.mxu0 0
  %595 = vmatpush1.bf16.msra.mxu0 %v261
  %596 = vmatprep.subr.bf16.mxu0 0
  %597 = vmatpush2.bf16.msra.mxu0 0
  %598 = vmatprep.subr.bf16.mxu0 0
  %599 = vmatpush2.bf16.msra.mxu0 0
  %600 = vmatprep.subr.bf16.mxu0 0
  %601 = vmatpush2.bf16.msra.mxu0 0
  %602 = vmatprep.subr.bf16.mxu0 0
  %603 = vmatpush2.bf16.msra.mxu0 0
  %604 = vmatprep.subr.bf16.mxu0 0
  %605 = vmatpush2.bf16.msra.mxu0 0
  %606 = vmatprep.subr.bf16.mxu0 0
  %607 = vmatpush2.bf16.msra.mxu0 0
  %608 = vmatprep.subr.bf16.mxu0 0
  %609 = vmatpush2.bf16.msra.mxu0 0
  %610 = vmatprep.subr.bf16.mxu0 0
  %611 = vmatpush2.bf16.msra.mxu0 0
  %612 = vmatprep.mubr.bf16.mxu0 0
  %613 = vmatmul.mubr.bf16.gmra.mxu0 %v578
  %v614 = vpop.f32.mrf.mxu0
  %v615 = vadd.f32 %v254, %v614
  %v616 = vpop.f32.mrf.mxu0
  %v617 = vpop.f32.mrf.mxu0
  %v618 = vpop.f32.mrf.mxu0
  %619 = vdwg.mxu0
  %620 = vmatprep.subr.bf16.mxu0 0
  %621 = vmatpush1.bf16.msra.mxu0 0
  %622 = vmatprep.subr.bf16.mxu0 0
  %623 = vmatpush1.bf16.msra.mxu0 0
  %624 = vmatprep.subr.bf16.mxu0 0
  %625 = vmatpush1.bf16.msra.mxu0 0
  %626 = vmatprep.subr.bf16.mxu0 0
  %627 = vmatpush1.bf16.msra.mxu0 0
  %628 = vmatprep.subr.bf16.mxu0 0
  %629 = vmatpush1.bf16.msra.mxu0 0
  %630 = vmatprep.subr.bf16.mxu0 0
  %631 = vmatpush1.bf16.msra.mxu0 0
  %632 = vmatprep.subr.bf16.mxu0 0
  %633 = vmatpush1.bf16.msra.mxu0 %v111
  %634 = vmatprep.subr.bf16.mxu0 0
  %635 = vmatpush1.bf16.msra.mxu0 %v110
  %636 = vmatprep.subr.bf16.mxu0 0
  %637 = vmatpush2.bf16.msra.mxu0 0
  %638 = vmatprep.subr.bf16.mxu0 0
  %639 = vmatpush2.bf16.msra.mxu0 0
  %640 = vmatprep.subr.bf16.mxu0 0
  %641 = vmatpush2.bf16.msra.mxu0 0
  %642 = vmatprep.subr.bf16.mxu0 0
  %643 = vmatpush2.bf16.msra.mxu0 0
  %644 = vmatprep.subr.bf16.mxu0 0
  %645 = vmatpush2.bf16.msra.mxu0 0
  %646 = vmatprep.subr.bf16.mxu0 0
  %647 = vmatpush2.bf16.msra.mxu0 0
  %648 = vmatprep.subr.bf16.mxu0 0
  %649 = vmatpush2.bf16.msra.mxu0 0
  %650 = vmatprep.subr.bf16.mxu0 0
  %651 = vmatpush2.bf16.msra.mxu0 0
  %652 = vmatprep.mubr.bf16.mxu0 0
  %653 = vmatmul.mubr.bf16.gmra.mxu0 %v506
  %v654 = vpop.f32.mrf.mxu0
  %v655 = vadd.f32 0.0, %v654
  %v656 = vpop.f32.mrf.mxu0
  %v657 = vpop.f32.mrf.mxu0
  %v658 = vpop.f32.mrf.mxu0
  %659 = vdwg.mxu0
  %v660 = vadd.f32 %v615, %v655
  %v661 = vtanh.pop %v660
  %v662 = vpack.c.bf16 %v661, %v661
  %v664 = vsel %vm114, %v662, 0
  %666 = vmatprep.subr.bf16.mxu0 0
  %667 = vmatpush1.bf16.msra.mxu0 0
  %668 = vmatprep.subr.bf16.mxu0 0
  %669 = vmatpush1.bf16.msra.mxu0 0
  %670 = vmatprep.subr.bf16.mxu0 0
  %671 = vmatpush1.bf16.msra.mxu0 0
  %672 = vmatprep.subr.bf16.mxu0 0
  %673 = vmatpush1.bf16.msra.mxu0 0
  %674 = vmatprep.subr.bf16.mxu0 0
  %675 = vmatpush1.bf16.msra.mxu0 0
  %676 = vmatprep.subr.bf16.mxu0 0
  %677 = vmatpush1.bf16.msra.mxu0 0
  %678 = vmatprep.subr.bf16.mxu0 0
  %679 = vmatpush1.bf16.msra.mxu0 %v174
  %680 = vmatprep.subr.bf16.mxu0 0
  %681 = vmatpush1.bf16.msra.mxu0 %v173
  %682 = vmatprep.subr.bf16.mxu0 0
  %683 = vmatpush2.bf16.msra.mxu0 0
  %684 = vmatprep.subr.bf16.mxu0 0
  %685 = vmatpush2.bf16.msra.mxu0 0
  %686 = vmatprep.subr.bf16.mxu0 0
  %687 = vmatpush2.bf16.msra.mxu0 0
  %688 = vmatprep.subr.bf16.mxu0 0
  %689 = vmatpush2.bf16.msra.mxu0 0
  %690 = vmatprep.subr.bf16.mxu0 0
  %691 = vmatpush2.bf16.msra.mxu0 0
  %692 = vmatprep.subr.bf16.mxu0 0
  %693 = vmatpush2.bf16.msra.mxu0 0
  %694 = vmatprep.subr.bf16.mxu0 0
  %695 = vmatpush2.bf16.msra.mxu0 0
  %696 = vmatprep.subr.bf16.mxu0 0
  %697 = vmatpush2.bf16.msra.mxu0 0
  %698 = vmatprep.mubr.bf16.mxu0 0
  %699 = vmatmul.mubr.bf16.gmra.mxu0 %v664
  %v700 = vpop.f32.mrf.mxu0
  %v701 = vadd.f32 0.0, %v700
  %v702 = vpop.f32.mrf.mxu0
  %v703 = vpop.f32.mrf.mxu0
  %v704 = vpop.f32.mrf.mxu0
  %705 = vdwg.mxu0
  %v706 = vadd.f32 %v701, %v223
  %707 = vrot.lane.b32.xlu0 %v100, 104
  %v708 = vpop.permute.xlu0 %707
  %v710 = vadd.f32 %v706, %v708
  %v711 = vsel %vm226, %v710, -inf
  %712 = vmax.xlane.f32.xlu0 %v711
  %v713 = vpop.xlane.xlu0 %712
  %v714 = vsub.f32 %v710, %v713
  %v715 = vmul.f32 %v714, 1.442695
  %v716 = vpow.pop %v715
  %v717 = vsel %vm226, %v716, 0.0
  %718 = vadd.xlane.f32.xlu0 %v717
  %v719 = vpop.xlane.xlu0 %718
  %v720 = vrcp.pop %v719
  %v721 = vmul.f32 %v716, %v720
  %v722 = vsel %vm226, %v706, -inf
  %723 = vmax.xlane.f32.xlu0 %v722
  %v724 = vpop.xlane.xlu0 %723
  %v725 = vsub.f32 %v706, %v724
  %v726 = vmul.f32 %v725, 1.442695
  %v727 = vpow.pop %v726
  %v728 = vsel %vm226, %v727, 0.0
  %729 = vadd.xlane.f32.xlu0 %v728
  %v730 = vpop.xlane.xlu0 %729
  %v731 = vlog2.pop %v730
  %v732 = vmul.f32 %v731, 0.6931472
  %v733 = vsub.f32 %v725, %v732
  %v734 = vpack.c.bf16 %v721, %v721
  %v736 = vsel %vm255, %v734, 0
  %738 = vmatprep.subr.bf16.mxu0 0
  %739 = vmatpush1.bf16.msra.mxu0 0
  %740 = vmatprep.subr.bf16.mxu0 0
  %741 = vmatpush1.bf16.msra.mxu0 0
  %742 = vmatprep.subr.bf16.mxu0 0
  %743 = vmatpush1.bf16.msra.mxu0 0
  %744 = vmatprep.subr.bf16.mxu0 0
  %745 = vmatpush1.bf16.msra.mxu0 0
  %746 = vmatprep.subr.bf16.mxu0 0
  %747 = vmatpush1.bf16.msra.mxu0 0
  %748 = vmatprep.subr.bf16.mxu0 0
  %749 = vmatpush1.bf16.msra.mxu0 0
  %750 = vmatprep.subr.bf16.mxu0 0
  %751 = vmatpush1.bf16.msra.mxu0 0
  %752 = vmatprep.subr.bf16.mxu0 0
  %753 = vmatpush1.bf16.msra.mxu0 %v261
  %754 = vmatprep.subr.bf16.mxu0 0
  %755 = vmatpush2.bf16.msra.mxu0 0
  %756 = vmatprep.subr.bf16.mxu0 0
  %757 = vmatpush2.bf16.msra.mxu0 0
  %758 = vmatprep.subr.bf16.mxu0 0
  %759 = vmatpush2.bf16.msra.mxu0 0
  %760 = vmatprep.subr.bf16.mxu0 0
  %761 = vmatpush2.bf16.msra.mxu0 0
  %762 = vmatprep.subr.bf16.mxu0 0
  %763 = vmatpush2.bf16.msra.mxu0 0
  %764 = vmatprep.subr.bf16.mxu0 0
  %765 = vmatpush2.bf16.msra.mxu0 0
  %766 = vmatprep.subr.bf16.mxu0 0
  %767 = vmatpush2.bf16.msra.mxu0 0
  %768 = vmatprep.subr.bf16.mxu0 0
  %769 = vmatpush2.bf16.msra.mxu0 0
  %770 = vmatprep.mubr.bf16.mxu0 0
  %771 = vmatmul.mubr.bf16.gmra.mxu0 %v736
  %v772 = vpop.f32.mrf.mxu0
  %v773 = vadd.f32 %v254, %v772
  %v774 = vpop.f32.mrf.mxu0
  %v775 = vpop.f32.mrf.mxu0
  %v776 = vpop.f32.mrf.mxu0
  %777 = vdwg.mxu0
  %778 = vmatprep.subr.bf16.mxu0 0
  %779 = vmatpush1.bf16.msra.mxu0 0
  %780 = vmatprep.subr.bf16.mxu0 0
  %781 = vmatpush1.bf16.msra.mxu0 0
  %782 = vmatprep.subr.bf16.mxu0 0
  %783 = vmatpush1.bf16.msra.mxu0 0
  %784 = vmatprep.subr.bf16.mxu0 0
  %785 = vmatpush1.bf16.msra.mxu0 0
  %786 = vmatprep.subr.bf16.mxu0 0
  %787 = vmatpush1.bf16.msra.mxu0 0
  %788 = vmatprep.subr.bf16.mxu0 0
  %789 = vmatpush1.bf16.msra.mxu0 0
  %790 = vmatprep.subr.bf16.mxu0 0
  %791 = vmatpush1.bf16.msra.mxu0 %v111
  %792 = vmatprep.subr.bf16.mxu0 0
  %793 = vmatpush1.bf16.msra.mxu0 %v110
  %794 = vmatprep.subr.bf16.mxu0 0
  %795 = vmatpush2.bf16.msra.mxu0 0
  %796 = vmatprep.subr.bf16.mxu0 0
  %797 = vmatpush2.bf16.msra.mxu0 0
  %798 = vmatprep.subr.bf16.mxu0 0
  %799 = vmatpush2.bf16.msra.mxu0 0
  %800 = vmatprep.subr.bf16.mxu0 0
  %801 = vmatpush2.bf16.msra.mxu0 0
  %802 = vmatprep.subr.bf16.mxu0 0
  %803 = vmatpush2.bf16.msra.mxu0 0
  %804 = vmatprep.subr.bf16.mxu0 0
  %805 = vmatpush2.bf16.msra.mxu0 0
  %806 = vmatprep.subr.bf16.mxu0 0
  %807 = vmatpush2.bf16.msra.mxu0 0
  %808 = vmatprep.subr.bf16.mxu0 0
  %809 = vmatpush2.bf16.msra.mxu0 0
  %810 = vmatprep.mubr.bf16.mxu0 0
  %811 = vmatmul.mubr.bf16.gmra.mxu0 %v664
  %v812 = vpop.f32.mrf.mxu0
  %v813 = vadd.f32 0.0, %v812
  %v814 = vpop.f32.mrf.mxu0
  %v815 = vpop.f32.mrf.mxu0
  %v816 = vpop.f32.mrf.mxu0
  %817 = vdwg.mxu0
  %v818 = vadd.f32 %v773, %v813
  %v819 = vtanh.pop %v818
  %v820 = vpack.c.bf16 %v819, %v819
  %v822 = vsel %vm114, %v820, 0
  %824 = vmatprep.subr.bf16.mxu0 0
  %825 = vmatpush1.bf16.msra.mxu0 0
  %826 = vmatprep.subr.bf16.mxu0 0
  %827 = vmatpush1.bf16.msra.mxu0 0
  %828 = vmatprep.subr.bf16.mxu0 0
  %829 = vmatpush1.bf16.msra.mxu0 0
  %830 = vmatprep.subr.bf16.mxu0 0
  %831 = vmatpush1.bf16.msra.mxu0 0
  %832 = vmatprep.subr.bf16.mxu0 0
  %833 = vmatpush1.bf16.msra.mxu0 0
  %834 = vmatprep.subr.bf16.mxu0 0
  %835 = vmatpush1.bf16.msra.mxu0 0
  %836 = vmatprep.subr.bf16.mxu0 0
  %837 = vmatpush1.bf16.msra.mxu0 %v174
  %838 = vmatprep.subr.bf16.mxu0 0
  %839 = vmatpush1.bf16.msra.mxu0 %v173
  %840 = vmatprep.subr.bf16.mxu0 0
  %841 = vmatpush2.bf16.msra.mxu0 0
  %842 = vmatprep.subr.bf16.mxu0 0
  %843 = vmatpush2.bf16.msra.mxu0 0
  %844 = vmatprep.subr.bf16.mxu0 0
  %845 = vmatpush2.bf16.msra.mxu0 0
  %846 = vmatprep.subr.bf16.mxu0 0
  %847 = vmatpush2.bf16.msra.mxu0 0
  %848 = vmatprep.subr.bf16.mxu0 0
  %849 = vmatpush2.bf16.msra.mxu0 0
  %850 = vmatprep.subr.bf16.mxu0 0
  %851 = vmatpush2.bf16.msra.mxu0 0
  %852 = vmatprep.subr.bf16.mxu0 0
  %853 = vmatpush2.bf16.msra.mxu0 0
  %854 = vmatprep.subr.bf16.mxu0 0
  %855 = vmatpush2.bf16.msra.mxu0 0
  %856 = vmatprep.mubr.bf16.mxu0 0
  %857 = vmatmul.mubr.bf16.gmra.mxu0 %v822
  %v858 = vpop.f32.mrf.mxu0
  %v859 = vadd.f32 0.0, %v858
  %v860 = vpop.f32.mrf.mxu0
  %v861 = vpop.f32.mrf.mxu0
  %v862 = vpop.f32.mrf.mxu0
  %863 = vdwg.mxu0
  %v864 = vadd.f32 %v859, %v223
  %865 = vrot.lane.b32.xlu0 %v100, 96
  %v866 = vpop.permute.xlu0 %865
  %v868 = vadd.f32 %v864, %v866
  %v869 = vsel %vm226, %v868, -inf
  %870 = vmax.xlane.f32.xlu0 %v869
  %v871 = vpop.xlane.xlu0 %870
  %v872 = vsub.f32 %v868, %v871
  %v873 = vmul.f32 %v872, 1.442695
  %v874 = vpow.pop %v873
  %v875 = vsel %vm226, %v874, 0.0
  %876 = vadd.xlane.f32.xlu0 %v875
  %v877 = vpop.xlane.xlu0 %876
  %v878 = vrcp.pop %v877
  %v879 = vmul.f32 %v874, %v878
  %v880 = vsel %vm226, %v864, -inf
  %881 = vmax.xlane.f32.xlu0 %v880
  %v882 = vpop.xlane.xlu0 %881
  %v883 = vsub.f32 %v864, %v882
  %v884 = vmul.f32 %v883, 1.442695
  %v885 = vpow.pop %v884
  %v886 = vsel %vm226, %v885, 0.0
  %887 = vadd.xlane.f32.xlu0 %v886
  %v888 = vpop.xlane.xlu0 %887
  %v889 = vlog2.pop %v888
  %v890 = vmul.f32 %v889, 0.6931472
  %v891 = vsub.f32 %v883, %v890
  %v892 = vpack.c.bf16 %v879, %v879
  %v894 = vsel %vm255, %v892, 0
  %896 = vmatprep.subr.bf16.mxu0 0
  %897 = vmatpush1.bf16.msra.mxu0 0
  %898 = vmatprep.subr.bf16.mxu0 0
  %899 = vmatpush1.bf16.msra.mxu0 0
  %900 = vmatprep.subr.bf16.mxu0 0
  %901 = vmatpush1.bf16.msra.mxu0 0
  %902 = vmatprep.subr.bf16.mxu0 0
  %903 = vmatpush1.bf16.msra.mxu0 0
  %904 = vmatprep.subr.bf16.mxu0 0
  %905 = vmatpush1.bf16.msra.mxu0 0
  %906 = vmatprep.subr.bf16.mxu0 0
  %907 = vmatpush1.bf16.msra.mxu0 0
  %908 = vmatprep.subr.bf16.mxu0 0
  %909 = vmatpush1.bf16.msra.mxu0 0
  %910 = vmatprep.subr.bf16.mxu0 0
  %911 = vmatpush1.bf16.msra.mxu0 %v261
  %912 = vmatprep.subr.bf16.mxu0 0
  %913 = vmatpush2.bf16.msra.mxu0 0
  %914 = vmatprep.subr.bf16.mxu0 0
  %915 = vmatpush2.bf16.msra.mxu0 0
  %916 = vmatprep.subr.bf16.mxu0 0
  %917 = vmatpush2.bf16.msra.mxu0 0
  %918 = vmatprep.subr.bf16.mxu0 0
  %919 = vmatpush2.bf16.msra.mxu0 0
  %920 = vmatprep.subr.bf16.mxu0 0
  %921 = vmatpush2.bf16.msra.mxu0 0
  %922 = vmatprep.subr.bf16.mxu0 0
  %923 = vmatpush2.bf16.msra.mxu0 0
  %924 = vmatprep.subr.bf16.mxu0 0
  %925 = vmatpush2.bf16.msra.mxu0 0
  %926 = vmatprep.subr.bf16.mxu0 0
  %927 = vmatpush2.bf16.msra.mxu0 0
  %928 = vmatprep.mubr.bf16.mxu0 0
  %929 = vmatmul.mubr.bf16.gmra.mxu0 %v894
  %v930 = vpop.f32.mrf.mxu0
  %v931 = vadd.f32 %v254, %v930
  %v932 = vpop.f32.mrf.mxu0
  %v933 = vpop.f32.mrf.mxu0
  %v934 = vpop.f32.mrf.mxu0
  %935 = vdwg.mxu0
  %936 = vmatprep.subr.bf16.mxu0 0
  %937 = vmatpush1.bf16.msra.mxu0 0
  %938 = vmatprep.subr.bf16.mxu0 0
  %939 = vmatpush1.bf16.msra.mxu0 0
  %940 = vmatprep.subr.bf16.mxu0 0
  %941 = vmatpush1.bf16.msra.mxu0 0
  %942 = vmatprep.subr.bf16.mxu0 0
  %943 = vmatpush1.bf16.msra.mxu0 0
  %944 = vmatprep.subr.bf16.mxu0 0
  %945 = vmatpush1.bf16.msra.mxu0 0
  %946 = vmatprep.subr.bf16.mxu0 0
  %947 = vmatpush1.bf16.msra.mxu0 0
  %948 = vmatprep.subr.bf16.mxu0 0
  %949 = vmatpush1.bf16.msra.mxu0 %v111
  %950 = vmatprep.subr.bf16.mxu0 0
  %951 = vmatpush1.bf16.msra.mxu0 %v110
  %952 = vmatprep.subr.bf16.mxu0 0
  %953 = vmatpush2.bf16.msra.mxu0 0
  %954 = vmatprep.subr.bf16.mxu0 0
  %955 = vmatpush2.bf16.msra.mxu0 0
  %956 = vmatprep.subr.bf16.mxu0 0
  %957 = vmatpush2.bf16.msra.mxu0 0
  %958 = vmatprep.subr.bf16.mxu0 0
  %959 = vmatpush2.bf16.msra.mxu0 0
  %960 = vmatprep.subr.bf16.mxu0 0
  %961 = vmatpush2.bf16.msra.mxu0 0
  %962 = vmatprep.subr.bf16.mxu0 0
  %963 = vmatpush2.bf16.msra.mxu0 0
  %964 = vmatprep.subr.bf16.mxu0 0
  %965 = vmatpush2.bf16.msra.mxu0 0
  %966 = vmatprep.subr.bf16.mxu0 0
  %967 = vmatpush2.bf16.msra.mxu0 0
  %968 = vmatprep.mubr.bf16.mxu0 0
  %969 = vmatmul.mubr.bf16.gmra.mxu0 %v822
  %v970 = vpop.f32.mrf.mxu0
  %v971 = vadd.f32 0.0, %v970
  %v972 = vpop.f32.mrf.mxu0
  %v973 = vpop.f32.mrf.mxu0
  %v974 = vpop.f32.mrf.mxu0
  %975 = vdwg.mxu0
  %v976 = vadd.f32 %v931, %v971
  %v977 = vtanh.pop %v976
  %v978 = vpack.c.bf16 %v977, %v977
  %v980 = vsel %vm114, %v978, 0
  %982 = vmatprep.subr.bf16.mxu0 0
  %983 = vmatpush1.bf16.msra.mxu0 0
  %984 = vmatprep.subr.bf16.mxu0 0
  %985 = vmatpush1.bf16.msra.mxu0 0
  %986 = vmatprep.subr.bf16.mxu0 0
  %987 = vmatpush1.bf16.msra.mxu0 0
  %988 = vmatprep.subr.bf16.mxu0 0
  %989 = vmatpush1.bf16.msra.mxu0 0
  %990 = vmatprep.subr.bf16.mxu0 0
  %991 = vmatpush1.bf16.msra.mxu0 0
  %992 = vmatprep.subr.bf16.mxu0 0
  %993 = vmatpush1.bf16.msra.mxu0 0
  %994 = vmatprep.subr.bf16.mxu0 0
  %995 = vmatpush1.bf16.msra.mxu0 %v174
  %996 = vmatprep.subr.bf16.mxu0 0
  %997 = vmatpush1.bf16.msra.mxu0 %v173
  %998 = vmatprep.subr.bf16.mxu0 0
  %999 = vmatpush2.bf16.msra.mxu0 0
  %1000 = vmatprep.subr.bf16.mxu0 0
  %1001 = vmatpush2.bf16.msra.mxu0 0
  %1002 = vmatprep.subr.bf16.mxu0 0
  %1003 = vmatpush2.bf16.msra.mxu0 0
  %1004 = vmatprep.subr.bf16.mxu0 0
  %1005 = vmatpush2.bf16.msra.mxu0 0
  %1006 = vmatprep.subr.bf16.mxu0 0
  %1007 = vmatpush2.bf16.msra.mxu0 0
  %1008 = vmatprep.subr.bf16.mxu0 0
  %1009 = vmatpush2.bf16.msra.mxu0 0
  %1010 = vmatprep.subr.bf16.mxu0 0
  %1011 = vmatpush2.bf16.msra.mxu0 0
  %1012 = vmatprep.subr.bf16.mxu0 0
  %1013 = vmatpush2.bf16.msra.mxu0 0
  %1014 = vmatprep.mubr.bf16.mxu0 0
  %1015 = vmatmul.mubr.bf16.gmra.mxu0 %v980
  %v1016 = vpop.f32.mrf.mxu0
  %v1017 = vadd.f32 0.0, %v1016
  %v1018 = vpop.f32.mrf.mxu0
  %v1019 = vpop.f32.mrf.mxu0
  %v1020 = vpop.f32.mrf.mxu0
  %1021 = vdwg.mxu0
  %v1022 = vadd.f32 %v1017, %v223
  %1023 = vrot.lane.b32.xlu0 %v100, 88
  %v1024 = vpop.permute.xlu0 %1023
  %v1026 = vadd.f32 %v1022, %v1024
  %v1027 = vsel %vm226, %v1026, -inf
  %1028 = vmax.xlane.f32.xlu0 %v1027
  %v1029 = vpop.xlane.xlu0 %1028
  %v1030 = vsub.f32 %v1026, %v1029
  %v1031 = vmul.f32 %v1030, 1.442695
  %v1032 = vpow.pop %v1031
  %v1033 = vsel %vm226, %v1032, 0.0
  %1034 = vadd.xlane.f32.xlu0 %v1033
  %v1035 = vpop.xlane.xlu0 %1034
  %v1036 = vrcp.pop %v1035
  %v1037 = vmul.f32 %v1032, %v1036
  %v1038 = vsel %vm226, %v1022, -inf
  %1039 = vmax.xlane.f32.xlu0 %v1038
  %v1040 = vpop.xlane.xlu0 %1039
  %v1041 = vsub.f32 %v1022, %v1040
  %v1042 = vmul.f32 %v1041, 1.442695
  %v1043 = vpow.pop %v1042
  %v1044 = vsel %vm226, %v1043, 0.0
  %1045 = vadd.xlane.f32.xlu0 %v1044
  %v1046 = vpop.xlane.xlu0 %1045
  %v1047 = vlog2.pop %v1046
  %v1048 = vmul.f32 %v1047, 0.6931472
  %v1049 = vsub.f32 %v1041, %v1048
  %v1050 = vlaneseq
  %v1051 = vand.u32 %v1050, 127
  %vm1052 = vcmp.eq.s32.totalorder %v1051, 0
  %v1053 = vsel %vm1052, 1, 0
  %v1054 = vcvt.s32.f32 %v1053
  %v1055 = vsel %vm1052, 0.0, -1e+30
  %v1056 = vld [vmem:[%s1] sm:$0xf]
  %v1057 = vld [vmem:[%s1 + $0x4] sm:$0xf]
  %v1058 = vld [vmem:[%s1 + $0x8] sm:$0xf]
  %v1059 = vld [vmem:[%s1 + $0xc] sm:$0xf]
  %v1064 = vcombine.low %v1056, %v1057
  %v1065 = vcombine.low %v1058, %v1059
  %v1068 = vpack.c.bf16 %v1065, %v1064
  %v1069 = vlaneseq
  %v1070 = vshrl.u32 %v1069, 7
  %v1071 = vsub.s32 4, %v1070
  %v1072 = vrot.slane %v43, %v1071
  %v1075 = vunpack.c.l.b16 %v36
  %v1076 = vunpack.c.l.b16 %v37
  %v1077 = vpack.c.b16 %v1076, %v1075
  %v1080 = vsel %vm55, %v1068, 0
  %1082 = vmatprep.subr.bf16.mxu0 0
  %1083 = vmatpush1.bf16.msra.mxu0 0
  %1084 = vmatprep.subr.bf16.mxu0 0
  %1085 = vmatpush1.bf16.msra.mxu0 0
  %1086 = vmatprep.subr.bf16.mxu0 0
  %1087 = vmatpush1.bf16.msra.mxu0 0
  %1088 = vmatprep.subr.bf16.mxu0 0
  %1089 = vmatpush1.bf16.msra.mxu0 0
  %1090 = vmatprep.subr.bf16.mxu0 0
  %1091 = vmatpush1.bf16.msra.mxu0 0
  %1092 = vmatprep.subr.bf16.mxu0 0
  %1093 = vmatpush1.bf16.msra.mxu0 0
  %1094 = vmatprep.subr.bf16.mxu0 0
  %1095 = vmatpush1.bf16.msra.mxu0 0
  %1096 = vmatprep.subr.bf16.mxu0 0
  %1097 = vmatpush1.bf16.msra.mxu0 %v1077
  %1098 = vmatprep.subr.bf16.mxu0 0
  %1099 = vmatpush2.bf16.msra.mxu0 0
  %1100 = vmatprep.subr.bf16.mxu0 0
  %1101 = vmatpush2.bf16.msra.mxu0 0
  %1102 = vmatprep.subr.bf16.mxu0 0
  %1103 = vmatpush2.bf16.msra.mxu0 0
  %1104 = vmatprep.subr.bf16.mxu0 0
  %1105 = vmatpush2.bf16.msra.mxu0 0
  %1106 = vmatprep.subr.bf16.mxu0 0
  %1107 = vmatpush2.bf16.msra.mxu0 0
  %1108 = vmatprep.subr.bf16.mxu0 0
  %1109 = vmatpush2.bf16.msra.mxu0 0
  %1110 = vmatprep.subr.bf16.mxu0 0
  %1111 = vmatpush2.bf16.msra.mxu0 0
  %1112 = vmatprep.subr.bf16.mxu0 0
  %1113 = vmatpush2.bf16.msra.mxu0 0
  %1114 = vmatprep.mubr.bf16.mxu0 0
  %1115 = vmatmul.mubr.bf16.gmra.mxu0 %v1080
  %v1116 = vpop.f32.mrf.mxu0
  %v1117 = vadd.f32 %v1072, %v1116
  %v1118 = vpop.f32.mrf.mxu0
  %v1119 = vpop.f32.mrf.mxu0
  %v1120 = vadd.f32 %v1072, %v1119
  %v1121 = vpop.f32.mrf.mxu0
  %1122 = vdwg.mxu0
  %v1123 = vtanh.pop %v1117
  %v1124 = vtanh.pop %v1120
  %v1127 = vcombine.high %v1123, %v1123
  %v1128 = vcombine.high %v1124, %v1124
  %v1131 = vlaneseq
  %v1132 = vshrl.u32 %v1131, 7
  %v1133 = vsub.s32 5, %v1132
  %v1134 = vrot.slane %v43, %v1133
  %v1136 = vsel %vm259, %v38, 0
  %1138 = vmatprep.subr.bf16.mxu0 0
  %1139 = vmatpush1.bf16.msra.mxu0 0
  %1140 = vmatprep.subr.bf16.mxu0 0
  %1141 = vmatpush1.bf16.msra.mxu0 0
  %1142 = vmatprep.subr.bf16.mxu0 0
  %1143 = vmatpush1.bf16.msra.mxu0 0
  %1144 = vmatprep.subr.bf16.mxu0 0
  %1145 = vmatpush1.bf16.msra.mxu0 0
  %1146 = vmatprep.subr.bf16.mxu0 0
  %1147 = vmatpush1.bf16.msra.mxu0 0
  %1148 = vmatprep.subr.bf16.mxu0 0
  %1149 = vmatpush1.bf16.msra.mxu0 0
  %1150 = vmatprep.subr.bf16.mxu0 0
  %1151 = vmatpush1.bf16.msra.mxu0 0
  %1152 = vmatprep.subr.bf16.mxu0 0
  %1153 = vmatpush1.bf16.msra.mxu0 %v1136
  %1154 = vmatprep.subr.bf16.mxu0 0
  %1155 = vmatpush2.bf16.msra.mxu0 0
  %1156 = vmatprep.subr.bf16.mxu0 0
  %1157 = vmatpush2.bf16.msra.mxu0 0
  %1158 = vmatprep.subr.bf16.mxu0 0
  %1159 = vmatpush2.bf16.msra.mxu0 0
  %1160 = vmatprep.subr.bf16.mxu0 0
  %1161 = vmatpush2.bf16.msra.mxu0 0
  %1162 = vmatprep.subr.bf16.mxu0 0
  %1163 = vmatpush2.bf16.msra.mxu0 0
  %1164 = vmatprep.subr.bf16.mxu0 0
  %1165 = vmatpush2.bf16.msra.mxu0 0
  %1166 = vmatprep.subr.bf16.mxu0 0
  %1167 = vmatpush2.bf16.msra.mxu0 0
  %1168 = vmatprep.subr.bf16.mxu0 0
  %1169 = vmatpush2.bf16.msra.mxu0 0
  %1170 = vmatprep.mubr.bf16.mxu0 0
  %1171 = vmatmul.mubr.bf16.gmra.mxu0 %v257
  %v1172 = vpop.f32.mrf.mxu0
  %v1173 = vadd.f32 %v1134, %v1172
  %v1174 = vpop.f32.mrf.mxu0
  %v1175 = vpop.f32.mrf.mxu0
  %v1176 = vpop.f32.mrf.mxu0
  %1177 = vdwg.mxu0
  %1178 = vmatprep.subr.bf16.mxu0 0
  %1179 = vmatpush1.bf16.msra.mxu0 0
  %1180 = vmatprep.subr.bf16.mxu0 0
  %1181 = vmatpush1.bf16.msra.mxu0 0
  %1182 = vmatprep.subr.bf16.mxu0 0
  %1183 = vmatpush1.bf16.msra.mxu0 0
  %1184 = vmatprep.subr.bf16.mxu0 0
  %1185 = vmatpush1.bf16.msra.mxu0 0
  %1186 = vmatprep.subr.bf16.mxu0 0
  %1187 = vmatpush1.bf16.msra.mxu0 0
  %1188 = vmatprep.subr.bf16.mxu0 0
  %1189 = vmatpush1.bf16.msra.mxu0 0
  %1190 = vmatprep.subr.bf16.mxu0 0
  %1191 = vmatpush1.bf16.msra.mxu0 0
  %1192 = vmatprep.subr.bf16.mxu0 0
  %1193 = vmatpush1.bf16.msra.mxu0 %v1136
  %1194 = vmatprep.subr.bf16.mxu0 0
  %1195 = vmatpush2.bf16.msra.mxu0 0
  %1196 = vmatprep.subr.bf16.mxu0 0
  %1197 = vmatpush2.bf16.msra.mxu0 0
  %1198 = vmatprep.subr.bf16.mxu0 0
  %1199 = vmatpush2.bf16.msra.mxu0 0
  %1200 = vmatprep.subr.bf16.mxu0 0
  %1201 = vmatpush2.bf16.msra.mxu0 0
  %1202 = vmatprep.subr.bf16.mxu0 0
  %1203 = vmatpush2.bf16.msra.mxu0 0
  %1204 = vmatprep.subr.bf16.mxu0 0
  %1205 = vmatpush2.bf16.msra.mxu0 0
  %1206 = vmatprep.subr.bf16.mxu0 0
  %1207 = vmatpush2.bf16.msra.mxu0 0
  %1208 = vmatprep.subr.bf16.mxu0 0
  %1209 = vmatpush2.bf16.msra.mxu0 0
  %1210 = vmatprep.mubr.bf16.mxu0 0
  %1211 = vmatmul.mubr.bf16.gmra.mxu0 %v420
  %v1212 = vpop.f32.mrf.mxu0
  %v1213 = vadd.f32 %v1134, %v1212
  %v1214 = vpop.f32.mrf.mxu0
  %v1215 = vpop.f32.mrf.mxu0
  %v1216 = vpop.f32.mrf.mxu0
  %1217 = vdwg.mxu0
  %1218 = vmatprep.subr.bf16.mxu0 0
  %1219 = vmatpush1.bf16.msra.mxu0 0
  %1220 = vmatprep.subr.bf16.mxu0 0
  %1221 = vmatpush1.bf16.msra.mxu0 0
  %1222 = vmatprep.subr.bf16.mxu0 0
  %1223 = vmatpush1.bf16.msra.mxu0 0
  %1224 = vmatprep.subr.bf16.mxu0 0
  %1225 = vmatpush1.bf16.msra.mxu0 0
  %1226 = vmatprep.subr.bf16.mxu0 0
  %1227 = vmatpush1.bf16.msra.mxu0 0
  %1228 = vmatprep.subr.bf16.mxu0 0
  %1229 = vmatpush1.bf16.msra.mxu0 0
  %1230 = vmatprep.subr.bf16.mxu0 0
  %1231 = vmatpush1.bf16.msra.mxu0 0
  %1232 = vmatprep.subr.bf16.mxu0 0
  %1233 = vmatpush1.bf16.msra.mxu0 %v1136
  %1234 = vmatprep.subr.bf16.mxu0 0
  %1235 = vmatpush2.bf16.msra.mxu0 0
  %1236 = vmatprep.subr.bf16.mxu0 0
  %1237 = vmatpush2.bf16.msra.mxu0 0
  %1238 = vmatprep.subr.bf16.mxu0 0
  %1239 = vmatpush2.bf16.msra.mxu0 0
  %1240 = vmatprep.subr.bf16.mxu0 0
  %1241 = vmatpush2.bf16.msra.mxu0 0
  %1242 = vmatprep.subr.bf16.mxu0 0
  %1243 = vmatpush2.bf16.msra.mxu0 0
  %1244 = vmatprep.subr.bf16.mxu0 0
  %1245 = vmatpush2.bf16.msra.mxu0 0
  %1246 = vmatprep.subr.bf16.mxu0 0
  %1247 = vmatpush2.bf16.msra.mxu0 0
  %1248 = vmatprep.subr.bf16.mxu0 0
  %1249 = vmatpush2.bf16.msra.mxu0 0
  %1250 = vmatprep.mubr.bf16.mxu0 0
  %1251 = vmatmul.mubr.bf16.gmra.mxu0 %v578
  %v1252 = vpop.f32.mrf.mxu0
  %v1253 = vadd.f32 %v1134, %v1252
  %v1254 = vpop.f32.mrf.mxu0
  %v1255 = vpop.f32.mrf.mxu0
  %v1256 = vpop.f32.mrf.mxu0
  %1257 = vdwg.mxu0
  %1258 = vmatprep.subr.bf16.mxu0 0
  %1259 = vmatpush1.bf16.msra.mxu0 0
  %1260 = vmatprep.subr.bf16.mxu0 0
  %1261 = vmatpush1.bf16.msra.mxu0 0
  %1262 = vmatprep.subr.bf16.mxu0 0
  %1263 = vmatpush1.bf16.msra.mxu0 0
  %1264 = vmatprep.subr.bf16.mxu0 0
  %1265 = vmatpush1.bf16.msra.mxu0 0
  %1266 = vmatprep.subr.bf16.mxu0 0
  %1267 = vmatpush1.bf16.msra.mxu0 0
  %1268 = vmatprep.subr.bf16.mxu0 0
  %1269 = vmatpush1.bf16.msra.mxu0 0
  %1270 = vmatprep.subr.bf16.mxu0 0
  %1271 = vmatpush1.bf16.msra.mxu0 0
  %1272 = vmatprep.subr.bf16.mxu0 0
  %1273 = vmatpush1.bf16.msra.mxu0 %v1136
  %1274 = vmatprep.subr.bf16.mxu0 0
  %1275 = vmatpush2.bf16.msra.mxu0 0
  %1276 = vmatprep.subr.bf16.mxu0 0
  %1277 = vmatpush2.bf16.msra.mxu0 0
  %1278 = vmatprep.subr.bf16.mxu0 0
  %1279 = vmatpush2.bf16.msra.mxu0 0
  %1280 = vmatprep.subr.bf16.mxu0 0
  %1281 = vmatpush2.bf16.msra.mxu0 0
  %1282 = vmatprep.subr.bf16.mxu0 0
  %1283 = vmatpush2.bf16.msra.mxu0 0
  %1284 = vmatprep.subr.bf16.mxu0 0
  %1285 = vmatpush2.bf16.msra.mxu0 0
  %1286 = vmatprep.subr.bf16.mxu0 0
  %1287 = vmatpush2.bf16.msra.mxu0 0
  %1288 = vmatprep.subr.bf16.mxu0 0
  %1289 = vmatpush2.bf16.msra.mxu0 0
  %1290 = vmatprep.mubr.bf16.mxu0 0
  %1291 = vmatmul.mubr.bf16.gmra.mxu0 %v736
  %v1292 = vpop.f32.mrf.mxu0
  %v1293 = vadd.f32 %v1134, %v1292
  %v1294 = vpop.f32.mrf.mxu0
  %v1295 = vpop.f32.mrf.mxu0
  %v1296 = vpop.f32.mrf.mxu0
  %1297 = vdwg.mxu0
  %1298 = vmatprep.subr.bf16.mxu0 0
  %1299 = vmatpush1.bf16.msra.mxu0 0
  %1300 = vmatprep.subr.bf16.mxu0 0
  %1301 = vmatpush1.bf16.msra.mxu0 0
  %1302 = vmatprep.subr.bf16.mxu0 0
  %1303 = vmatpush1.bf16.msra.mxu0 0
  %1304 = vmatprep.subr.bf16.mxu0 0
  %1305 = vmatpush1.bf16.msra.mxu0 0
  %1306 = vmatprep.subr.bf16.mxu0 0
  %1307 = vmatpush1.bf16.msra.mxu0 0
  %1308 = vmatprep.subr.bf16.mxu0 0
  %1309 = vmatpush1.bf16.msra.mxu0 0
  %1310 = vmatprep.subr.bf16.mxu0 0
  %1311 = vmatpush1.bf16.msra.mxu0 0
  %1312 = vmatprep.subr.bf16.mxu0 0
  %1313 = vmatpush1.bf16.msra.mxu0 %v1136
  %1314 = vmatprep.subr.bf16.mxu0 0
  %1315 = vmatpush2.bf16.msra.mxu0 0
  %1316 = vmatprep.subr.bf16.mxu0 0
  %1317 = vmatpush2.bf16.msra.mxu0 0
  %1318 = vmatprep.subr.bf16.mxu0 0
  %1319 = vmatpush2.bf16.msra.mxu0 0
  %1320 = vmatprep.subr.bf16.mxu0 0
  %1321 = vmatpush2.bf16.msra.mxu0 0
  %1322 = vmatprep.subr.bf16.mxu0 0
  %1323 = vmatpush2.bf16.msra.mxu0 0
  %1324 = vmatprep.subr.bf16.mxu0 0
  %1325 = vmatpush2.bf16.msra.mxu0 0
  %1326 = vmatprep.subr.bf16.mxu0 0
  %1327 = vmatpush2.bf16.msra.mxu0 0
  %1328 = vmatprep.subr.bf16.mxu0 0
  %1329 = vmatpush2.bf16.msra.mxu0 0
  %1330 = vmatprep.mubr.bf16.mxu0 0
  %1331 = vmatmul.mubr.bf16.gmra.mxu0 %v894
  %v1332 = vpop.f32.mrf.mxu0
  %v1333 = vadd.f32 %v1134, %v1332
  %v1334 = vpop.f32.mrf.mxu0
  %v1335 = vpop.f32.mrf.mxu0
  %v1336 = vpop.f32.mrf.mxu0
  %1337 = vdwg.mxu0
  %v1338 = vpack.c.bf16 %v1037, %v1037
  %v1340 = vsel %vm255, %v1338, 0
  %1342 = vmatprep.subr.bf16.mxu0 0
  %1343 = vmatpush1.bf16.msra.mxu0 0
  %1344 = vmatprep.subr.bf16.mxu0 0
  %1345 = vmatpush1.bf16.msra.mxu0 0
  %1346 = vmatprep.subr.bf16.mxu0 0
  %1347 = vmatpush1.bf16.msra.mxu0 0
  %1348 = vmatprep.subr.bf16.mxu0 0
  %1349 = vmatpush1.bf16.msra.mxu0 0
  %1350 = vmatprep.subr.bf16.mxu0 0
  %1351 = vmatpush1.bf16.msra.mxu0 0
  %1352 = vmatprep.subr.bf16.mxu0 0
  %1353 = vmatpush1.bf16.msra.mxu0 0
  %1354 = vmatprep.subr.bf16.mxu0 0
  %1355 = vmatpush1.bf16.msra.mxu0 0
  %1356 = vmatprep.subr.bf16.mxu0 0
  %1357 = vmatpush1.bf16.msra.mxu0 %v1136
  %1358 = vmatprep.subr.bf16.mxu0 0
  %1359 = vmatpush2.bf16.msra.mxu0 0
  %1360 = vmatprep.subr.bf16.mxu0 0
  %1361 = vmatpush2.bf16.msra.mxu0 0
  %1362 = vmatprep.subr.bf16.mxu0 0
  %1363 = vmatpush2.bf16.msra.mxu0 0
  %1364 = vmatprep.subr.bf16.mxu0 0
  %1365 = vmatpush2.bf16.msra.mxu0 0
  %1366 = vmatprep.subr.bf16.mxu0 0
  %1367 = vmatpush2.bf16.msra.mxu0 0
  %1368 = vmatprep.subr.bf16.mxu0 0
  %1369 = vmatpush2.bf16.msra.mxu0 0
  %1370 = vmatprep.subr.bf16.mxu0 0
  %1371 = vmatpush2.bf16.msra.mxu0 0
  %1372 = vmatprep.subr.bf16.mxu0 0
  %1373 = vmatpush2.bf16.msra.mxu0 0
  %1374 = vmatprep.mubr.bf16.mxu0 0
  %1375 = vmatmul.mubr.bf16.gmra.mxu0 %v1340
  %v1376 = vpop.f32.mrf.mxu0
  %v1377 = vadd.f32 %v1134, %v1376
  %v1378 = vpop.f32.mrf.mxu0
  %v1379 = vpop.f32.mrf.mxu0
  %v1380 = vpop.f32.mrf.mxu0
  %1381 = vdwg.mxu0
  %v1382 = vpack.c.bf16 %v1054, %v1054
  %v1384 = vsel %vm255, %v1382, 0
  %1386 = vmatprep.subr.bf16.mxu0 0
  %1387 = vmatpush1.bf16.msra.mxu0 0
  %1388 = vmatprep.subr.bf16.mxu0 0
  %1389 = vmatpush1.bf16.msra.mxu0 0
  %1390 = vmatprep.subr.bf16.mxu0 0
  %1391 = vmatpush1.bf16.msra.mxu0 0
  %1392 = vmatprep.subr.bf16.mxu0 0
  %1393 = vmatpush1.bf16.msra.mxu0 0
  %1394 = vmatprep.subr.bf16.mxu0 0
  %1395 = vmatpush1.bf16.msra.mxu0 0
  %1396 = vmatprep.subr.bf16.mxu0 0
  %1397 = vmatpush1.bf16.msra.mxu0 0
  %1398 = vmatprep.subr.bf16.mxu0 0
  %1399 = vmatpush1.bf16.msra.mxu0 0
  %1400 = vmatprep.subr.bf16.mxu0 0
  %1401 = vmatpush1.bf16.msra.mxu0 %v1136
  %1402 = vmatprep.subr.bf16.mxu0 0
  %1403 = vmatpush2.bf16.msra.mxu0 0
  %1404 = vmatprep.subr.bf16.mxu0 0
  %1405 = vmatpush2.bf16.msra.mxu0 0
  %1406 = vmatprep.subr.bf16.mxu0 0
  %1407 = vmatpush2.bf16.msra.mxu0 0
  %1408 = vmatprep.subr.bf16.mxu0 0
  %1409 = vmatpush2.bf16.msra.mxu0 0
  %1410 = vmatprep.subr.bf16.mxu0 0
  %1411 = vmatpush2.bf16.msra.mxu0 0
  %1412 = vmatprep.subr.bf16.mxu0 0
  %1413 = vmatpush2.bf16.msra.mxu0 0
  %1414 = vmatprep.subr.bf16.mxu0 0
  %1415 = vmatpush2.bf16.msra.mxu0 0
  %1416 = vmatprep.subr.bf16.mxu0 0
  %1417 = vmatpush2.bf16.msra.mxu0 0
  %1418 = vmatprep.mubr.bf16.mxu0 0
  %1419 = vmatmul.mubr.bf16.gmra.mxu0 %v1384
  %v1420 = vpop.f32.mrf.mxu0
  %v1421 = vadd.f32 %v1134, %v1420
  %v1422 = vpop.f32.mrf.mxu0
  %v1423 = vpop.f32.mrf.mxu0
  %v1424 = vpop.f32.mrf.mxu0
  %1425 = vdwg.mxu0
  %v1426 = vtanh.pop %v1173
  %v1429 = vunpack.c.l.s4 1966171168
  %v1430 = vunpack.c.0.s8 %v1429
  %v1431 = vlaneseq
  %v1432 = vshrl.u32 %v1431, 7
  %v1433 = vsub.s32 %v1430, %v1432
  %v1434 = vrot.slane %v1426, %v1433
  %v1435 = vcombine.high %v1434, %v1434
  %v1437 = vunpack.c.l.s4 1966171168
  %v1438 = vunpack.c.0.s8 %v1437
  %v1439 = vlaneseq
  %v1440 = vshrl.u32 %v1439, 7
  %v1441 = vsub.s32 %v1438, %v1440
  %v1442 = vrot.slane %v1434, %v1441
  %v1444 = vunpack.c.l.s4 1966171168
  %v1445 = vunpack.c.0.s8 %v1444
  %v1446 = vlaneseq
  %v1447 = vshrl.u32 %v1446, 7
  %v1448 = vsub.s32 %v1445, %v1447
  %v1449 = vrot.slane %v1435, %v1448
  %v1450 = vcombine.high %v1442, %v1442
  %v1451 = vcombine.high %v1449, %v1449
  %v1452 = vlaneseq
  %v1453 = vshrl.u32 %v1452, 7
  %v1454 = vsub.s32 0, %v1453
  %v1455 = vrot.slane %v1442, %v1454
  %v1456 = vlaneseq
  %v1457 = vshrl.u32 %v1456, 7
  %v1458 = vsub.s32 0, %v1457
  %v1459 = vrot.slane %v1449, %v1458
  %v1460 = vlaneseq
  %v1461 = vshrl.u32 %v1460, 7
  %v1462 = vsub.s32 0, %v1461
  %v1463 = vrot.slane %v1450, %v1462
  %v1464 = vlaneseq
  %v1465 = vshrl.u32 %v1464, 7
  %v1466 = vsub.s32 0, %v1465
  %v1467 = vrot.slane %v1451, %v1466
  %v1472 = vmul.f32 %v1123, %v1455
  %v1473 = vmul.f32 %v1127, %v1459
  %v1474 = vmul.f32 %v1124, %v1463
  %v1475 = vmul.f32 %v1128, %v1467
  %vm1476 = vcmask 257024
  %v1477 = vsel %vm1476, %v1472, 0.0
  %1478 = vadd.xlane.f32.xlu0 %v1477
  %v1479 = vpop.xlane.xlu0 %1478
  %v1480 = vsel %vm1476, %v1473, 0.0
  %1481 = vadd.xlane.f32.xlu0 %v1480
  %v1482 = vpop.xlane.xlu0 %1481
  %v1483 = vsel %vm1476, %v1474, 0.0
  %1484 = vadd.xlane.f32.xlu0 %v1483
  %v1485 = vpop.xlane.xlu0 %1484
  %v1486 = vsel %vm1476, %v1475, 0.0
  %1487 = vadd.xlane.f32.xlu0 %v1486
  %v1488 = vpop.xlane.xlu0 %1487
  %v1493 = vlaneseq
  %v1494 = vshrl.u32 %v1493, 7
  %v1495 = vsub.s32 %v1051, %v1494
  %v1496 = vrot.slane %v1479, %v1495
  %v1497 = vlaneseq
  %v1498 = vshrl.u32 %v1497, 7
  %v1499 = vsub.s32 %v1051, %v1498
  %v1500 = vrot.slane %v1482, %v1499
  %v1501 = vlaneseq
  %v1502 = vshrl.u32 %v1501, 7
  %v1503 = vsub.s32 %v1051, %v1502
  %v1504 = vrot.slane %v1485, %v1503
  %v1505 = vlaneseq
  %v1506 = vshrl.u32 %v1505, 7
  %v1507 = vsub.s32 %v1051, %v1506
  %v1508 = vrot.slane %v1488, %v1507
  %vm1509 = vcmask 1041409
  %v1510 = vsel %vm1509, %v1500, %v1496
  %vm1511 = vcmask 1042434
  %v1512 = vsel %vm1511, %v1504, %v1510
  %vm1513 = vcmask 1043459
  %v1514 = vsel %vm1513, %v1508, %v1512
  %vm1516 = vcmask 27648
  %v1517 = vsel %vm1516, %v1514, -inf
  %1518 = vmax.xlane.f32.xlu0 %v1517
  %v1519 = vpop.xlane.xlu0 %1518
  %v1521 = vlaneseq
  %v1522 = vshrl.u32 %v1521, 7
  %v1523 = vsub.s32 0, %v1522
  %v1524 = vrot.slane %v1519, %v1523
  %v1525 = vlaneseq
  %v1526 = vshrl.u32 %v1525, 7
  %v1527 = vsub.s32 1, %v1526
  %v1528 = vrot.slane %v1519, %v1527
  %v1529 = vlaneseq
  %v1530 = vshrl.u32 %v1529, 7
  %v1531 = vsub.s32 2, %v1530
  %v1532 = vrot.slane %v1519, %v1531
  %v1533 = vlaneseq
  %v1534 = vshrl.u32 %v1533, 7
  %v1535 = vsub.s32 3, %v1534
  %v1536 = vrot.slane %v1519, %v1535
  %v1541 = vsub.f32 %v1479, %v1524
  %v1542 = vsub.f32 %v1482, %v1528
  %v1543 = vsub.f32 %v1485, %v1532
  %v1544 = vsub.f32 %v1488, %v1536
  %v1545 = vmul.f32 %v1541, 1.442695
  %v1546 = vpow.pop %v1545
  %v1547 = vmul.f32 %v1542, 1.442695
  %v1548 = vpow.pop %v1547
  %v1549 = vmul.f32 %v1543, 1.442695
  %v1550 = vpow.pop %v1549
  %v1551 = vmul.f32 %v1544, 1.442695
  %v1552 = vpow.pop %v1551
  %1557 = vset.pattern.permute.xlu0 0
  %1558 = vperm.xlu0 %1557, %v1546
  %v1559 = vpop.permute.xlu0 %1558
  %1560 = vset.pattern.permute.xlu0 0
  %1561 = vperm.xlu0 %1560, %v1548
  %v1562 = vpop.permute.xlu0 %1561
  %1563 = vset.pattern.permute.xlu0 0
  %1564 = vperm.xlu0 %1563, %v1550
  %v1565 = vpop.permute.xlu0 %1564
  %1566 = vset.pattern.permute.xlu0 0
  %1567 = vperm.xlu0 %1566, %v1552
  %v1568 = vpop.permute.xlu0 %1567
  %v1569 = vlaneseq
  %v1570 = vshrl.u32 %v1569, 7
  %v1571 = vsub.s32 %v1051, %v1570
  %v1572 = vrot.slane %v1559, %v1571
  %v1573 = vlaneseq
  %v1574 = vshrl.u32 %v1573, 7
  %v1575 = vsub.s32 %v1051, %v1574
  %v1576 = vrot.slane %v1562, %v1575
  %v1577 = vlaneseq
  %v1578 = vshrl.u32 %v1577, 7
  %v1579 = vsub.s32 %v1051, %v1578
  %v1580 = vrot.slane %v1565, %v1579
  %v1581 = vlaneseq
  %v1582 = vshrl.u32 %v1581, 7
  %v1583 = vsub.s32 %v1051, %v1582
  %v1584 = vrot.slane %v1568, %v1583
  %v1585 = vsel %vm1509, %v1576, %v1572
  %v1586 = vsel %vm1511, %v1580, %v1585
  %v1587 = vsel %vm1513, %v1584, %v1586
  %v1589 = vsel %vm1516, %v1587, 0.0
  %1590 = vadd.xlane.f32.xlu0 %v1589
  %v1591 = vpop.xlane.xlu0 %1590
  %v1592 = vlog2.pop %v1591
  %v1593 = vmul.f32 %v1592, 0.6931472
  %v1595 = vlaneseq
  %v1596 = vshrl.u32 %v1595, 7
  %v1597 = vsub.s32 0, %v1596
  %v1598 = vrot.slane %v1593, %v1597
  %v1599 = vlaneseq
  %v1600 = vshrl.u32 %v1599, 7
  %v1601 = vsub.s32 1, %v1600
  %v1602 = vrot.slane %v1593, %v1601
  %v1603 = vlaneseq
  %v1604 = vshrl.u32 %v1603, 7
  %v1605 = vsub.s32 2, %v1604
  %v1606 = vrot.slane %v1593, %v1605
  %v1607 = vlaneseq
  %v1608 = vshrl.u32 %v1607, 7
  %v1609 = vsub.s32 3, %v1608
  %v1610 = vrot.slane %v1593, %v1609
  %v1615 = vsub.f32 %v1541, %v1598
  %v1616 = vsub.f32 %v1542, %v1602
  %v1617 = vsub.f32 %v1543, %v1606
  %v1618 = vsub.f32 %v1544, %v1610
  %v1619 = vpack.c.bf16 %v1426, %v1426
  %v1624 = vunpack.c.l.b16 %v39
  %v1625 = vunpack.c.l.b16 %v40
  %v1626 = vunpack.c.l.b16 %v41
  %v1627 = vunpack.c.l.b16 %v42
  %v1628 = vpack.c.b16 %v1625, %v1624
  %v1629 = vpack.c.b16 %v1627, %v1626
  %v1633 = vsel %vm114, %v1619, 0
  %1635 = vmatprep.subr.bf16.mxu0 0
  %1636 = vmatpush1.bf16.msra.mxu0 0
  %1637 = vmatprep.subr.bf16.mxu0 0
  %1638 = vmatpush1.bf16.msra.mxu0 0
  %1639 = vmatprep.subr.bf16.mxu0 0
  %1640 = vmatpush1.bf16.msra.mxu0 0
  %1641 = vmatprep.subr.bf16.mxu0 0
  %1642 = vmatpush1.bf16.msra.mxu0 0
  %1643 = vmatprep.subr.bf16.mxu0 0
  %1644 = vmatpush1.bf16.msra.mxu0 0
  %1645 = vmatprep.subr.bf16.mxu0 0
  %1646 = vmatpush1.bf16.msra.mxu0 0
  %1647 = vmatprep.subr.bf16.mxu0 0
  %1648 = vmatpush1.bf16.msra.mxu0 %v1629
  %1649 = vmatprep.subr.bf16.mxu0 0
  %1650 = vmatpush1.bf16.msra.mxu0 %v1628
  %1651 = vmatprep.subr.bf16.mxu0 0
  %1652 = vmatpush2.bf16.msra.mxu0 0
  %1653 = vmatprep.subr.bf16.mxu0 0
  %1654 = vmatpush2.bf16.msra.mxu0 0
  %1655 = vmatprep.subr.bf16.mxu0 0
  %1656 = vmatpush2.bf16.msra.mxu0 0
  %1657 = vmatprep.subr.bf16.mxu0 0
  %1658 = vmatpush2.bf16.msra.mxu0 0
  %1659 = vmatprep.subr.bf16.mxu0 0
  %1660 = vmatpush2.bf16.msra.mxu0 0
  %1661 = vmatprep.subr.bf16.mxu0 0
  %1662 = vmatpush2.bf16.msra.mxu0 0
  %1663 = vmatprep.subr.bf16.mxu0 0
  %1664 = vmatpush2.bf16.msra.mxu0 0
  %1665 = vmatprep.subr.bf16.mxu0 0
  %1666 = vmatpush2.bf16.msra.mxu0 0
  %1667 = vmatprep.mubr.bf16.mxu0 0
  %1668 = vmatmul.mubr.bf16.gmra.mxu0 %v1633
  %v1669 = vpop.f32.mrf.mxu0
  %v1670 = vadd.f32 0.0, %v1669
  %v1671 = vpop.f32.mrf.mxu0
  %v1672 = vpop.f32.mrf.mxu0
  %v1673 = vpop.f32.mrf.mxu0
  %1674 = vdwg.mxu0
  %v1675 = vadd.f32 %v1213, %v1670
  %v1676 = vtanh.pop %v1675
  %v1679 = vunpack.c.l.s4 1966171168
  %v1680 = vunpack.c.0.s8 %v1679
  %v1681 = vlaneseq
  %v1682 = vshrl.u32 %v1681, 7
  %v1683 = vsub.s32 %v1680, %v1682
  %v1684 = vrot.slane %v1676, %v1683
  %v1685 = vcombine.high %v1684, %v1684
  %v1687 = vunpack.c.l.s4 1966171168
  %v1688 = vunpack.c.0.s8 %v1687
  %v1689 = vlaneseq
  %v1690 = vshrl.u32 %v1689, 7
  %v1691 = vsub.s32 %v1688, %v1690
  %v1692 = vrot.slane %v1684, %v1691
  %v1694 = vunpack.c.l.s4 1966171168
  %v1695 = vunpack.c.0.s8 %v1694
  %v1696 = vlaneseq
  %v1697 = vshrl.u32 %v1696, 7
  %v1698 = vsub.s32 %v1695, %v1697
  %v1699 = vrot.slane %v1685, %v1698
  %v1700 = vcombine.high %v1692, %v1692
  %v1701 = vcombine.high %v1699, %v1699
  %v1702 = vlaneseq
  %v1703 = vshrl.u32 %v1702, 7
  %v1704 = vsub.s32 0, %v1703
  %v1705 = vrot.slane %v1692, %v1704
  %v1706 = vlaneseq
  %v1707 = vshrl.u32 %v1706, 7
  %v1708 = vsub.s32 0, %v1707
  %v1709 = vrot.slane %v1699, %v1708
  %v1710 = vlaneseq
  %v1711 = vshrl.u32 %v1710, 7
  %v1712 = vsub.s32 0, %v1711
  %v1713 = vrot.slane %v1700, %v1712
  %v1714 = vlaneseq
  %v1715 = vshrl.u32 %v1714, 7
  %v1716 = vsub.s32 0, %v1715
  %v1717 = vrot.slane %v1701, %v1716
  %v1722 = vmul.f32 %v1123, %v1705
  %v1723 = vmul.f32 %v1127, %v1709
  %v1724 = vmul.f32 %v1124, %v1713
  %v1725 = vmul.f32 %v1128, %v1717
  %v1726 = vsel %vm1476, %v1722, 0.0
  %1727 = vadd.xlane.f32.xlu0 %v1726
  %v1728 = vpop.xlane.xlu0 %1727
  %v1729 = vsel %vm1476, %v1723, 0.0
  %1730 = vadd.xlane.f32.xlu0 %v1729
  %v1731 = vpop.xlane.xlu0 %1730
  %v1732 = vsel %vm1476, %v1724, 0.0
  %1733 = vadd.xlane.f32.xlu0 %v1732
  %v1734 = vpop.xlane.xlu0 %1733
  %v1735 = vsel %vm1476, %v1725, 0.0
  %1736 = vadd.xlane.f32.xlu0 %v1735
  %v1737 = vpop.xlane.xlu0 %1736
  %v1742 = vlaneseq
  %v1743 = vshrl.u32 %v1742, 7
  %v1744 = vsub.s32 %v1051, %v1743
  %v1745 = vrot.slane %v1728, %v1744
  %v1746 = vlaneseq
  %v1747 = vshrl.u32 %v1746, 7
  %v1748 = vsub.s32 %v1051, %v1747
  %v1749 = vrot.slane %v1731, %v1748
  %v1750 = vlaneseq
  %v1751 = vshrl.u32 %v1750, 7
  %v1752 = vsub.s32 %v1051, %v1751
  %v1753 = vrot.slane %v1734, %v1752
  %v1754 = vlaneseq
  %v1755 = vshrl.u32 %v1754, 7
  %v1756 = vsub.s32 %v1051, %v1755
  %v1757 = vrot.slane %v1737, %v1756
  %v1758 = vsel %vm1509, %v1749, %v1745
  %v1759 = vsel %vm1511, %v1753, %v1758
  %v1760 = vsel %vm1513, %v1757, %v1759
  %v1762 = vsel %vm1516, %v1760, -inf
  %1763 = vmax.xlane.f32.xlu0 %v1762
  %v1764 = vpop.xlane.xlu0 %1763
  %v1766 = vlaneseq
  %v1767 = vshrl.u32 %v1766, 7
  %v1768 = vsub.s32 0, %v1767
  %v1769 = vrot.slane %v1764, %v1768
  %v1770 = vlaneseq
  %v1771 = vshrl.u32 %v1770, 7
  %v1772 = vsub.s32 1, %v1771
  %v1773 = vrot.slane %v1764, %v1772
  %v1774 = vlaneseq
  %v1775 = vshrl.u32 %v1774, 7
  %v1776 = vsub.s32 2, %v1775
  %v1777 = vrot.slane %v1764, %v1776
  %v1778 = vlaneseq
  %v1779 = vshrl.u32 %v1778, 7
  %v1780 = vsub.s32 3, %v1779
  %v1781 = vrot.slane %v1764, %v1780
  %v1786 = vsub.f32 %v1728, %v1769
  %v1787 = vsub.f32 %v1731, %v1773
  %v1788 = vsub.f32 %v1734, %v1777
  %v1789 = vsub.f32 %v1737, %v1781
  %v1790 = vmul.f32 %v1786, 1.442695
  %v1791 = vpow.pop %v1790
  %v1792 = vmul.f32 %v1787, 1.442695
  %v1793 = vpow.pop %v1792
  %v1794 = vmul.f32 %v1788, 1.442695
  %v1795 = vpow.pop %v1794
  %v1796 = vmul.f32 %v1789, 1.442695
  %v1797 = vpow.pop %v1796
  %1802 = vset.pattern.permute.xlu0 0
  %1803 = vperm.xlu0 %1802, %v1791
  %v1804 = vpop.permute.xlu0 %1803
  %1805 = vset.pattern.permute.xlu0 0
  %1806 = vperm.xlu0 %1805, %v1793
  %v1807 = vpop.permute.xlu0 %1806
  %1808 = vset.pattern.permute.xlu0 0
  %1809 = vperm.xlu0 %1808, %v1795
  %v1810 = vpop.permute.xlu0 %1809
  %1811 = vset.pattern.permute.xlu0 0
  %1812 = vperm.xlu0 %1811, %v1797
  %v1813 = vpop.permute.xlu0 %1812
  %v1814 = vlaneseq
  %v1815 = vshrl.u32 %v1814, 7
  %v1816 = vsub.s32 %v1051, %v1815
  %v1817 = vrot.slane %v1804, %v1816
  %v1818 = vlaneseq
  %v1819 = vshrl.u32 %v1818, 7
  %v1820 = vsub.s32 %v1051, %v1819
  %v1821 = vrot.slane %v1807, %v1820
  %v1822 = vlaneseq
  %v1823 = vshrl.u32 %v1822, 7
  %v1824 = vsub.s32 %v1051, %v1823
  %v1825 = vrot.slane %v1810, %v1824
  %v1826 = vlaneseq
  %v1827 = vshrl.u32 %v1826, 7
  %v1828 = vsub.s32 %v1051, %v1827
  %v1829 = vrot.slane %v1813, %v1828
  %v1830 = vsel %vm1509, %v1821, %v1817
  %v1831 = vsel %vm1511, %v1825, %v1830
  %v1832 = vsel %vm1513, %v1829, %v1831
  %v1834 = vsel %vm1516, %v1832, 0.0
  %1835 = vadd.xlane.f32.xlu0 %v1834
  %v1836 = vpop.xlane.xlu0 %1835
  %v1837 = vlog2.pop %v1836
  %v1838 = vmul.f32 %v1837, 0.6931472
  %v1840 = vlaneseq
  %v1841 = vshrl.u32 %v1840, 7
  %v1842 = vsub.s32 0, %v1841
  %v1843 = vrot.slane %v1838, %v1842
  %v1844 = vlaneseq
  %v1845 = vshrl.u32 %v1844, 7
  %v1846 = vsub.s32 1, %v1845
  %v1847 = vrot.slane %v1838, %v1846
  %v1848 = vlaneseq
  %v1849 = vshrl.u32 %v1848, 7
  %v1850 = vsub.s32 2, %v1849
  %v1851 = vrot.slane %v1838, %v1850
  %v1852 = vlaneseq
  %v1853 = vshrl.u32 %v1852, 7
  %v1854 = vsub.s32 3, %v1853
  %v1855 = vrot.slane %v1838, %v1854
  %v1860 = vsub.f32 %v1786, %v1843
  %v1861 = vsub.f32 %v1787, %v1847
  %v1862 = vsub.f32 %v1788, %v1851
  %v1863 = vsub.f32 %v1789, %v1855
  %v1864 = vpack.c.bf16 %v1676, %v1676
  %v1866 = vsel %vm114, %v1864, 0
  %1868 = vmatprep.subr.bf16.mxu0 0
  %1869 = vmatpush1.bf16.msra.mxu0 0
  %1870 = vmatprep.subr.bf16.mxu0 0
  %1871 = vmatpush1.bf16.msra.mxu0 0
  %1872 = vmatprep.subr.bf16.mxu0 0
  %1873 = vmatpush1.bf16.msra.mxu0 0
  %1874 = vmatprep.subr.bf16.mxu0 0
  %1875 = vmatpush1.bf16.msra.mxu0 0
  %1876 = vmatprep.subr.bf16.mxu0 0
  %1877 = vmatpush1.bf16.msra.mxu0 0
  %1878 = vmatprep.subr.bf16.mxu0 0
  %1879 = vmatpush1.bf16.msra.mxu0 0
  %1880 = vmatprep.subr.bf16.mxu0 0
  %1881 = vmatpush1.bf16.msra.mxu0 %v1629
  %1882 = vmatprep.subr.bf16.mxu0 0
  %1883 = vmatpush1.bf16.msra.mxu0 %v1628
  %1884 = vmatprep.subr.bf16.mxu0 0
  %1885 = vmatpush2.bf16.msra.mxu0 0
  %1886 = vmatprep.subr.bf16.mxu0 0
  %1887 = vmatpush2.bf16.msra.mxu0 0
  %1888 = vmatprep.subr.bf16.mxu0 0
  %1889 = vmatpush2.bf16.msra.mxu0 0
  %1890 = vmatprep.subr.bf16.mxu0 0
  %1891 = vmatpush2.bf16.msra.mxu0 0
  %1892 = vmatprep.subr.bf16.mxu0 0
  %1893 = vmatpush2.bf16.msra.mxu0 0
  %1894 = vmatprep.subr.bf16.mxu0 0
  %1895 = vmatpush2.bf16.msra.mxu0 0
  %1896 = vmatprep.subr.bf16.mxu0 0
  %1897 = vmatpush2.bf16.msra.mxu0 0
  %1898 = vmatprep.subr.bf16.mxu0 0
  %1899 = vmatpush2.bf16.msra.mxu0 0
  %1900 = vmatprep.mubr.bf16.mxu0 0
  %1901 = vmatmul.mubr.bf16.gmra.mxu0 %v1866
  %v1902 = vpop.f32.mrf.mxu0
  %v1903 = vadd.f32 0.0, %v1902
  %v1904 = vpop.f32.mrf.mxu0
  %v1905 = vpop.f32.mrf.mxu0
  %v1906 = vpop.f32.mrf.mxu0
  %1907 = vdwg.mxu0
  %v1908 = vadd.f32 %v1253, %v1903
  %v1909 = vtanh.pop %v1908
  %v1912 = vunpack.c.l.s4 1966171168
  %v1913 = vunpack.c.0.s8 %v1912
  %v1914 = vlaneseq
  %v1915 = vshrl.u32 %v1914, 7
  %v1916 = vsub.s32 %v1913, %v1915
  %v1917 = vrot.slane %v1909, %v1916
  %v1918 = vcombine.high %v1917, %v1917
  %v1920 = vunpack.c.l.s4 1966171168
  %v1921 = vunpack.c.0.s8 %v1920
  %v1922 = vlaneseq
  %v1923 = vshrl.u32 %v1922, 7
  %v1924 = vsub.s32 %v1921, %v1923
  %v1925 = vrot.slane %v1917, %v1924
  %v1927 = vunpack.c.l.s4 1966171168
  %v1928 = vunpack.c.0.s8 %v1927
  %v1929 = vlaneseq
  %v1930 = vshrl.u32 %v1929, 7
  %v1931 = vsub.s32 %v1928, %v1930
  %v1932 = vrot.slane %v1918, %v1931
  %v1933 = vcombine.high %v1925, %v1925
  %v1934 = vcombine.high %v1932, %v1932
  %v1935 = vlaneseq
  %v1936 = vshrl.u32 %v1935, 7
  %v1937 = vsub.s32 0, %v1936
  %v1938 = vrot.slane %v1925, %v1937
  %v1939 = vlaneseq
  %v1940 = vshrl.u32 %v1939, 7
  %v1941 = vsub.s32 0, %v1940
  %v1942 = vrot.slane %v1932, %v1941
  %v1943 = vlaneseq
  %v1944 = vshrl.u32 %v1943, 7
  %v1945 = vsub.s32 0, %v1944
  %v1946 = vrot.slane %v1933, %v1945
  %v1947 = vlaneseq
  %v1948 = vshrl.u32 %v1947, 7
  %v1949 = vsub.s32 0, %v1948
  %v1950 = vrot.slane %v1934, %v1949
  %v1955 = vmul.f32 %v1123, %v1938
  %v1956 = vmul.f32 %v1127, %v1942
  %v1957 = vmul.f32 %v1124, %v1946
  %v1958 = vmul.f32 %v1128, %v1950
  %v1959 = vsel %vm1476, %v1955, 0.0
  %1960 = vadd.xlane.f32.xlu0 %v1959
  %v1961 = vpop.xlane.xlu0 %1960
  %v1962 = vsel %vm1476, %v1956, 0.0
  %1963 = vadd.xlane.f32.xlu0 %v1962
  %v1964 = vpop.xlane.xlu0 %1963
  %v1965 = vsel %vm1476, %v1957, 0.0
  %1966 = vadd.xlane.f32.xlu0 %v1965
  %v1967 = vpop.xlane.xlu0 %1966
  %v1968 = vsel %vm1476, %v1958, 0.0
  %1969 = vadd.xlane.f32.xlu0 %v1968
  %v1970 = vpop.xlane.xlu0 %1969
  %v1975 = vlaneseq
  %v1976 = vshrl.u32 %v1975, 7
  %v1977 = vsub.s32 %v1051, %v1976
  %v1978 = vrot.slane %v1961, %v1977
  %v1979 = vlaneseq
  %v1980 = vshrl.u32 %v1979, 7
  %v1981 = vsub.s32 %v1051, %v1980
  %v1982 = vrot.slane %v1964, %v1981
  %v1983 = vlaneseq
  %v1984 = vshrl.u32 %v1983, 7
  %v1985 = vsub.s32 %v1051, %v1984
  %v1986 = vrot.slane %v1967, %v1985
  %v1987 = vlaneseq
  %v1988 = vshrl.u32 %v1987, 7
  %v1989 = vsub.s32 %v1051, %v1988
  %v1990 = vrot.slane %v1970, %v1989
  %v1991 = vsel %vm1509, %v1982, %v1978
  %v1992 = vsel %vm1511, %v1986, %v1991
  %v1993 = vsel %vm1513, %v1990, %v1992
  %v1995 = vsel %vm1516, %v1993, -inf
  %1996 = vmax.xlane.f32.xlu0 %v1995
  %v1997 = vpop.xlane.xlu0 %1996
  %v1999 = vlaneseq
  %v2000 = vshrl.u32 %v1999, 7
  %v2001 = vsub.s32 0, %v2000
  %v2002 = vrot.slane %v1997, %v2001
  %v2003 = vlaneseq
  %v2004 = vshrl.u32 %v2003, 7
  %v2005 = vsub.s32 1, %v2004
  %v2006 = vrot.slane %v1997, %v2005
  %v2007 = vlaneseq
  %v2008 = vshrl.u32 %v2007, 7
  %v2009 = vsub.s32 2, %v2008
  %v2010 = vrot.slane %v1997, %v2009
  %v2011 = vlaneseq
  %v2012 = vshrl.u32 %v2011, 7
  %v2013 = vsub.s32 3, %v2012
  %v2014 = vrot.slane %v1997, %v2013
  %v2019 = vsub.f32 %v1961, %v2002
  %v2020 = vsub.f32 %v1964, %v2006
  %v2021 = vsub.f32 %v1967, %v2010
  %v2022 = vsub.f32 %v1970, %v2014
  %v2023 = vmul.f32 %v2019, 1.442695
  %v2024 = vpow.pop %v2023
  %v2025 = vmul.f32 %v2020, 1.442695
  %v2026 = vpow.pop %v2025
  %v2027 = vmul.f32 %v2021, 1.442695
  %v2028 = vpow.pop %v2027
  %v2029 = vmul.f32 %v2022, 1.442695
  %v2030 = vpow.pop %v2029
  %2035 = vset.pattern.permute.xlu0 0
  %2036 = vperm.xlu0 %2035, %v2024
  %v2037 = vpop.permute.xlu0 %2036
  %2038 = vset.pattern.permute.xlu0 0
  %2039 = vperm.xlu0 %2038, %v2026
  %v2040 = vpop.permute.xlu0 %2039
  %2041 = vset.pattern.permute.xlu0 0
  %2042 = vperm.xlu0 %2041, %v2028
  %v2043 = vpop.permute.xlu0 %2042
  %2044 = vset.pattern.permute.xlu0 0
  %2045 = vperm.xlu0 %2044, %v2030
  %v2046 = vpop.permute.xlu0 %2045
  %v2047 = vlaneseq
  %v2048 = vshrl.u32 %v2047, 7
  %v2049 = vsub.s32 %v1051, %v2048
  %v2050 = vrot.slane %v2037, %v2049
  %v2051 = vlaneseq
  %v2052 = vshrl.u32 %v2051, 7
  %v2053 = vsub.s32 %v1051, %v2052
  %v2054 = vrot.slane %v2040, %v2053
  %v2055 = vlaneseq
  %v2056 = vshrl.u32 %v2055, 7
  %v2057 = vsub.s32 %v1051, %v2056
  %v2058 = vrot.slane %v2043, %v2057
  %v2059 = vlaneseq
  %v2060 = vshrl.u32 %v2059, 7
  %v2061 = vsub.s32 %v1051, %v2060
  %v2062 = vrot.slane %v2046, %v2061
  %v2063 = vsel %vm1509, %v2054, %v2050
  %v2064 = vsel %vm1511, %v2058, %v2063
  %v2065 = vsel %vm1513, %v2062, %v2064
  %v2067 = vsel %vm1516, %v2065, 0.0
  %2068 = vadd.xlane.f32.xlu0 %v2067
  %v2069 = vpop.xlane.xlu0 %2068
  %v2070 = vlog2.pop %v2069
  %v2071 = vmul.f32 %v2070, 0.6931472
  %v2073 = vlaneseq
  %v2074 = vshrl.u32 %v2073, 7
  %v2075 = vsub.s32 0, %v2074
  %v2076 = vrot.slane %v2071, %v2075
  %v2077 = vlaneseq
  %v2078 = vshrl.u32 %v2077, 7
  %v2079 = vsub.s32 1, %v2078
  %v2080 = vrot.slane %v2071, %v2079
  %v2081 = vlaneseq
  %v2082 = vshrl.u32 %v2081, 7
  %v2083 = vsub.s32 2, %v2082
  %v2084 = vrot.slane %v2071, %v2083
  %v2085 = vlaneseq
  %v2086 = vshrl.u32 %v2085, 7
  %v2087 = vsub.s32 3, %v2086
  %v2088 = vrot.slane %v2071, %v2087
  %v2093 = vsub.f32 %v2019, %v2076
  %v2094 = vsub.f32 %v2020, %v2080
  %v2095 = vsub.f32 %v2021, %v2084
  %v2096 = vsub.f32 %v2022, %v2088
  %v2097 = vpack.c.bf16 %v1909, %v1909
  %v2099 = vsel %vm114, %v2097, 0
  %2101 = vmatprep.subr.bf16.mxu0 0
  %2102 = vmatpush1.bf16.msra.mxu0 0
  %2103 = vmatprep.subr.bf16.mxu0 0
  %2104 = vmatpush1.bf16.msra.mxu0 0
  %2105 = vmatprep.subr.bf16.mxu0 0
  %2106 = vmatpush1.bf16.msra.mxu0 0
  %2107 = vmatprep.subr.bf16.mxu0 0
  %2108 = vmatpush1.bf16.msra.mxu0 0
  %2109 = vmatprep.subr.bf16.mxu0 0
  %2110 = vmatpush1.bf16.msra.mxu0 0
  %2111 = vmatprep.subr.bf16.mxu0 0
  %2112 = vmatpush1.bf16.msra.mxu0 0
  %2113 = vmatprep.subr.bf16.mxu0 0
  %2114 = vmatpush1.bf16.msra.mxu0 %v1629
  %2115 = vmatprep.subr.bf16.mxu0 0
  %2116 = vmatpush1.bf16.msra.mxu0 %v1628
  %2117 = vmatprep.subr.bf16.mxu0 0
  %2118 = vmatpush2.bf16.msra.mxu0 0
  %2119 = vmatprep.subr.bf16.mxu0 0
  %2120 = vmatpush2.bf16.msra.mxu0 0
  %2121 = vmatprep.subr.bf16.mxu0 0
  %2122 = vmatpush2.bf16.msra.mxu0 0
  %2123 = vmatprep.subr.bf16.mxu0 0
  %2124 = vmatpush2.bf16.msra.mxu0 0
  %2125 = vmatprep.subr.bf16.mxu0 0
  %2126 = vmatpush2.bf16.msra.mxu0 0
  %2127 = vmatprep.subr.bf16.mxu0 0
  %2128 = vmatpush2.bf16.msra.mxu0 0
  %2129 = vmatprep.subr.bf16.mxu0 0
  %2130 = vmatpush2.bf16.msra.mxu0 0
  %2131 = vmatprep.subr.bf16.mxu0 0
  %2132 = vmatpush2.bf16.msra.mxu0 0
  %2133 = vmatprep.mubr.bf16.mxu0 0
  %2134 = vmatmul.mubr.bf16.gmra.mxu0 %v2099
  %v2135 = vpop.f32.mrf.mxu0
  %v2136 = vadd.f32 0.0, %v2135
  %v2137 = vpop.f32.mrf.mxu0
  %v2138 = vpop.f32.mrf.mxu0
  %v2139 = vpop.f32.mrf.mxu0
  %2140 = vdwg.mxu0
  %v2141 = vadd.f32 %v1293, %v2136
  %v2142 = vtanh.pop %v2141
  %v2145 = vunpack.c.l.s4 1966171168
  %v2146 = vunpack.c.0.s8 %v2145
  %v2147 = vlaneseq
  %v2148 = vshrl.u32 %v2147, 7
  %v2149 = vsub.s32 %v2146, %v2148
  %v2150 = vrot.slane %v2142, %v2149
  %v2151 = vcombine.high %v2150, %v2150
  %v2153 = vunpack.c.l.s4 1966171168
  %v2154 = vunpack.c.0.s8 %v2153
  %v2155 = vlaneseq
  %v2156 = vshrl.u32 %v2155, 7
  %v2157 = vsub.s32 %v2154, %v2156
  %v2158 = vrot.slane %v2150, %v2157
  %v2160 = vunpack.c.l.s4 1966171168
  %v2161 = vunpack.c.0.s8 %v2160
  %v2162 = vlaneseq
  %v2163 = vshrl.u32 %v2162, 7
  %v2164 = vsub.s32 %v2161, %v2163
  %v2165 = vrot.slane %v2151, %v2164
  %v2166 = vcombine.high %v2158, %v2158
  %v2167 = vcombine.high %v2165, %v2165
  %v2168 = vlaneseq
  %v2169 = vshrl.u32 %v2168, 7
  %v2170 = vsub.s32 0, %v2169
  %v2171 = vrot.slane %v2158, %v2170
  %v2172 = vlaneseq
  %v2173 = vshrl.u32 %v2172, 7
  %v2174 = vsub.s32 0, %v2173
  %v2175 = vrot.slane %v2165, %v2174
  %v2176 = vlaneseq
  %v2177 = vshrl.u32 %v2176, 7
  %v2178 = vsub.s32 0, %v2177
  %v2179 = vrot.slane %v2166, %v2178
  %v2180 = vlaneseq
  %v2181 = vshrl.u32 %v2180, 7
  %v2182 = vsub.s32 0, %v2181
  %v2183 = vrot.slane %v2167, %v2182
  %v2188 = vmul.f32 %v1123, %v2171
  %v2189 = vmul.f32 %v1127, %v2175
  %v2190 = vmul.f32 %v1124, %v2179
  %v2191 = vmul.f32 %v1128, %v2183
  %v2192 = vsel %vm1476, %v2188, 0.0
  %2193 = vadd.xlane.f32.xlu0 %v2192
  %v2194 = vpop.xlane.xlu0 %2193
  %v2195 = vsel %vm1476, %v2189, 0.0
  %2196 = vadd.xlane.f32.xlu0 %v2195
  %v2197 = vpop.xlane.xlu0 %2196
  %v2198 = vsel %vm1476, %v2190, 0.0
  %2199 = vadd.xlane.f32.xlu0 %v2198
  %v2200 = vpop.xlane.xlu0 %2199
  %v2201 = vsel %vm1476, %v2191, 0.0
  %2202 = vadd.xlane.f32.xlu0 %v2201
  %v2203 = vpop.xlane.xlu0 %2202
  %v2208 = vlaneseq
  %v2209 = vshrl.u32 %v2208, 7
  %v2210 = vsub.s32 %v1051, %v2209
  %v2211 = vrot.slane %v2194, %v2210
  %v2212 = vlaneseq
  %v2213 = vshrl.u32 %v2212, 7
  %v2214 = vsub.s32 %v1051, %v2213
  %v2215 = vrot.slane %v2197, %v2214
  %v2216 = vlaneseq
  %v2217 = vshrl.u32 %v2216, 7
  %v2218 = vsub.s32 %v1051, %v2217
  %v2219 = vrot.slane %v2200, %v2218
  %v2220 = vlaneseq
  %v2221 = vshrl.u32 %v2220, 7
  %v2222 = vsub.s32 %v1051, %v2221
  %v2223 = vrot.slane %v2203, %v2222
  %v2224 = vsel %vm1509, %v2215, %v2211
  %v2225 = vsel %vm1511, %v2219, %v2224
  %v2226 = vsel %vm1513, %v2223, %v2225
  %v2228 = vsel %vm1516, %v2226, -inf
  %2229 = vmax.xlane.f32.xlu0 %v2228
  %v2230 = vpop.xlane.xlu0 %2229
  %v2232 = vlaneseq
  %v2233 = vshrl.u32 %v2232, 7
  %v2234 = vsub.s32 0, %v2233
  %v2235 = vrot.slane %v2230, %v2234
  %v2236 = vlaneseq
  %v2237 = vshrl.u32 %v2236, 7
  %v2238 = vsub.s32 1, %v2237
  %v2239 = vrot.slane %v2230, %v2238
  %v2240 = vlaneseq
  %v2241 = vshrl.u32 %v2240, 7
  %v2242 = vsub.s32 2, %v2241
  %v2243 = vrot.slane %v2230, %v2242
  %v2244 = vlaneseq
  %v2245 = vshrl.u32 %v2244, 7
  %v2246 = vsub.s32 3, %v2245
  %v2247 = vrot.slane %v2230, %v2246
  %v2252 = vsub.f32 %v2194, %v2235
  %v2253 = vsub.f32 %v2197, %v2239
  %v2254 = vsub.f32 %v2200, %v2243
  %v2255 = vsub.f32 %v2203, %v2247
  %v2256 = vmul.f32 %v2252, 1.442695
  %v2257 = vpow.pop %v2256
  %v2258 = vmul.f32 %v2253, 1.442695
  %v2259 = vpow.pop %v2258
  %v2260 = vmul.f32 %v2254, 1.442695
  %v2261 = vpow.pop %v2260
  %v2262 = vmul.f32 %v2255, 1.442695
  %v2263 = vpow.pop %v2262
  %2268 = vset.pattern.permute.xlu0 0
  %2269 = vperm.xlu0 %2268, %v2257
  %v2270 = vpop.permute.xlu0 %2269
  %2271 = vset.pattern.permute.xlu0 0
  %2272 = vperm.xlu0 %2271, %v2259
  %v2273 = vpop.permute.xlu0 %2272
  %2274 = vset.pattern.permute.xlu0 0
  %2275 = vperm.xlu0 %2274, %v2261
  %v2276 = vpop.permute.xlu0 %2275
  %2277 = vset.pattern.permute.xlu0 0
  %2278 = vperm.xlu0 %2277, %v2263
  %v2279 = vpop.permute.xlu0 %2278
  %v2280 = vlaneseq
  %v2281 = vshrl.u32 %v2280, 7
  %v2282 = vsub.s32 %v1051, %v2281
  %v2283 = vrot.slane %v2270, %v2282
  %v2284 = vlaneseq
  %v2285 = vshrl.u32 %v2284, 7
  %v2286 = vsub.s32 %v1051, %v2285
  %v2287 = vrot.slane %v2273, %v2286
  %v2288 = vlaneseq
  %v2289 = vshrl.u32 %v2288, 7
  %v2290 = vsub.s32 %v1051, %v2289
  %v2291 = vrot.slane %v2276, %v2290
  %v2292 = vlaneseq
  %v2293 = vshrl.u32 %v2292, 7
  %v2294 = vsub.s32 %v1051, %v2293
  %v2295 = vrot.slane %v2279, %v2294
  %v2296 = vsel %vm1509, %v2287, %v2283
  %v2297 = vsel %vm1511, %v2291, %v2296
  %v2298 = vsel %vm1513, %v2295, %v2297
  %v2300 = vsel %vm1516, %v2298, 0.0
  %2301 = vadd.xlane.f32.xlu0 %v2300
  %v2302 = vpop.xlane.xlu0 %2301
  %v2303 = vlog2.pop %v2302
  %v2304 = vmul.f32 %v2303, 0.6931472
  %v2306 = vlaneseq
  %v2307 = vshrl.u32 %v2306, 7
  %v2308 = vsub.s32 0, %v2307
  %v2309 = vrot.slane %v2304, %v2308
  %v2310 = vlaneseq
  %v2311 = vshrl.u32 %v2310, 7
  %v2312 = vsub.s32 1, %v2311
  %v2313 = vrot.slane %v2304, %v2312
  %v2314 = vlaneseq
  %v2315 = vshrl.u32 %v2314, 7
  %v2316 = vsub.s32 2, %v2315
  %v2317 = vrot.slane %v2304, %v2316
  %v2318 = vlaneseq
  %v2319 = vshrl.u32 %v2318, 7
  %v2320 = vsub.s32 3, %v2319
  %v2321 = vrot.slane %v2304, %v2320
  %v2326 = vsub.f32 %v2252, %v2309
  %v2327 = vsub.f32 %v2253, %v2313
  %v2328 = vsub.f32 %v2254, %v2317
  %v2329 = vsub.f32 %v2255, %v2321
  %v2330 = vpack.c.bf16 %v2142, %v2142
  %v2332 = vsel %vm114, %v2330, 0
  %2334 = vmatprep.subr.bf16.mxu0 0
  %2335 = vmatpush1.bf16.msra.mxu0 0
  %2336 = vmatprep.subr.bf16.mxu0 0
  %2337 = vmatpush1.bf16.msra.mxu0 0
  %2338 = vmatprep.subr.bf16.mxu0 0
  %2339 = vmatpush1.bf16.msra.mxu0 0
  %2340 = vmatprep.subr.bf16.mxu0 0
  %2341 = vmatpush1.bf16.msra.mxu0 0
  %2342 = vmatprep.subr.bf16.mxu0 0
  %2343 = vmatpush1.bf16.msra.mxu0 0
  %2344 = vmatprep.subr.bf16.mxu0 0
  %2345 = vmatpush1.bf16.msra.mxu0 0
  %2346 = vmatprep.subr.bf16.mxu0 0
  %2347 = vmatpush1.bf16.msra.mxu0 %v1629
  %2348 = vmatprep.subr.bf16.mxu0 0
  %2349 = vmatpush1.bf16.msra.mxu0 %v1628
  %2350 = vmatprep.subr.bf16.mxu0 0
  %2351 = vmatpush2.bf16.msra.mxu0 0
  %2352 = vmatprep.subr.bf16.mxu0 0
  %2353 = vmatpush2.bf16.msra.mxu0 0
  %2354 = vmatprep.subr.bf16.mxu0 0
  %2355 = vmatpush2.bf16.msra.mxu0 0
  %2356 = vmatprep.subr.bf16.mxu0 0
  %2357 = vmatpush2.bf16.msra.mxu0 0
  %2358 = vmatprep.subr.bf16.mxu0 0
  %2359 = vmatpush2.bf16.msra.mxu0 0
  %2360 = vmatprep.subr.bf16.mxu0 0
  %2361 = vmatpush2.bf16.msra.mxu0 0
  %2362 = vmatprep.subr.bf16.mxu0 0
  %2363 = vmatpush2.bf16.msra.mxu0 0
  %2364 = vmatprep.subr.bf16.mxu0 0
  %2365 = vmatpush2.bf16.msra.mxu0 0
  %2366 = vmatprep.mubr.bf16.mxu0 0
  %2367 = vmatmul.mubr.bf16.gmra.mxu0 %v2332
  %v2368 = vpop.f32.mrf.mxu0
  %v2369 = vadd.f32 0.0, %v2368
  %v2370 = vpop.f32.mrf.mxu0
  %v2371 = vpop.f32.mrf.mxu0
  %v2372 = vpop.f32.mrf.mxu0
  %2373 = vdwg.mxu0
  %v2374 = vadd.f32 %v1333, %v2369
  %v2375 = vtanh.pop %v2374
  %v2378 = vunpack.c.l.s4 1966171168
  %v2379 = vunpack.c.0.s8 %v2378
  %v2380 = vlaneseq
  %v2381 = vshrl.u32 %v2380, 7
  %v2382 = vsub.s32 %v2379, %v2381
  %v2383 = vrot.slane %v2375, %v2382
  %v2384 = vcombine.high %v2383, %v2383
  %v2386 = vunpack.c.l.s4 1966171168
  %v2387 = vunpack.c.0.s8 %v2386
  %v2388 = vlaneseq
  %v2389 = vshrl.u32 %v2388, 7
  %v2390 = vsub.s32 %v2387, %v2389
  %v2391 = vrot.slane %v2383, %v2390
  %v2393 = vunpack.c.l.s4 1966171168
  %v2394 = vunpack.c.0.s8 %v2393
  %v2395 = vlaneseq
  %v2396 = vshrl.u32 %v2395, 7
  %v2397 = vsub.s32 %v2394, %v2396
  %v2398 = vrot.slane %v2384, %v2397
  %v2399 = vcombine.high %v2391, %v2391
  %v2400 = vcombine.high %v2398, %v2398
  %v2401 = vlaneseq
  %v2402 = vshrl.u32 %v2401, 7
  %v2403 = vsub.s32 0, %v2402
  %v2404 = vrot.slane %v2391, %v2403
  %v2405 = vlaneseq
  %v2406 = vshrl.u32 %v2405, 7
  %v2407 = vsub.s32 0, %v2406
  %v2408 = vrot.slane %v2398, %v2407
  %v2409 = vlaneseq
  %v2410 = vshrl.u32 %v2409, 7
  %v2411 = vsub.s32 0, %v2410
  %v2412 = vrot.slane %v2399, %v2411
  %v2413 = vlaneseq
  %v2414 = vshrl.u32 %v2413, 7
  %v2415 = vsub.s32 0, %v2414
  %v2416 = vrot.slane %v2400, %v2415
  %v2421 = vmul.f32 %v1123, %v2404
  %v2422 = vmul.f32 %v1127, %v2408
  %v2423 = vmul.f32 %v1124, %v2412
  %v2424 = vmul.f32 %v1128, %v2416
  %v2425 = vsel %vm1476, %v2421, 0.0
  %2426 = vadd.xlane.f32.xlu0 %v2425
  %v2427 = vpop.xlane.xlu0 %2426
  %v2428 = vsel %vm1476, %v2422, 0.0
  %2429 = vadd.xlane.f32.xlu0 %v2428
  %v2430 = vpop.xlane.xlu0 %2429
  %v2431 = vsel %vm1476, %v2423, 0.0
  %2432 = vadd.xlane.f32.xlu0 %v2431
  %v2433 = vpop.xlane.xlu0 %2432
  %v2434 = vsel %vm1476, %v2424, 0.0
  %2435 = vadd.xlane.f32.xlu0 %v2434
  %v2436 = vpop.xlane.xlu0 %2435
  %v2441 = vlaneseq
  %v2442 = vshrl.u32 %v2441, 7
  %v2443 = vsub.s32 %v1051, %v2442
  %v2444 = vrot.slane %v2427, %v2443
  %v2445 = vlaneseq
  %v2446 = vshrl.u32 %v2445, 7
  %v2447 = vsub.s32 %v1051, %v2446
  %v2448 = vrot.slane %v2430, %v2447
  %v2449 = vlaneseq
  %v2450 = vshrl.u32 %v2449, 7
  %v2451 = vsub.s32 %v1051, %v2450
  %v2452 = vrot.slane %v2433, %v2451
  %v2453 = vlaneseq
  %v2454 = vshrl.u32 %v2453, 7
  %v2455 = vsub.s32 %v1051, %v2454
  %v2456 = vrot.slane %v2436, %v2455
  %v2457 = vsel %vm1509, %v2448, %v2444
  %v2458 = vsel %vm1511, %v2452, %v2457
  %v2459 = vsel %vm1513, %v2456, %v2458
  %v2461 = vsel %vm1516, %v2459, -inf
  %2462 = vmax.xlane.f32.xlu0 %v2461
  %v2463 = vpop.xlane.xlu0 %2462
  %v2465 = vlaneseq
  %v2466 = vshrl.u32 %v2465, 7
  %v2467 = vsub.s32 0, %v2466
  %v2468 = vrot.slane %v2463, %v2467
  %v2469 = vlaneseq
  %v2470 = vshrl.u32 %v2469, 7
  %v2471 = vsub.s32 1, %v2470
  %v2472 = vrot.slane %v2463, %v2471
  %v2473 = vlaneseq
  %v2474 = vshrl.u32 %v2473, 7
  %v2475 = vsub.s32 2, %v2474
  %v2476 = vrot.slane %v2463, %v2475
  %v2477 = vlaneseq
  %v2478 = vshrl.u32 %v2477, 7
  %v2479 = vsub.s32 3, %v2478
  %v2480 = vrot.slane %v2463, %v2479
  %v2485 = vsub.f32 %v2427, %v2468
  %v2486 = vsub.f32 %v2430, %v2472
  %v2487 = vsub.f32 %v2433, %v2476
  %v2488 = vsub.f32 %v2436, %v2480
  %v2489 = vmul.f32 %v2485, 1.442695
  %v2490 = vpow.pop %v2489
  %v2491 = vmul.f32 %v2486, 1.442695
  %v2492 = vpow.pop %v2491
  %v2493 = vmul.f32 %v2487, 1.442695
  %v2494 = vpow.pop %v2493
  %v2495 = vmul.f32 %v2488, 1.442695
  %v2496 = vpow.pop %v2495
  %2501 = vset.pattern.permute.xlu0 0
  %2502 = vperm.xlu0 %2501, %v2490
  %v2503 = vpop.permute.xlu0 %2502
  %2504 = vset.pattern.permute.xlu0 0
  %2505 = vperm.xlu0 %2504, %v2492
  %v2506 = vpop.permute.xlu0 %2505
  %2507 = vset.pattern.permute.xlu0 0
  %2508 = vperm.xlu0 %2507, %v2494
  %v2509 = vpop.permute.xlu0 %2508
  %2510 = vset.pattern.permute.xlu0 0
  %2511 = vperm.xlu0 %2510, %v2496
  %v2512 = vpop.permute.xlu0 %2511
  %v2513 = vlaneseq
  %v2514 = vshrl.u32 %v2513, 7
  %v2515 = vsub.s32 %v1051, %v2514
  %v2516 = vrot.slane %v2503, %v2515
  %v2517 = vlaneseq
  %v2518 = vshrl.u32 %v2517, 7
  %v2519 = vsub.s32 %v1051, %v2518
  %v2520 = vrot.slane %v2506, %v2519
  %v2521 = vlaneseq
  %v2522 = vshrl.u32 %v2521, 7
  %v2523 = vsub.s32 %v1051, %v2522
  %v2524 = vrot.slane %v2509, %v2523
  %v2525 = vlaneseq
  %v2526 = vshrl.u32 %v2525, 7
  %v2527 = vsub.s32 %v1051, %v2526
  %v2528 = vrot.slane %v2512, %v2527
  %v2529 = vsel %vm1509, %v2520, %v2516
  %v2530 = vsel %vm1511, %v2524, %v2529
  %v2531 = vsel %vm1513, %v2528, %v2530
  %v2533 = vsel %vm1516, %v2531, 0.0
  %2534 = vadd.xlane.f32.xlu0 %v2533
  %v2535 = vpop.xlane.xlu0 %2534
  %v2536 = vlog2.pop %v2535
  %v2537 = vmul.f32 %v2536, 0.6931472
  %v2539 = vlaneseq
  %v2540 = vshrl.u32 %v2539, 7
  %v2541 = vsub.s32 0, %v2540
  %v2542 = vrot.slane %v2537, %v2541
  %v2543 = vlaneseq
  %v2544 = vshrl.u32 %v2543, 7
  %v2545 = vsub.s32 1, %v2544
  %v2546 = vrot.slane %v2537, %v2545
  %v2547 = vlaneseq
  %v2548 = vshrl.u32 %v2547, 7
  %v2549 = vsub.s32 2, %v2548
  %v2550 = vrot.slane %v2537, %v2549
  %v2551 = vlaneseq
  %v2552 = vshrl.u32 %v2551, 7
  %v2553 = vsub.s32 3, %v2552
  %v2554 = vrot.slane %v2537, %v2553
  %v2559 = vsub.f32 %v2485, %v2542
  %v2560 = vsub.f32 %v2486, %v2546
  %v2561 = vsub.f32 %v2487, %v2550
  %v2562 = vsub.f32 %v2488, %v2554
  %v2563 = vpack.c.bf16 %v2375, %v2375
  %v2565 = vsel %vm114, %v2563, 0
  %2567 = vmatprep.subr.bf16.mxu0 0
  %2568 = vmatpush1.bf16.msra.mxu0 0
  %2569 = vmatprep.subr.bf16.mxu0 0
  %2570 = vmatpush1.bf16.msra.mxu0 0
  %2571 = vmatprep.subr.bf16.mxu0 0
  %2572 = vmatpush1.bf16.msra.mxu0 0
  %2573 = vmatprep.subr.bf16.mxu0 0
  %2574 = vmatpush1.bf16.msra.mxu0 0
  %2575 = vmatprep.subr.bf16.mxu0 0
  %2576 = vmatpush1.bf16.msra.mxu0 0
  %2577 = vmatprep.subr.bf16.mxu0 0
  %2578 = vmatpush1.bf16.msra.mxu0 0
  %2579 = vmatprep.subr.bf16.mxu0 0
  %2580 = vmatpush1.bf16.msra.mxu0 %v1629
  %2581 = vmatprep.subr.bf16.mxu0 0
  %2582 = vmatpush1.bf16.msra.mxu0 %v1628
  %2583 = vmatprep.subr.bf16.mxu0 0
  %2584 = vmatpush2.bf16.msra.mxu0 0
  %2585 = vmatprep.subr.bf16.mxu0 0
  %2586 = vmatpush2.bf16.msra.mxu0 0
  %2587 = vmatprep.subr.bf16.mxu0 0
  %2588 = vmatpush2.bf16.msra.mxu0 0
  %2589 = vmatprep.subr.bf16.mxu0 0
  %2590 = vmatpush2.bf16.msra.mxu0 0
  %2591 = vmatprep.subr.bf16.mxu0 0
  %2592 = vmatpush2.bf16.msra.mxu0 0
  %2593 = vmatprep.subr.bf16.mxu0 0
  %2594 = vmatpush2.bf16.msra.mxu0 0
  %2595 = vmatprep.subr.bf16.mxu0 0
  %2596 = vmatpush2.bf16.msra.mxu0 0
  %2597 = vmatprep.subr.bf16.mxu0 0
  %2598 = vmatpush2.bf16.msra.mxu0 0
  %2599 = vmatprep.mubr.bf16.mxu0 0
  %2600 = vmatmul.mubr.bf16.gmra.mxu0 %v2565
  %v2601 = vpop.f32.mrf.mxu0
  %v2602 = vadd.f32 0.0, %v2601
  %v2603 = vpop.f32.mrf.mxu0
  %v2604 = vpop.f32.mrf.mxu0
  %v2605 = vpop.f32.mrf.mxu0
  %2606 = vdwg.mxu0
  %v2607 = vadd.f32 %v1377, %v2602
  %v2608 = vtanh.pop %v2607
  %v2611 = vunpack.c.l.s4 1966171168
  %v2612 = vunpack.c.0.s8 %v2611
  %v2613 = vlaneseq
  %v2614 = vshrl.u32 %v2613, 7
  %v2615 = vsub.s32 %v2612, %v2614
  %v2616 = vrot.slane %v2608, %v2615
  %v2617 = vcombine.high %v2616, %v2616
  %v2619 = vunpack.c.l.s4 1966171168
  %v2620 = vunpack.c.0.s8 %v2619
  %v2621 = vlaneseq
  %v2622 = vshrl.u32 %v2621, 7
  %v2623 = vsub.s32 %v2620, %v2622
  %v2624 = vrot.slane %v2616, %v2623
  %v2626 = vunpack.c.l.s4 1966171168
  %v2627 = vunpack.c.0.s8 %v2626
  %v2628 = vlaneseq
  %v2629 = vshrl.u32 %v2628, 7
  %v2630 = vsub.s32 %v2627, %v2629
  %v2631 = vrot.slane %v2617, %v2630
  %v2632 = vcombine.high %v2624, %v2624
  %v2633 = vcombine.high %v2631, %v2631
  %v2634 = vlaneseq
  %v2635 = vshrl.u32 %v2634, 7
  %v2636 = vsub.s32 0, %v2635
  %v2637 = vrot.slane %v2624, %v2636
  %v2638 = vlaneseq
  %v2639 = vshrl.u32 %v2638, 7
  %v2640 = vsub.s32 0, %v2639
  %v2641 = vrot.slane %v2631, %v2640
  %v2642 = vlaneseq
  %v2643 = vshrl.u32 %v2642, 7
  %v2644 = vsub.s32 0, %v2643
  %v2645 = vrot.slane %v2632, %v2644
  %v2646 = vlaneseq
  %v2647 = vshrl.u32 %v2646, 7
  %v2648 = vsub.s32 0, %v2647
  %v2649 = vrot.slane %v2633, %v2648
  %v2654 = vmul.f32 %v1123, %v2637
  %v2655 = vmul.f32 %v1127, %v2641
  %v2656 = vmul.f32 %v1124, %v2645
  %v2657 = vmul.f32 %v1128, %v2649
  %v2658 = vsel %vm1476, %v2654, 0.0
  %2659 = vadd.xlane.f32.xlu0 %v2658
  %v2660 = vpop.xlane.xlu0 %2659
  %v2661 = vsel %vm1476, %v2655, 0.0
  %2662 = vadd.xlane.f32.xlu0 %v2661
  %v2663 = vpop.xlane.xlu0 %2662
  %v2664 = vsel %vm1476, %v2656, 0.0
  %2665 = vadd.xlane.f32.xlu0 %v2664
  %v2666 = vpop.xlane.xlu0 %2665
  %v2667 = vsel %vm1476, %v2657, 0.0
  %2668 = vadd.xlane.f32.xlu0 %v2667
  %v2669 = vpop.xlane.xlu0 %2668
  %v2674 = vlaneseq
  %v2675 = vshrl.u32 %v2674, 7
  %v2676 = vsub.s32 %v1051, %v2675
  %v2677 = vrot.slane %v2660, %v2676
  %v2678 = vlaneseq
  %v2679 = vshrl.u32 %v2678, 7
  %v2680 = vsub.s32 %v1051, %v2679
  %v2681 = vrot.slane %v2663, %v2680
  %v2682 = vlaneseq
  %v2683 = vshrl.u32 %v2682, 7
  %v2684 = vsub.s32 %v1051, %v2683
  %v2685 = vrot.slane %v2666, %v2684
  %v2686 = vlaneseq
  %v2687 = vshrl.u32 %v2686, 7
  %v2688 = vsub.s32 %v1051, %v2687
  %v2689 = vrot.slane %v2669, %v2688
  %v2690 = vsel %vm1509, %v2681, %v2677
  %v2691 = vsel %vm1511, %v2685, %v2690
  %v2692 = vsel %vm1513, %v2689, %v2691
  %v2694 = vsel %vm1516, %v2692, -inf
  %2695 = vmax.xlane.f32.xlu0 %v2694
  %v2696 = vpop.xlane.xlu0 %2695
  %v2698 = vlaneseq
  %v2699 = vshrl.u32 %v2698, 7
  %v2700 = vsub.s32 0, %v2699
  %v2701 = vrot.slane %v2696, %v2700
  %v2702 = vlaneseq
  %v2703 = vshrl.u32 %v2702, 7
  %v2704 = vsub.s32 1, %v2703
  %v2705 = vrot.slane %v2696, %v2704
  %v2706 = vlaneseq
  %v2707 = vshrl.u32 %v2706, 7
  %v2708 = vsub.s32 2, %v2707
  %v2709 = vrot.slane %v2696, %v2708
  %v2710 = vlaneseq
  %v2711 = vshrl.u32 %v2710, 7
  %v2712 = vsub.s32 3, %v2711
  %v2713 = vrot.slane %v2696, %v2712
  %v2718 = vsub.f32 %v2660, %v2701
  %v2719 = vsub.f32 %v2663, %v2705
  %v2720 = vsub.f32 %v2666, %v2709
  %v2721 = vsub.f32 %v2669, %v2713
  %v2722 = vmul.f32 %v2718, 1.442695
  %v2723 = vpow.pop %v2722
  %v2724 = vmul.f32 %v2719, 1.442695
  %v2725 = vpow.pop %v2724
  %v2726 = vmul.f32 %v2720, 1.442695
  %v2727 = vpow.pop %v2726
  %v2728 = vmul.f32 %v2721, 1.442695
  %v2729 = vpow.pop %v2728
  %2734 = vset.pattern.permute.xlu0 0
  %2735 = vperm.xlu0 %2734, %v2723
  %v2736 = vpop.permute.xlu0 %2735
  %2737 = vset.pattern.permute.xlu0 0
  %2738 = vperm.xlu0 %2737, %v2725
  %v2739 = vpop.permute.xlu0 %2738
  %2740 = vset.pattern.permute.xlu0 0
  %2741 = vperm.xlu0 %2740, %v2727
  %v2742 = vpop.permute.xlu0 %2741
  %2743 = vset.pattern.permute.xlu0 0
  %2744 = vperm.xlu0 %2743, %v2729
  %v2745 = vpop.permute.xlu0 %2744
  %v2746 = vlaneseq
  %v2747 = vshrl.u32 %v2746, 7
  %v2748 = vsub.s32 %v1051, %v2747
  %v2749 = vrot.slane %v2736, %v2748
  %v2750 = vlaneseq
  %v2751 = vshrl.u32 %v2750, 7
  %v2752 = vsub.s32 %v1051, %v2751
  %v2753 = vrot.slane %v2739, %v2752
  %v2754 = vlaneseq
  %v2755 = vshrl.u32 %v2754, 7
  %v2756 = vsub.s32 %v1051, %v2755
  %v2757 = vrot.slane %v2742, %v2756
  %v2758 = vlaneseq
  %v2759 = vshrl.u32 %v2758, 7
  %v2760 = vsub.s32 %v1051, %v2759
  %v2761 = vrot.slane %v2745, %v2760
  %v2762 = vsel %vm1509, %v2753, %v2749
  %v2763 = vsel %vm1511, %v2757, %v2762
  %v2764 = vsel %vm1513, %v2761, %v2763
  %v2766 = vsel %vm1516, %v2764, 0.0
  %2767 = vadd.xlane.f32.xlu0 %v2766
  %v2768 = vpop.xlane.xlu0 %2767
  %v2769 = vlog2.pop %v2768
  %v2770 = vmul.f32 %v2769, 0.6931472
  %v2772 = vlaneseq
  %v2773 = vshrl.u32 %v2772, 7
  %v2774 = vsub.s32 0, %v2773
  %v2775 = vrot.slane %v2770, %v2774
  %v2776 = vlaneseq
  %v2777 = vshrl.u32 %v2776, 7
  %v2778 = vsub.s32 1, %v2777
  %v2779 = vrot.slane %v2770, %v2778
  %v2780 = vlaneseq
  %v2781 = vshrl.u32 %v2780, 7
  %v2782 = vsub.s32 2, %v2781
  %v2783 = vrot.slane %v2770, %v2782
  %v2784 = vlaneseq
  %v2785 = vshrl.u32 %v2784, 7
  %v2786 = vsub.s32 3, %v2785
  %v2787 = vrot.slane %v2770, %v2786
  %v2792 = vsub.f32 %v2718, %v2775
  %v2793 = vsub.f32 %v2719, %v2779
  %v2794 = vsub.f32 %v2720, %v2783
  %v2795 = vsub.f32 %v2721, %v2787
  %v2796 = vpack.c.bf16 %v2608, %v2608
  %v2798 = vsel %vm114, %v2796, 0
  %2800 = vmatprep.subr.bf16.mxu0 0
  %2801 = vmatpush1.bf16.msra.mxu0 0
  %2802 = vmatprep.subr.bf16.mxu0 0
  %2803 = vmatpush1.bf16.msra.mxu0 0
  %2804 = vmatprep.subr.bf16.mxu0 0
  %2805 = vmatpush1.bf16.msra.mxu0 0
  %2806 = vmatprep.subr.bf16.mxu0 0
  %2807 = vmatpush1.bf16.msra.mxu0 0
  %2808 = vmatprep.subr.bf16.mxu0 0
  %2809 = vmatpush1.bf16.msra.mxu0 0
  %2810 = vmatprep.subr.bf16.mxu0 0
  %2811 = vmatpush1.bf16.msra.mxu0 0
  %2812 = vmatprep.subr.bf16.mxu0 0
  %2813 = vmatpush1.bf16.msra.mxu0 %v1629
  %2814 = vmatprep.subr.bf16.mxu0 0
  %2815 = vmatpush1.bf16.msra.mxu0 %v1628
  %2816 = vmatprep.subr.bf16.mxu0 0
  %2817 = vmatpush2.bf16.msra.mxu0 0
  %2818 = vmatprep.subr.bf16.mxu0 0
  %2819 = vmatpush2.bf16.msra.mxu0 0
  %2820 = vmatprep.subr.bf16.mxu0 0
  %2821 = vmatpush2.bf16.msra.mxu0 0
  %2822 = vmatprep.subr.bf16.mxu0 0
  %2823 = vmatpush2.bf16.msra.mxu0 0
  %2824 = vmatprep.subr.bf16.mxu0 0
  %2825 = vmatpush2.bf16.msra.mxu0 0
  %2826 = vmatprep.subr.bf16.mxu0 0
  %2827 = vmatpush2.bf16.msra.mxu0 0
  %2828 = vmatprep.subr.bf16.mxu0 0
  %2829 = vmatpush2.bf16.msra.mxu0 0
  %2830 = vmatprep.subr.bf16.mxu0 0
  %2831 = vmatpush2.bf16.msra.mxu0 0
  %2832 = vmatprep.mubr.bf16.mxu0 0
  %2833 = vmatmul.mubr.bf16.gmra.mxu0 %v2798
  %v2834 = vpop.f32.mrf.mxu0
  %v2835 = vadd.f32 0.0, %v2834
  %v2836 = vpop.f32.mrf.mxu0
  %v2837 = vpop.f32.mrf.mxu0
  %v2838 = vpop.f32.mrf.mxu0
  %2839 = vdwg.mxu0
  %v2840 = vadd.f32 %v1421, %v2835
  %v2841 = vtanh.pop %v2840
  %v2844 = vunpack.c.l.s4 1966171168
  %v2845 = vunpack.c.0.s8 %v2844
  %v2846 = vlaneseq
  %v2847 = vshrl.u32 %v2846, 7
  %v2848 = vsub.s32 %v2845, %v2847
  %v2849 = vrot.slane %v2841, %v2848
  %v2850 = vcombine.high %v2849, %v2849
  %v2852 = vunpack.c.l.s4 1966171168
  %v2853 = vunpack.c.0.s8 %v2852
  %v2854 = vlaneseq
  %v2855 = vshrl.u32 %v2854, 7
  %v2856 = vsub.s32 %v2853, %v2855
  %v2857 = vrot.slane %v2849, %v2856
  %v2859 = vunpack.c.l.s4 1966171168
  %v2860 = vunpack.c.0.s8 %v2859
  %v2861 = vlaneseq
  %v2862 = vshrl.u32 %v2861, 7
  %v2863 = vsub.s32 %v2860, %v2862
  %v2864 = vrot.slane %v2850, %v2863
  %v2865 = vcombine.high %v2857, %v2857
  %v2866 = vcombine.high %v2864, %v2864
  %v2867 = vlaneseq
  %v2868 = vshrl.u32 %v2867, 7
  %v2869 = vsub.s32 0, %v2868
  %v2870 = vrot.slane %v2857, %v2869
  %v2871 = vlaneseq
  %v2872 = vshrl.u32 %v2871, 7
  %v2873 = vsub.s32 0, %v2872
  %v2874 = vrot.slane %v2864, %v2873
  %v2875 = vlaneseq
  %v2876 = vshrl.u32 %v2875, 7
  %v2877 = vsub.s32 0, %v2876
  %v2878 = vrot.slane %v2865, %v2877
  %v2879 = vlaneseq
  %v2880 = vshrl.u32 %v2879, 7
  %v2881 = vsub.s32 0, %v2880
  %v2882 = vrot.slane %v2866, %v2881
  %v2887 = vmul.f32 %v1123, %v2870
  %v2888 = vmul.f32 %v1127, %v2874
  %v2889 = vmul.f32 %v1124, %v2878
  %v2890 = vmul.f32 %v1128, %v2882
  %v2891 = vsel %vm1476, %v2887, 0.0
  %2892 = vadd.xlane.f32.xlu0 %v2891
  %v2893 = vpop.xlane.xlu0 %2892
  %v2894 = vsel %vm1476, %v2888, 0.0
  %2895 = vadd.xlane.f32.xlu0 %v2894
  %v2896 = vpop.xlane.xlu0 %2895
  %v2897 = vsel %vm1476, %v2889, 0.0
  %2898 = vadd.xlane.f32.xlu0 %v2897
  %v2899 = vpop.xlane.xlu0 %2898
  %v2900 = vsel %vm1476, %v2890, 0.0
  %2901 = vadd.xlane.f32.xlu0 %v2900
  %v2902 = vpop.xlane.xlu0 %2901
  %v2907 = vlaneseq
  %v2908 = vshrl.u32 %v2907, 7
  %v2909 = vsub.s32 %v1051, %v2908
  %v2910 = vrot.slane %v2893, %v2909
  %v2911 = vlaneseq
  %v2912 = vshrl.u32 %v2911, 7
  %v2913 = vsub.s32 %v1051, %v2912
  %v2914 = vrot.slane %v2896, %v2913
  %v2915 = vlaneseq
  %v2916 = vshrl.u32 %v2915, 7
  %v2917 = vsub.s32 %v1051, %v2916
  %v2918 = vrot.slane %v2899, %v2917
  %v2919 = vlaneseq
  %v2920 = vshrl.u32 %v2919, 7
  %v2921 = vsub.s32 %v1051, %v2920
  %v2922 = vrot.slane %v2902, %v2921
  %v2923 = vsel %vm1509, %v2914, %v2910
  %v2924 = vsel %vm1511, %v2918, %v2923
  %v2925 = vsel %vm1513, %v2922, %v2924
  %v2927 = vsel %vm1516, %v2925, -inf
  %2928 = vmax.xlane.f32.xlu0 %v2927
  %v2929 = vpop.xlane.xlu0 %2928
  %v2931 = vlaneseq
  %v2932 = vshrl.u32 %v2931, 7
  %v2933 = vsub.s32 0, %v2932
  %v2934 = vrot.slane %v2929, %v2933
  %v2935 = vlaneseq
  %v2936 = vshrl.u32 %v2935, 7
  %v2937 = vsub.s32 1, %v2936
  %v2938 = vrot.slane %v2929, %v2937
  %v2939 = vlaneseq
  %v2940 = vshrl.u32 %v2939, 7
  %v2941 = vsub.s32 2, %v2940
  %v2942 = vrot.slane %v2929, %v2941
  %v2943 = vlaneseq
  %v2944 = vshrl.u32 %v2943, 7
  %v2945 = vsub.s32 3, %v2944
  %v2946 = vrot.slane %v2929, %v2945
  %v2951 = vsub.f32 %v2893, %v2934
  %v2952 = vsub.f32 %v2896, %v2938
  %v2953 = vsub.f32 %v2899, %v2942
  %v2954 = vsub.f32 %v2902, %v2946
  %v2955 = vmul.f32 %v2951, 1.442695
  %v2956 = vpow.pop %v2955
  %v2957 = vmul.f32 %v2952, 1.442695
  %v2958 = vpow.pop %v2957
  %v2959 = vmul.f32 %v2953, 1.442695
  %v2960 = vpow.pop %v2959
  %v2961 = vmul.f32 %v2954, 1.442695
  %v2962 = vpow.pop %v2961
  %2967 = vset.pattern.permute.xlu0 0
  %2968 = vperm.xlu0 %2967, %v2956
  %v2969 = vpop.permute.xlu0 %2968
  %2970 = vset.pattern.permute.xlu0 0
  %2971 = vperm.xlu0 %2970, %v2958
  %v2972 = vpop.permute.xlu0 %2971
  %2973 = vset.pattern.permute.xlu0 0
  %2974 = vperm.xlu0 %2973, %v2960
  %v2975 = vpop.permute.xlu0 %2974
  %2976 = vset.pattern.permute.xlu0 0
  %2977 = vperm.xlu0 %2976, %v2962
  %v2978 = vpop.permute.xlu0 %2977
  %v2979 = vlaneseq
  %v2980 = vshrl.u32 %v2979, 7
  %v2981 = vsub.s32 %v1051, %v2980
  %v2982 = vrot.slane %v2969, %v2981
  %v2983 = vlaneseq
  %v2984 = vshrl.u32 %v2983, 7
  %v2985 = vsub.s32 %v1051, %v2984
  %v2986 = vrot.slane %v2972, %v2985
  %v2987 = vlaneseq
  %v2988 = vshrl.u32 %v2987, 7
  %v2989 = vsub.s32 %v1051, %v2988
  %v2990 = vrot.slane %v2975, %v2989
  %v2991 = vlaneseq
  %v2992 = vshrl.u32 %v2991, 7
  %v2993 = vsub.s32 %v1051, %v2992
  %v2994 = vrot.slane %v2978, %v2993
  %v2995 = vsel %vm1509, %v2986, %v2982
  %v2996 = vsel %vm1511, %v2990, %v2995
  %v2997 = vsel %vm1513, %v2994, %v2996
  %v2999 = vsel %vm1516, %v2997, 0.0
  %3000 = vadd.xlane.f32.xlu0 %v2999
  %v3001 = vpop.xlane.xlu0 %3000
  %v3002 = vlog2.pop %v3001
  %v3003 = vmul.f32 %v3002, 0.6931472
  %v3005 = vlaneseq
  %v3006 = vshrl.u32 %v3005, 7
  %v3007 = vsub.s32 0, %v3006
  %v3008 = vrot.slane %v3003, %v3007
  %v3009 = vlaneseq
  %v3010 = vshrl.u32 %v3009, 7
  %v3011 = vsub.s32 1, %v3010
  %v3012 = vrot.slane %v3003, %v3011
  %v3013 = vlaneseq
  %v3014 = vshrl.u32 %v3013, 7
  %v3015 = vsub.s32 2, %v3014
  %v3016 = vrot.slane %v3003, %v3015
  %v3017 = vlaneseq
  %v3018 = vshrl.u32 %v3017, 7
  %v3019 = vsub.s32 3, %v3018
  %v3020 = vrot.slane %v3003, %v3019
  %v3025 = vsub.f32 %v2951, %v3008
  %v3026 = vsub.f32 %v2952, %v3012
  %v3027 = vsub.f32 %v2953, %v3016
  %v3028 = vsub.f32 %v2954, %v3020
  %v3029 = vld [vmem:[%s2] sm:$0xf]
  %3030 = vset.pattern.permute.xlu0 0
  %3031 = vperm.xlu0 %3030, %v3029
  %v3032 = vpop.permute.xlu0 %3031
  %vm3033 = vcmp.eq.s32.totalorder %v1051, %v3032
  %v3034 = vsel %vm3033, 1, 0
  %v3035 = vcvt.s32.f32 %v3034
  %v3036 = vlaneseq
  %v3037 = vshrl.u32 %v3036, 7
  %v3038 = vsub.s32 0, %v3037
  %v3039 = vrot.slane %v3035, %v3038
  %3041 = vbcast.lane.b32.xlu0 %v3039, 256
  %v3042 = vpop.permute.xlu0 %3041
  %v3043 = vlaneseq
  %v3044 = vshrl.u32 %v3043, 7
  %v3045 = vsub.s32 1, %v3044
  %v3046 = vrot.slane %v3035, %v3045
  %3048 = vbcast.lane.b32.xlu0 %v3046, 256
  %v3049 = vpop.permute.xlu0 %3048
  %v3050 = vlaneseq
  %v3051 = vshrl.u32 %v3050, 7
  %v3052 = vsub.s32 2, %v3051
  %v3053 = vrot.slane %v3035, %v3052
  %3055 = vbcast.lane.b32.xlu0 %v3053, 256
  %v3056 = vpop.permute.xlu0 %3055
  %v3057 = vlaneseq
  %v3058 = vshrl.u32 %v3057, 7
  %v3059 = vsub.s32 3, %v3058
  %v3060 = vrot.slane %v3035, %v3059
  %3062 = vbcast.lane.b32.xlu0 %v3060, 256
  %v3063 = vpop.permute.xlu0 %3062
  %v3064 = vmul.f32 %v3042, %v1056
  %v3065 = vmul.f32 %v3049, %v1057
  %v3066 = vmul.f32 %v3056, %v1058
  %v3067 = vmul.f32 %v3063, %v1059
  %vm3068 = vcmask 125952
  %v3069 = vsel %vm3068, %v3064, 0.0
  %v3070 = vrot.slane %v3069, 4
  %v3071 = vadd.f32 %v3069, %v3070
  %v3072 = vrot.slane %v3071, 2
  %v3073 = vadd.f32 %v3071, %v3072
  %v3074 = vrot.slane %v3073, 1
  %v3075 = vadd.f32 %v3073, %v3074
  %v3076 = vsel %vm3068, %v3065, 0.0
  %v3077 = vrot.slane %v3076, 4
  %v3078 = vadd.f32 %v3076, %v3077
  %v3079 = vrot.slane %v3078, 2
  %v3080 = vadd.f32 %v3078, %v3079
  %v3081 = vrot.slane %v3080, 1
  %v3082 = vadd.f32 %v3080, %v3081
  %v3083 = vsel %vm3068, %v3066, 0.0
  %v3084 = vrot.slane %v3083, 4
  %v3085 = vadd.f32 %v3083, %v3084
  %v3086 = vrot.slane %v3085, 2
  %v3087 = vadd.f32 %v3085, %v3086
  %v3088 = vrot.slane %v3087, 1
  %v3089 = vadd.f32 %v3087, %v3088
  %v3090 = vsel %vm3068, %v3067, 0.0
  %v3091 = vrot.slane %v3090, 4
  %v3092 = vadd.f32 %v3090, %v3091
  %v3093 = vrot.slane %v3092, 2
  %v3094 = vadd.f32 %v3092, %v3093
  %v3095 = vrot.slane %v3094, 1
  %v3096 = vadd.f32 %v3094, %v3095
  %3101 = vset.pattern.permute.xlu0 0
  %3102 = vperm.xlu0 %3101, %v1615
  %v3103 = vpop.permute.xlu0 %3102
  %3104 = vset.pattern.permute.xlu0 0
  %3105 = vperm.xlu0 %3104, %v1616
  %v3106 = vpop.permute.xlu0 %3105
  %3107 = vset.pattern.permute.xlu0 0
  %3108 = vperm.xlu0 %3107, %v1617
  %v3109 = vpop.permute.xlu0 %3108
  %3110 = vset.pattern.permute.xlu0 0
  %3111 = vperm.xlu0 %3110, %v1618
  %v3112 = vpop.permute.xlu0 %3111
  %v3113 = vlaneseq
  %v3114 = vshrl.u32 %v3113, 7
  %v3115 = vsub.s32 %v1051, %v3114
  %v3116 = vrot.slane %v3103, %v3115
  %v3117 = vlaneseq
  %v3118 = vshrl.u32 %v3117, 7
  %v3119 = vsub.s32 %v1051, %v3118
  %v3120 = vrot.slane %v3106, %v3119
  %v3121 = vlaneseq
  %v3122 = vshrl.u32 %v3121, 7
  %v3123 = vsub.s32 %v1051, %v3122
  %v3124 = vrot.slane %v3109, %v3123
  %v3125 = vlaneseq
  %v3126 = vshrl.u32 %v3125, 7
  %v3127 = vsub.s32 %v1051, %v3126
  %v3128 = vrot.slane %v3112, %v3127
  %3137 = vset.pattern.permute.xlu0 0
  %3138 = vperm.xlu0 %3137, %v1860
  %v3139 = vpop.permute.xlu0 %3138
  %3140 = vset.pattern.permute.xlu0 0
  %3141 = vperm.xlu0 %3140, %v1861
  %v3142 = vpop.permute.xlu0 %3141
  %3143 = vset.pattern.permute.xlu0 0
  %3144 = vperm.xlu0 %3143, %v1862
  %v3145 = vpop.permute.xlu0 %3144
  %3146 = vset.pattern.permute.xlu0 0
  %3147 = vperm.xlu0 %3146, %v1863
  %v3148 = vpop.permute.xlu0 %3147
  %v3149 = vlaneseq
  %v3150 = vshrl.u32 %v3149, 7
  %v3151 = vsub.s32 %v1051, %v3150
  %v3152 = vrot.slane %v3139, %v3151
  %v3153 = vlaneseq
  %v3154 = vshrl.u32 %v3153, 7
  %v3155 = vsub.s32 %v1051, %v3154
  %v3156 = vrot.slane %v3142, %v3155
  %v3157 = vlaneseq
  %v3158 = vshrl.u32 %v3157, 7
  %v3159 = vsub.s32 %v1051, %v3158
  %v3160 = vrot.slane %v3145, %v3159
  %v3161 = vlaneseq
  %v3162 = vshrl.u32 %v3161, 7
  %v3163 = vsub.s32 %v1051, %v3162
  %v3164 = vrot.slane %v3148, %v3163
  %3173 = vset.pattern.permute.xlu0 0
  %3174 = vperm.xlu0 %3173, %v2093
  %v3175 = vpop.permute.xlu0 %3174
  %3176 = vset.pattern.permute.xlu0 0
  %3177 = vperm.xlu0 %3176, %v2094
  %v3178 = vpop.permute.xlu0 %3177
  %3179 = vset.pattern.permute.xlu0 0
  %3180 = vperm.xlu0 %3179, %v2095
  %v3181 = vpop.permute.xlu0 %3180
  %3182 = vset.pattern.permute.xlu0 0
  %3183 = vperm.xlu0 %3182, %v2096
  %v3184 = vpop.permute.xlu0 %3183
  %v3185 = vlaneseq
  %v3186 = vshrl.u32 %v3185, 7
  %v3187 = vsub.s32 %v1051, %v3186
  %v3188 = vrot.slane %v3175, %v3187
  %v3189 = vlaneseq
  %v3190 = vshrl.u32 %v3189, 7
  %v3191 = vsub.s32 %v1051, %v3190
  %v3192 = vrot.slane %v3178, %v3191
  %v3193 = vlaneseq
  %v3194 = vshrl.u32 %v3193, 7
  %v3195 = vsub.s32 %v1051, %v3194
  %v3196 = vrot.slane %v3181, %v3195
  %v3197 = vlaneseq
  %v3198 = vshrl.u32 %v3197, 7
  %v3199 = vsub.s32 %v1051, %v3198
  %v3200 = vrot.slane %v3184, %v3199
  %3209 = vset.pattern.permute.xlu0 0
  %3210 = vperm.xlu0 %3209, %v2326
  %v3211 = vpop.permute.xlu0 %3210
  %3212 = vset.pattern.permute.xlu0 0
  %3213 = vperm.xlu0 %3212, %v2327
  %v3214 = vpop.permute.xlu0 %3213
  %3215 = vset.pattern.permute.xlu0 0
  %3216 = vperm.xlu0 %3215, %v2328
  %v3217 = vpop.permute.xlu0 %3216
  %3218 = vset.pattern.permute.xlu0 0
  %3219 = vperm.xlu0 %3218, %v2329
  %v3220 = vpop.permute.xlu0 %3219
  %v3221 = vlaneseq
  %v3222 = vshrl.u32 %v3221, 7
  %v3223 = vsub.s32 %v1051, %v3222
  %v3224 = vrot.slane %v3211, %v3223
  %v3225 = vlaneseq
  %v3226 = vshrl.u32 %v3225, 7
  %v3227 = vsub.s32 %v1051, %v3226
  %v3228 = vrot.slane %v3214, %v3227
  %v3229 = vlaneseq
  %v3230 = vshrl.u32 %v3229, 7
  %v3231 = vsub.s32 %v1051, %v3230
  %v3232 = vrot.slane %v3217, %v3231
  %v3233 = vlaneseq
  %v3234 = vshrl.u32 %v3233, 7
  %v3235 = vsub.s32 %v1051, %v3234
  %v3236 = vrot.slane %v3220, %v3235
  %3245 = vset.pattern.permute.xlu0 0
  %3246 = vperm.xlu0 %3245, %v2559
  %v3247 = vpop.permute.xlu0 %3246
  %3248 = vset.pattern.permute.xlu0 0
  %3249 = vperm.xlu0 %3248, %v2560
  %v3250 = vpop.permute.xlu0 %3249
  %3251 = vset.pattern.permute.xlu0 0
  %3252 = vperm.xlu0 %3251, %v2561
  %v3253 = vpop.permute.xlu0 %3252
  %3254 = vset.pattern.permute.xlu0 0
  %3255 = vperm.xlu0 %3254, %v2562
  %v3256 = vpop.permute.xlu0 %3255
  %v3257 = vlaneseq
  %v3258 = vshrl.u32 %v3257, 7
  %v3259 = vsub.s32 %v1051, %v3258
  %v3260 = vrot.slane %v3247, %v3259
  %v3261 = vlaneseq
  %v3262 = vshrl.u32 %v3261, 7
  %v3263 = vsub.s32 %v1051, %v3262
  %v3264 = vrot.slane %v3250, %v3263
  %v3265 = vlaneseq
  %v3266 = vshrl.u32 %v3265, 7
  %v3267 = vsub.s32 %v1051, %v3266
  %v3268 = vrot.slane %v3253, %v3267
  %v3269 = vlaneseq
  %v3270 = vshrl.u32 %v3269, 7
  %v3271 = vsub.s32 %v1051, %v3270
  %v3272 = vrot.slane %v3256, %v3271
  %3281 = vset.pattern.permute.xlu0 0
  %3282 = vperm.xlu0 %3281, %v2792
  %v3283 = vpop.permute.xlu0 %3282
  %3284 = vset.pattern.permute.xlu0 0
  %3285 = vperm.xlu0 %3284, %v2793
  %v3286 = vpop.permute.xlu0 %3285
  %3287 = vset.pattern.permute.xlu0 0
  %3288 = vperm.xlu0 %3287, %v2794
  %v3289 = vpop.permute.xlu0 %3288
  %3290 = vset.pattern.permute.xlu0 0
  %3291 = vperm.xlu0 %3290, %v2795
  %v3292 = vpop.permute.xlu0 %3291
  %v3293 = vlaneseq
  %v3294 = vshrl.u32 %v3293, 7
  %v3295 = vsub.s32 %v1051, %v3294
  %v3296 = vrot.slane %v3283, %v3295
  %v3297 = vlaneseq
  %v3298 = vshrl.u32 %v3297, 7
  %v3299 = vsub.s32 %v1051, %v3298
  %v3300 = vrot.slane %v3286, %v3299
  %v3301 = vlaneseq
  %v3302 = vshrl.u32 %v3301, 7
  %v3303 = vsub.s32 %v1051, %v3302
  %v3304 = vrot.slane %v3289, %v3303
  %v3305 = vlaneseq
  %v3306 = vshrl.u32 %v3305, 7
  %v3307 = vsub.s32 %v1051, %v3306
  %v3308 = vrot.slane %v3292, %v3307
  %3317 = vset.pattern.permute.xlu0 0
  %3318 = vperm.xlu0 %3317, %v3025
  %v3319 = vpop.permute.xlu0 %3318
  %3320 = vset.pattern.permute.xlu0 0
  %3321 = vperm.xlu0 %3320, %v3026
  %v3322 = vpop.permute.xlu0 %3321
  %3323 = vset.pattern.permute.xlu0 0
  %3324 = vperm.xlu0 %3323, %v3027
  %v3325 = vpop.permute.xlu0 %3324
  %3326 = vset.pattern.permute.xlu0 0
  %3327 = vperm.xlu0 %3326, %v3028
  %v3328 = vpop.permute.xlu0 %3327
  %v3329 = vlaneseq
  %v3330 = vshrl.u32 %v3329, 7
  %v3331 = vsub.s32 %v1051, %v3330
  %v3332 = vrot.slane %v3319, %v3331
  %v3333 = vlaneseq
  %v3334 = vshrl.u32 %v3333, 7
  %v3335 = vsub.s32 %v1051, %v3334
  %v3336 = vrot.slane %v3322, %v3335
  %v3337 = vlaneseq
  %v3338 = vshrl.u32 %v3337, 7
  %v3339 = vsub.s32 %v1051, %v3338
  %v3340 = vrot.slane %v3325, %v3339
  %v3341 = vlaneseq
  %v3342 = vshrl.u32 %v3341, 7
  %v3343 = vsub.s32 %v1051, %v3342
  %v3344 = vrot.slane %v3328, %v3343
  %vm3349 = vcmask 1040384
  %v3350 = vsel %vm3349, %v3116, %v3152
  %v3351 = vsel %vm3349, %v3120, %v3156
  %v3352 = vsel %vm3349, %v3124, %v3160
  %v3353 = vsel %vm3349, %v3128, %v3164
  %vm3354 = vcmask 1041408
  %v3355 = vsel %vm3354, %v3350, %v3188
  %v3356 = vsel %vm3354, %v3351, %v3192
  %v3357 = vsel %vm3354, %v3352, %v3196
  %v3358 = vsel %vm3354, %v3353, %v3200
  %vm3359 = vcmask 1042432
  %v3360 = vsel %vm3359, %v3355, %v3224
  %v3361 = vsel %vm3359, %v3356, %v3228
  %v3362 = vsel %vm3359, %v3357, %v3232
  %v3363 = vsel %vm3359, %v3358, %v3236
  %v3364 = vsel %vm259, %v3360, %v3260
  %v3365 = vsel %vm259, %v3361, %v3264
  %v3366 = vsel %vm259, %v3362, %v3268
  %v3367 = vsel %vm259, %v3363, %v3272
  %vm3368 = vcmask 1044480
  %v3369 = vsel %vm3368, %v3364, %v3296
  %v3370 = vsel %vm3368, %v3365, %v3300
  %v3371 = vsel %vm3368, %v3366, %v3304
  %v3372 = vsel %vm3368, %v3367, %v3308
  %vm3373 = vcmask 1045504
  %v3374 = vsel %vm3373, %v3369, %v3332
  %v3375 = vsel %vm3373, %v3370, %v3336
  %v3376 = vsel %vm3373, %v3371, %v3340
  %v3377 = vsel %vm3373, %v3372, %v3344
  %v3378 = vmul.f32 %v3374, 1.442695
  %v3379 = vpow.pop %v3378
  %v3380 = vmul.f32 %v3375, 1.442695
  %v3381 = vpow.pop %v3380
  %v3382 = vmul.f32 %v3376, 1.442695
  %v3383 = vpow.pop %v3382
  %v3384 = vmul.f32 %v3377, 1.442695
  %v3385 = vpow.pop %v3384
  %v3388 = vunpack.c.l.s4 1966171168
  %v3389 = vunpack.c.0.s8 %v3388
  %v3390 = vlaneseq
  %v3391 = vshrl.u32 %v3390, 7
  %v3392 = vsub.s32 %v3389, %v3391
  %v3393 = vrot.slane %v3035, %v3392
  %v3394 = vcombine.high %v3393, %v3393
  %v3396 = vunpack.c.l.s4 1966171168
  %v3397 = vunpack.c.0.s8 %v3396
  %v3398 = vlaneseq
  %v3399 = vshrl.u32 %v3398, 7
  %v3400 = vsub.s32 %v3397, %v3399
  %v3401 = vrot.slane %v3393, %v3400
  %v3403 = vunpack.c.l.s4 1966171168
  %v3404 = vunpack.c.0.s8 %v3403
  %v3405 = vlaneseq
  %v3406 = vshrl.u32 %v3405, 7
  %v3407 = vsub.s32 %v3404, %v3406
  %v3408 = vrot.slane %v3394, %v3407
  %v3409 = vcombine.high %v3401, %v3401
  %v3410 = vcombine.high %v3408, %v3408
  %v3411 = vlaneseq
  %v3412 = vshrl.u32 %v3411, 7
  %v3413 = vsub.s32 0, %v3412
  %v3414 = vrot.slane %v3401, %v3413
  %v3415 = vlaneseq
  %v3416 = vshrl.u32 %v3415, 7
  %v3417 = vsub.s32 0, %v3416
  %v3418 = vrot.slane %v3408, %v3417
  %v3419 = vlaneseq
  %v3420 = vshrl.u32 %v3419, 7
  %v3421 = vsub.s32 0, %v3420
  %v3422 = vrot.slane %v3409, %v3421
  %v3423 = vlaneseq
  %v3424 = vshrl.u32 %v3423, 7
  %v3425 = vsub.s32 0, %v3424
  %v3426 = vrot.slane %v3410, %v3425
  %v3431 = vmul.f32 %v3374, %v3414
  %v3432 = vmul.f32 %v3375, %v3418
  %v3433 = vmul.f32 %v3376, %v3422
  %v3434 = vmul.f32 %v3377, %v3426
  %vm3435 = vcmask 30720
  %v3436 = vsel %vm3435, %v3431, 0.0
  %3437 = vadd.xlane.f32.xlu0 %v3436
  %v3438 = vpop.xlane.xlu0 %3437
  %v3439 = vsel %vm3435, %v3432, 0.0
  %3440 = vadd.xlane.f32.xlu0 %v3439
  %v3441 = vpop.xlane.xlu0 %3440
  %v3442 = vsel %vm3435, %v3433, 0.0
  %3443 = vadd.xlane.f32.xlu0 %v3442
  %v3444 = vpop.xlane.xlu0 %3443
  %v3445 = vsel %vm3435, %v3434, 0.0
  %3446 = vadd.xlane.f32.xlu0 %v3445
  %v3447 = vpop.xlane.xlu0 %3446
  %v3448 = vsub.f32 0.0, %v3438
  %v3449 = vsub.f32 0.0, %v3441
  %v3450 = vsub.f32 0.0, %v3444
  %v3451 = vsub.f32 0.0, %v3447
  %v3452 = vlaneseq
  %v3453 = vshrl.u32 %v3452, 7
  %v3454 = vsub.s32 0, %v3453
  %v3455 = vrot.slane %v3379, %v3454
  %3457 = vbcast.lane.b32.xlu0 %v3455, 256
  %v3458 = vpop.permute.xlu0 %3457
  %v3459 = vlaneseq
  %v3460 = vshrl.u32 %v3459, 7
  %v3461 = vsub.s32 1, %v3460
  %v3462 = vrot.slane %v3379, %v3461
  %3464 = vbcast.lane.b32.xlu0 %v3462, 256
  %v3465 = vpop.permute.xlu0 %3464
  %v3466 = vlaneseq
  %v3467 = vshrl.u32 %v3466, 7
  %v3468 = vsub.s32 2, %v3467
  %v3469 = vrot.slane %v3379, %v3468
  %3471 = vbcast.lane.b32.xlu0 %v3469, 256
  %v3472 = vpop.permute.xlu0 %3471
  %v3473 = vlaneseq
  %v3474 = vshrl.u32 %v3473, 7
  %v3475 = vsub.s32 3, %v3474
  %v3476 = vrot.slane %v3379, %v3475
  %3478 = vbcast.lane.b32.xlu0 %v3476, 256
  %v3479 = vpop.permute.xlu0 %3478
  %v3480 = vlaneseq
  %v3481 = vshrl.u32 %v3480, 7
  %v3482 = vsub.s32 4, %v3481
  %v3483 = vrot.slane %v3379, %v3482
  %3485 = vbcast.lane.b32.xlu0 %v3483, 256
  %v3486 = vpop.permute.xlu0 %3485
  %v3487 = vlaneseq
  %v3488 = vshrl.u32 %v3487, 7
  %v3489 = vsub.s32 5, %v3488
  %v3490 = vrot.slane %v3379, %v3489
  %3492 = vbcast.lane.b32.xlu0 %v3490, 256
  %v3493 = vpop.permute.xlu0 %3492
  %v3494 = vlaneseq
  %v3495 = vshrl.u32 %v3494, 7
  %v3496 = vsub.s32 6, %v3495
  %v3497 = vrot.slane %v3379, %v3496
  %3499 = vbcast.lane.b32.xlu0 %v3497, 256
  %v3500 = vpop.permute.xlu0 %3499
  %v3501 = vlaneseq
  %v3502 = vshrl.u32 %v3501, 7
  %v3503 = vsub.s32 0, %v3502
  %v3504 = vrot.slane %v3381, %v3503
  %3506 = vbcast.lane.b32.xlu0 %v3504, 256
  %v3507 = vpop.permute.xlu0 %3506
  %v3508 = vlaneseq
  %v3509 = vshrl.u32 %v3508, 7
  %v3510 = vsub.s32 1, %v3509
  %v3511 = vrot.slane %v3381, %v3510
  %3513 = vbcast.lane.b32.xlu0 %v3511, 256
  %v3514 = vpop.permute.xlu0 %3513
  %v3515 = vlaneseq
  %v3516 = vshrl.u32 %v3515, 7
  %v3517 = vsub.s32 2, %v3516
  %v3518 = vrot.slane %v3381, %v3517
  %3520 = vbcast.lane.b32.xlu0 %v3518, 256
  %v3521 = vpop.permute.xlu0 %3520
  %v3522 = vlaneseq
  %v3523 = vshrl.u32 %v3522, 7
  %v3524 = vsub.s32 3, %v3523
  %v3525 = vrot.slane %v3381, %v3524
  %3527 = vbcast.lane.b32.xlu0 %v3525, 256
  %v3528 = vpop.permute.xlu0 %3527
  %v3529 = vlaneseq
  %v3530 = vshrl.u32 %v3529, 7
  %v3531 = vsub.s32 4, %v3530
  %v3532 = vrot.slane %v3381, %v3531
  %3534 = vbcast.lane.b32.xlu0 %v3532, 256
  %v3535 = vpop.permute.xlu0 %3534
  %v3536 = vlaneseq
  %v3537 = vshrl.u32 %v3536, 7
  %v3538 = vsub.s32 5, %v3537
  %v3539 = vrot.slane %v3381, %v3538
  %3541 = vbcast.lane.b32.xlu0 %v3539, 256
  %v3542 = vpop.permute.xlu0 %3541
  %v3543 = vlaneseq
  %v3544 = vshrl.u32 %v3543, 7
  %v3545 = vsub.s32 6, %v3544
  %v3546 = vrot.slane %v3381, %v3545
  %3548 = vbcast.lane.b32.xlu0 %v3546, 256
  %v3549 = vpop.permute.xlu0 %3548
  %v3550 = vlaneseq
  %v3551 = vshrl.u32 %v3550, 7
  %v3552 = vsub.s32 0, %v3551
  %v3553 = vrot.slane %v3383, %v3552
  %3555 = vbcast.lane.b32.xlu0 %v3553, 256
  %v3556 = vpop.permute.xlu0 %3555
  %v3557 = vlaneseq
  %v3558 = vshrl.u32 %v3557, 7
  %v3559 = vsub.s32 1, %v3558
  %v3560 = vrot.slane %v3383, %v3559
  %3562 = vbcast.lane.b32.xlu0 %v3560, 256
  %v3563 = vpop.permute.xlu0 %3562
  %v3564 = vlaneseq
  %v3565 = vshrl.u32 %v3564, 7
  %v3566 = vsub.s32 2, %v3565
  %v3567 = vrot.slane %v3383, %v3566
  %3569 = vbcast.lane.b32.xlu0 %v3567, 256
  %v3570 = vpop.permute.xlu0 %3569
  %v3571 = vlaneseq
  %v3572 = vshrl.u32 %v3571, 7
  %v3573 = vsub.s32 3, %v3572
  %v3574 = vrot.slane %v3383, %v3573
  %3576 = vbcast.lane.b32.xlu0 %v3574, 256
  %v3577 = vpop.permute.xlu0 %3576
  %v3578 = vlaneseq
  %v3579 = vshrl.u32 %v3578, 7
  %v3580 = vsub.s32 4, %v3579
  %v3581 = vrot.slane %v3383, %v3580
  %3583 = vbcast.lane.b32.xlu0 %v3581, 256
  %v3584 = vpop.permute.xlu0 %3583
  %v3585 = vlaneseq
  %v3586 = vshrl.u32 %v3585, 7
  %v3587 = vsub.s32 5, %v3586
  %v3588 = vrot.slane %v3383, %v3587
  %3590 = vbcast.lane.b32.xlu0 %v3588, 256
  %v3591 = vpop.permute.xlu0 %3590
  %v3592 = vlaneseq
  %v3593 = vshrl.u32 %v3592, 7
  %v3594 = vsub.s32 6, %v3593
  %v3595 = vrot.slane %v3383, %v3594
  %3597 = vbcast.lane.b32.xlu0 %v3595, 256
  %v3598 = vpop.permute.xlu0 %3597
  %v3599 = vlaneseq
  %v3600 = vshrl.u32 %v3599, 7
  %v3601 = vsub.s32 0, %v3600
  %v3602 = vrot.slane %v3385, %v3601
  %3604 = vbcast.lane.b32.xlu0 %v3602, 256
  %v3605 = vpop.permute.xlu0 %3604
  %v3606 = vlaneseq
  %v3607 = vshrl.u32 %v3606, 7
  %v3608 = vsub.s32 1, %v3607
  %v3609 = vrot.slane %v3385, %v3608
  %3611 = vbcast.lane.b32.xlu0 %v3609, 256
  %v3612 = vpop.permute.xlu0 %3611
  %v3613 = vlaneseq
  %v3614 = vshrl.u32 %v3613, 7
  %v3615 = vsub.s32 2, %v3614
  %v3616 = vrot.slane %v3385, %v3615
  %3618 = vbcast.lane.b32.xlu0 %v3616, 256
  %v3619 = vpop.permute.xlu0 %3618
  %v3620 = vlaneseq
  %v3621 = vshrl.u32 %v3620, 7
  %v3622 = vsub.s32 3, %v3621
  %v3623 = vrot.slane %v3385, %v3622
  %3625 = vbcast.lane.b32.xlu0 %v3623, 256
  %v3626 = vpop.permute.xlu0 %3625
  %v3627 = vlaneseq
  %v3628 = vshrl.u32 %v3627, 7
  %v3629 = vsub.s32 4, %v3628
  %v3630 = vrot.slane %v3385, %v3629
  %3632 = vbcast.lane.b32.xlu0 %v3630, 256
  %v3633 = vpop.permute.xlu0 %3632
  %v3634 = vlaneseq
  %v3635 = vshrl.u32 %v3634, 7
  %v3636 = vsub.s32 5, %v3635
  %v3637 = vrot.slane %v3385, %v3636
  %3639 = vbcast.lane.b32.xlu0 %v3637, 256
  %v3640 = vpop.permute.xlu0 %3639
  %v3641 = vlaneseq
  %v3642 = vshrl.u32 %v3641, 7
  %v3643 = vsub.s32 6, %v3642
  %v3644 = vrot.slane %v3385, %v3643
  %3646 = vbcast.lane.b32.xlu0 %v3644, 256
  %v3647 = vpop.permute.xlu0 %3646
  %v3648 = vmul.f32 %v3458, %v1056
  %v3649 = vmul.f32 %v3465, %v1056
  %v3650 = vmul.f32 %v3472, %v1056
  %v3651 = vmul.f32 %v3479, %v1056
  %v3652 = vmul.f32 %v3486, %v1056
  %v3653 = vmul.f32 %v3493, %v1056
  %v3654 = vmul.f32 %v3500, %v1056
  %v3655 = vmul.f32 %v3507, %v1057
  %v3656 = vmul.f32 %v3514, %v1057
  %v3657 = vmul.f32 %v3521, %v1057
  %v3658 = vmul.f32 %v3528, %v1057
  %v3659 = vmul.f32 %v3535, %v1057
  %v3660 = vmul.f32 %v3542, %v1057
  %v3661 = vmul.f32 %v3549, %v1057
  %v3662 = vmul.f32 %v3556, %v1058
  %v3663 = vmul.f32 %v3563, %v1058
  %v3664 = vmul.f32 %v3570, %v1058
  %v3665 = vmul.f32 %v3577, %v1058
  %v3666 = vmul.f32 %v3584, %v1058
  %v3667 = vmul.f32 %v3591, %v1058
  %v3668 = vmul.f32 %v3598, %v1058
  %v3669 = vmul.f32 %v3605, %v1059
  %v3670 = vmul.f32 %v3612, %v1059
  %v3671 = vmul.f32 %v3619, %v1059
  %v3672 = vmul.f32 %v3626, %v1059
  %v3673 = vmul.f32 %v3633, %v1059
  %v3674 = vmul.f32 %v3640, %v1059
  %v3675 = vmul.f32 %v3647, %v1059
  %v3676 = vsel %vm3068, %v3648, 0.0
  %v3677 = vrot.slane %v3676, 4
  %v3678 = vadd.f32 %v3676, %v3677
  %v3679 = vrot.slane %v3678, 2
  %v3680 = vadd.f32 %v3678, %v3679
  %v3681 = vrot.slane %v3680, 1
  %v3682 = vadd.f32 %v3680, %v3681
  %v3683 = vsel %vm3068, %v3649, 0.0
  %v3684 = vrot.slane %v3683, 4
  %v3685 = vadd.f32 %v3683, %v3684
  %v3686 = vrot.slane %v3685, 2
  %v3687 = vadd.f32 %v3685, %v3686
  %v3688 = vrot.slane %v3687, 1
  %v3689 = vadd.f32 %v3687, %v3688
  %v3690 = vsel %vm3068, %v3650, 0.0
  %v3691 = vrot.slane %v3690, 4
  %v3692 = vadd.f32 %v3690, %v3691
  %v3693 = vrot.slane %v3692, 2
  %v3694 = vadd.f32 %v3692, %v3693
  %v3695 = vrot.slane %v3694, 1
  %v3696 = vadd.f32 %v3694, %v3695
  %v3697 = vsel %vm3068, %v3651, 0.0
  %v3698 = vrot.slane %v3697, 4
  %v3699 = vadd.f32 %v3697, %v3698
  %v3700 = vrot.slane %v3699, 2
  %v3701 = vadd.f32 %v3699, %v3700
  %v3702 = vrot.slane %v3701, 1
  %v3703 = vadd.f32 %v3701, %v3702
  %v3704 = vsel %vm3068, %v3652, 0.0
  %v3705 = vrot.slane %v3704, 4
  %v3706 = vadd.f32 %v3704, %v3705
  %v3707 = vrot.slane %v3706, 2
  %v3708 = vadd.f32 %v3706, %v3707
  %v3709 = vrot.slane %v3708, 1
  %v3710 = vadd.f32 %v3708, %v3709
  %v3711 = vsel %vm3068, %v3653, 0.0
  %v3712 = vrot.slane %v3711, 4
  %v3713 = vadd.f32 %v3711, %v3712
  %v3714 = vrot.slane %v3713, 2
  %v3715 = vadd.f32 %v3713, %v3714
  %v3716 = vrot.slane %v3715, 1
  %v3717 = vadd.f32 %v3715, %v3716
  %v3718 = vsel %vm3068, %v3654, 0.0
  %v3719 = vrot.slane %v3718, 4
  %v3720 = vadd.f32 %v3718, %v3719
  %v3721 = vrot.slane %v3720, 2
  %v3722 = vadd.f32 %v3720, %v3721
  %v3723 = vrot.slane %v3722, 1
  %v3724 = vadd.f32 %v3722, %v3723
  %v3725 = vsel %vm3068, %v3655, 0.0
  %v3726 = vrot.slane %v3725, 4
  %v3727 = vadd.f32 %v3725, %v3726
  %v3728 = vrot.slane %v3727, 2
  %v3729 = vadd.f32 %v3727, %v3728
  %v3730 = vrot.slane %v3729, 1
  %v3731 = vadd.f32 %v3729, %v3730
  %v3732 = vsel %vm3068, %v3656, 0.0
  %v3733 = vrot.slane %v3732, 4
  %v3734 = vadd.f32 %v3732, %v3733
  %v3735 = vrot.slane %v3734, 2
  %v3736 = vadd.f32 %v3734, %v3735
  %v3737 = vrot.slane %v3736, 1
  %v3738 = vadd.f32 %v3736, %v3737
  %v3739 = vsel %vm3068, %v3657, 0.0
  %v3740 = vrot.slane %v3739, 4
  %v3741 = vadd.f32 %v3739, %v3740
  %v3742 = vrot.slane %v3741, 2
  %v3743 = vadd.f32 %v3741, %v3742
  %v3744 = vrot.slane %v3743, 1
  %v3745 = vadd.f32 %v3743, %v3744
  %v3746 = vsel %vm3068, %v3658, 0.0
  %v3747 = vrot.slane %v3746, 4
  %v3748 = vadd.f32 %v3746, %v3747
  %v3749 = vrot.slane %v3748, 2
  %v3750 = vadd.f32 %v3748, %v3749
  %v3751 = vrot.slane %v3750, 1
  %v3752 = vadd.f32 %v3750, %v3751
  %v3753 = vsel %vm3068, %v3659, 0.0
  %v3754 = vrot.slane %v3753, 4
  %v3755 = vadd.f32 %v3753, %v3754
  %v3756 = vrot.slane %v3755, 2
  %v3757 = vadd.f32 %v3755, %v3756
  %v3758 = vrot.slane %v3757, 1
  %v3759 = vadd.f32 %v3757, %v3758
  %v3760 = vsel %vm3068, %v3660, 0.0
  %v3761 = vrot.slane %v3760, 4
  %v3762 = vadd.f32 %v3760, %v3761
  %v3763 = vrot.slane %v3762, 2
  %v3764 = vadd.f32 %v3762, %v3763
  %v3765 = vrot.slane %v3764, 1
  %v3766 = vadd.f32 %v3764, %v3765
  %v3767 = vsel %vm3068, %v3661, 0.0
  %v3768 = vrot.slane %v3767, 4
  %v3769 = vadd.f32 %v3767, %v3768
  %v3770 = vrot.slane %v3769, 2
  %v3771 = vadd.f32 %v3769, %v3770
  %v3772 = vrot.slane %v3771, 1
  %v3773 = vadd.f32 %v3771, %v3772
  %v3774 = vsel %vm3068, %v3662, 0.0
  %v3775 = vrot.slane %v3774, 4
  %v3776 = vadd.f32 %v3774, %v3775
  %v3777 = vrot.slane %v3776, 2
  %v3778 = vadd.f32 %v3776, %v3777
  %v3779 = vrot.slane %v3778, 1
  %v3780 = vadd.f32 %v3778, %v3779
  %v3781 = vsel %vm3068, %v3663, 0.0
  %v3782 = vrot.slane %v3781, 4
  %v3783 = vadd.f32 %v3781, %v3782
  %v3784 = vrot.slane %v3783, 2
  %v3785 = vadd.f32 %v3783, %v3784
  %v3786 = vrot.slane %v3785, 1
  %v3787 = vadd.f32 %v3785, %v3786
  %v3788 = vsel %vm3068, %v3664, 0.0
  %v3789 = vrot.slane %v3788, 4
  %v3790 = vadd.f32 %v3788, %v3789
  %v3791 = vrot.slane %v3790, 2
  %v3792 = vadd.f32 %v3790, %v3791
  %v3793 = vrot.slane %v3792, 1
  %v3794 = vadd.f32 %v3792, %v3793
  %v3795 = vsel %vm3068, %v3665, 0.0
  %v3796 = vrot.slane %v3795, 4
  %v3797 = vadd.f32 %v3795, %v3796
  %v3798 = vrot.slane %v3797, 2
  %v3799 = vadd.f32 %v3797, %v3798
  %v3800 = vrot.slane %v3799, 1
  %v3801 = vadd.f32 %v3799, %v3800
  %v3802 = vsel %vm3068, %v3666, 0.0
  %v3803 = vrot.slane %v3802, 4
  %v3804 = vadd.f32 %v3802, %v3803
  %v3805 = vrot.slane %v3804, 2
  %v3806 = vadd.f32 %v3804, %v3805
  %v3807 = vrot.slane %v3806, 1
  %v3808 = vadd.f32 %v3806, %v3807
  %v3809 = vsel %vm3068, %v3667, 0.0
  %v3810 = vrot.slane %v3809, 4
  %v3811 = vadd.f32 %v3809, %v3810
  %v3812 = vrot.slane %v3811, 2
  %v3813 = vadd.f32 %v3811, %v3812
  %v3814 = vrot.slane %v3813, 1
  %v3815 = vadd.f32 %v3813, %v3814
  %v3816 = vsel %vm3068, %v3668, 0.0
  %v3817 = vrot.slane %v3816, 4
  %v3818 = vadd.f32 %v3816, %v3817
  %v3819 = vrot.slane %v3818, 2
  %v3820 = vadd.f32 %v3818, %v3819
  %v3821 = vrot.slane %v3820, 1
  %v3822 = vadd.f32 %v3820, %v3821
  %v3823 = vsel %vm3068, %v3669, 0.0
  %v3824 = vrot.slane %v3823, 4
  %v3825 = vadd.f32 %v3823, %v3824
  %v3826 = vrot.slane %v3825, 2
  %v3827 = vadd.f32 %v3825, %v3826
  %v3828 = vrot.slane %v3827, 1
  %v3829 = vadd.f32 %v3827, %v3828
  %v3830 = vsel %vm3068, %v3670, 0.0
  %v3831 = vrot.slane %v3830, 4
  %v3832 = vadd.f32 %v3830, %v3831
  %v3833 = vrot.slane %v3832, 2
  %v3834 = vadd.f32 %v3832, %v3833
  %v3835 = vrot.slane %v3834, 1
  %v3836 = vadd.f32 %v3834, %v3835
  %v3837 = vsel %vm3068, %v3671, 0.0
  %v3838 = vrot.slane %v3837, 4
  %v3839 = vadd.f32 %v3837, %v3838
  %v3840 = vrot.slane %v3839, 2
  %v3841 = vadd.f32 %v3839, %v3840
  %v3842 = vrot.slane %v3841, 1
  %v3843 = vadd.f32 %v3841, %v3842
  %v3844 = vsel %vm3068, %v3672, 0.0
  %v3845 = vrot.slane %v3844, 4
  %v3846 = vadd.f32 %v3844, %v3845
  %v3847 = vrot.slane %v3846, 2
  %v3848 = vadd.f32 %v3846, %v3847
  %v3849 = vrot.slane %v3848, 1
  %v3850 = vadd.f32 %v3848, %v3849
  %v3851 = vsel %vm3068, %v3673, 0.0
  %v3852 = vrot.slane %v3851, 4
  %v3853 = vadd.f32 %v3851, %v3852
  %v3854 = vrot.slane %v3853, 2
  %v3855 = vadd.f32 %v3853, %v3854
  %v3856 = vrot.slane %v3855, 1
  %v3857 = vadd.f32 %v3855, %v3856
  %v3858 = vsel %vm3068, %v3674, 0.0
  %v3859 = vrot.slane %v3858, 4
  %v3860 = vadd.f32 %v3858, %v3859
  %v3861 = vrot.slane %v3860, 2
  %v3862 = vadd.f32 %v3860, %v3861
  %v3863 = vrot.slane %v3862, 1
  %v3864 = vadd.f32 %v3862, %v3863
  %v3865 = vsel %vm3068, %v3675, 0.0
  %v3866 = vrot.slane %v3865, 4
  %v3867 = vadd.f32 %v3865, %v3866
  %v3868 = vrot.slane %v3867, 2
  %v3869 = vadd.f32 %v3867, %v3868
  %v3870 = vrot.slane %v3869, 1
  %v3871 = vadd.f32 %v3869, %v3870
  %v3872 = vmax.f32 %v3682, 0.0
  %v3873 = vmax.f32 %v3689, 0.0
  %v3874 = vmax.f32 %v3696, 0.0
  %v3875 = vmax.f32 %v3703, 0.0
  %v3876 = vmax.f32 %v3710, 0.0
  %v3877 = vmax.f32 %v3717, 0.0
  %v3878 = vmax.f32 %v3724, 0.0
  %v3879 = vmax.f32 %v3731, 0.0
  %v3880 = vmax.f32 %v3738, 0.0
  %v3881 = vmax.f32 %v3745, 0.0
  %v3882 = vmax.f32 %v3752, 0.0
  %v3883 = vmax.f32 %v3759, 0.0
  %v3884 = vmax.f32 %v3766, 0.0
  %v3885 = vmax.f32 %v3773, 0.0
  %v3886 = vmax.f32 %v3780, 0.0
  %v3887 = vmax.f32 %v3787, 0.0
  %v3888 = vmax.f32 %v3794, 0.0
  %v3889 = vmax.f32 %v3801, 0.0
  %v3890 = vmax.f32 %v3808, 0.0
  %v3891 = vmax.f32 %v3815, 0.0
  %v3892 = vmax.f32 %v3822, 0.0
  %v3893 = vmax.f32 %v3829, 0.0
  %v3894 = vmax.f32 %v3836, 0.0
  %v3895 = vmax.f32 %v3843, 0.0
  %v3896 = vmax.f32 %v3850, 0.0
  %v3897 = vmax.f32 %v3857, 0.0
  %v3898 = vmax.f32 %v3864, 0.0
  %v3899 = vmax.f32 %v3871, 0.0
  %v3900 = vmin.f32 %v3872, 1.0
  %v3901 = vmin.f32 %v3873, 1.0
  %v3902 = vmin.f32 %v3874, 1.0
  %v3903 = vmin.f32 %v3875, 1.0
  %v3904 = vmin.f32 %v3876, 1.0
  %v3905 = vmin.f32 %v3877, 1.0
  %v3906 = vmin.f32 %v3878, 1.0
  %v3907 = vmin.f32 %v3879, 1.0
  %v3908 = vmin.f32 %v3880, 1.0
  %v3909 = vmin.f32 %v3881, 1.0
  %v3910 = vmin.f32 %v3882, 1.0
  %v3911 = vmin.f32 %v3883, 1.0
  %v3912 = vmin.f32 %v3884, 1.0
  %v3913 = vmin.f32 %v3885, 1.0
  %v3914 = vmin.f32 %v3886, 1.0
  %v3915 = vmin.f32 %v3887, 1.0
  %v3916 = vmin.f32 %v3888, 1.0
  %v3917 = vmin.f32 %v3889, 1.0
  %v3918 = vmin.f32 %v3890, 1.0
  %v3919 = vmin.f32 %v3891, 1.0
  %v3920 = vmin.f32 %v3892, 1.0
  %v3921 = vmin.f32 %v3893, 1.0
  %v3922 = vmin.f32 %v3894, 1.0
  %v3923 = vmin.f32 %v3895, 1.0
  %v3924 = vmin.f32 %v3896, 1.0
  %v3925 = vmin.f32 %v3897, 1.0
  %v3926 = vmin.f32 %v3898, 1.0
  %v3927 = vmin.f32 %v3899, 1.0
  %v3928 = vlog2.pop %v3900
  %v3929 = vmul.f32 %v3928, 0.6931472
  %v3930 = vlog2.pop %v3901
  %v3931 = vmul.f32 %v3930, 0.6931472
  %v3932 = vlog2.pop %v3902
  %v3933 = vmul.f32 %v3932, 0.6931472
  %v3934 = vlog2.pop %v3903
  %v3935 = vmul.f32 %v3934, 0.6931472
  %v3936 = vlog2.pop %v3904
  %v3937 = vmul.f32 %v3936, 0.6931472
  %v3938 = vlog2.pop %v3905
  %v3939 = vmul.f32 %v3938, 0.6931472
  %v3940 = vlog2.pop %v3906
  %v3941 = vmul.f32 %v3940, 0.6931472
  %v3942 = vlog2.pop %v3907
  %v3943 = vmul.f32 %v3942, 0.6931472
  %v3944 = vlog2.pop %v3908
  %v3945 = vmul.f32 %v3944, 0.6931472
  %v3946 = vlog2.pop %v3909
  %v3947 = vmul.f32 %v3946, 0.6931472
  %v3948 = vlog2.pop %v3910
  %v3949 = vmul.f32 %v3948, 0.6931472
  %v3950 = vlog2.pop %v3911
  %v3951 = vmul.f32 %v3950, 0.6931472
  %v3952 = vlog2.pop %v3912
  %v3953 = vmul.f32 %v3952, 0.6931472
  %v3954 = vlog2.pop %v3913
  %v3955 = vmul.f32 %v3954, 0.6931472
  %v3956 = vlog2.pop %v3914
  %v3957 = vmul.f32 %v3956, 0.6931472
  %v3958 = vlog2.pop %v3915
  %v3959 = vmul.f32 %v3958, 0.6931472
  %v3960 = vlog2.pop %v3916
  %v3961 = vmul.f32 %v3960, 0.6931472
  %v3962 = vlog2.pop %v3917
  %v3963 = vmul.f32 %v3962, 0.6931472
  %v3964 = vlog2.pop %v3918
  %v3965 = vmul.f32 %v3964, 0.6931472
  %v3966 = vlog2.pop %v3919
  %v3967 = vmul.f32 %v3966, 0.6931472
  %v3968 = vlog2.pop %v3920
  %v3969 = vmul.f32 %v3968, 0.6931472
  %v3970 = vlog2.pop %v3921
  %v3971 = vmul.f32 %v3970, 0.6931472
  %v3972 = vlog2.pop %v3922
  %v3973 = vmul.f32 %v3972, 0.6931472
  %v3974 = vlog2.pop %v3923
  %v3975 = vmul.f32 %v3974, 0.6931472
  %v3976 = vlog2.pop %v3924
  %v3977 = vmul.f32 %v3976, 0.6931472
  %v3978 = vlog2.pop %v3925
  %v3979 = vmul.f32 %v3978, 0.6931472
  %v3980 = vlog2.pop %v3926
  %v3981 = vmul.f32 %v3980, 0.6931472
  %v3982 = vlog2.pop %v3927
  %v3983 = vmul.f32 %v3982, 0.6931472
  %v3984 = vmax.f32 %v3929, -100.0
  %v3985 = vmax.f32 %v3931, -100.0
  %v3986 = vmax.f32 %v3933, -100.0
  %v3987 = vmax.f32 %v3935, -100.0
  %v3988 = vmax.f32 %v3937, -100.0
  %v3989 = vmax.f32 %v3939, -100.0
  %v3990 = vmax.f32 %v3941, -100.0
  %v3991 = vmax.f32 %v3943, -100.0
  %v3992 = vmax.f32 %v3945, -100.0
  %v3993 = vmax.f32 %v3947, -100.0
  %v3994 = vmax.f32 %v3949, -100.0
  %v3995 = vmax.f32 %v3951, -100.0
  %v3996 = vmax.f32 %v3953, -100.0
  %v3997 = vmax.f32 %v3955, -100.0
  %v3998 = vmax.f32 %v3957, -100.0
  %v3999 = vmax.f32 %v3959, -100.0
  %v4000 = vmax.f32 %v3961, -100.0
  %v4001 = vmax.f32 %v3963, -100.0
  %v4002 = vmax.f32 %v3965, -100.0
  %v4003 = vmax.f32 %v3967, -100.0
  %v4004 = vmax.f32 %v3969, -100.0
  %v4005 = vmax.f32 %v3971, -100.0
  %v4006 = vmax.f32 %v3973, -100.0
  %v4007 = vmax.f32 %v3975, -100.0
  %v4008 = vmax.f32 %v3977, -100.0
  %v4009 = vmax.f32 %v3979, -100.0
  %v4010 = vmax.f32 %v3981, -100.0
  %v4011 = vmax.f32 %v3983, -100.0
  %v4012 = vsub.f32 1.0, %v3900
  %v4013 = vsub.f32 1.0, %v3901
  %v4014 = vsub.f32 1.0, %v3902
  %v4015 = vsub.f32 1.0, %v3903
  %v4016 = vsub.f32 1.0, %v3904
  %v4017 = vsub.f32 1.0, %v3905
  %v4018 = vsub.f32 1.0, %v3906
  %v4019 = vsub.f32 1.0, %v3907
  %v4020 = vsub.f32 1.0, %v3908
  %v4021 = vsub.f32 1.0, %v3909
  %v4022 = vsub.f32 1.0, %v3910
  %v4023 = vsub.f32 1.0, %v3911
  %v4024 = vsub.f32 1.0, %v3912
  %v4025 = vsub.f32 1.0, %v3913
  %v4026 = vsub.f32 1.0, %v3914
  %v4027 = vsub.f32 1.0, %v3915
  %v4028 = vsub.f32 1.0, %v3916
  %v4029 = vsub.f32 1.0, %v3917
  %v4030 = vsub.f32 1.0, %v3918
  %v4031 = vsub.f32 1.0, %v3919
  %v4032 = vsub.f32 1.0, %v3920
  %v4033 = vsub.f32 1.0, %v3921
  %v4034 = vsub.f32 1.0, %v3922
  %v4035 = vsub.f32 1.0, %v3923
  %v4036 = vsub.f32 1.0, %v3924
  %v4037 = vsub.f32 1.0, %v3925
  %v4038 = vsub.f32 1.0, %v3926
  %v4039 = vsub.f32 1.0, %v3927
  %v4040 = vlog2.pop %v4012
  %v4041 = vmul.f32 %v4040, 0.6931472
  %v4042 = vlog2.pop %v4013
  %v4043 = vmul.f32 %v4042, 0.6931472
  %v4044 = vlog2.pop %v4014
  %v4045 = vmul.f32 %v4044, 0.6931472
  %v4046 = vlog2.pop %v4015
  %v4047 = vmul.f32 %v4046, 0.6931472
  %v4048 = vlog2.pop %v4016
  %v4049 = vmul.f32 %v4048, 0.6931472
  %v4050 = vlog2.pop %v4017
  %v4051 = vmul.f32 %v4050, 0.6931472
  %v4052 = vlog2.pop %v4018
  %v4053 = vmul.f32 %v4052, 0.6931472
  %v4054 = vlog2.pop %v4019
  %v4055 = vmul.f32 %v4054, 0.6931472
  %v4056 = vlog2.pop %v4020
  %v4057 = vmul.f32 %v4056, 0.6931472
  %v4058 = vlog2.pop %v4021
  %v4059 = vmul.f32 %v4058, 0.6931472
  %v4060 = vlog2.pop %v4022
  %v4061 = vmul.f32 %v4060, 0.6931472
  %v4062 = vlog2.pop %v4023
  %v4063 = vmul.f32 %v4062, 0.6931472
  %v4064 = vlog2.pop %v4024
  %v4065 = vmul.f32 %v4064, 0.6931472
  %v4066 = vlog2.pop %v4025
  %v4067 = vmul.f32 %v4066, 0.6931472
  %v4068 = vlog2.pop %v4026
  %v4069 = vmul.f32 %v4068, 0.6931472
  %v4070 = vlog2.pop %v4027
  %v4071 = vmul.f32 %v4070, 0.6931472
  %v4072 = vlog2.pop %v4028
  %v4073 = vmul.f32 %v4072, 0.6931472
  %v4074 = vlog2.pop %v4029
  %v4075 = vmul.f32 %v4074, 0.6931472
  %v4076 = vlog2.pop %v4030
  %v4077 = vmul.f32 %v4076, 0.6931472
  %v4078 = vlog2.pop %v4031
  %v4079 = vmul.f32 %v4078, 0.6931472
  %v4080 = vlog2.pop %v4032
  %v4081 = vmul.f32 %v4080, 0.6931472
  %v4082 = vlog2.pop %v4033
  %v4083 = vmul.f32 %v4082, 0.6931472
  %v4084 = vlog2.pop %v4034
  %v4085 = vmul.f32 %v4084, 0.6931472
  %v4086 = vlog2.pop %v4035
  %v4087 = vmul.f32 %v4086, 0.6931472
  %v4088 = vlog2.pop %v4036
  %v4089 = vmul.f32 %v4088, 0.6931472
  %v4090 = vlog2.pop %v4037
  %v4091 = vmul.f32 %v4090, 0.6931472
  %v4092 = vlog2.pop %v4038
  %v4093 = vmul.f32 %v4092, 0.6931472
  %v4094 = vlog2.pop %v4039
  %v4095 = vmul.f32 %v4094, 0.6931472
  %v4096 = vmax.f32 %v4041, -100.0
  %v4097 = vmax.f32 %v4043, -100.0
  %v4098 = vmax.f32 %v4045, -100.0
  %v4099 = vmax.f32 %v4047, -100.0
  %v4100 = vmax.f32 %v4049, -100.0
  %v4101 = vmax.f32 %v4051, -100.0
  %v4102 = vmax.f32 %v4053, -100.0
  %v4103 = vmax.f32 %v4055, -100.0
  %v4104 = vmax.f32 %v4057, -100.0
  %v4105 = vmax.f32 %v4059, -100.0
  %v4106 = vmax.f32 %v4061, -100.0
  %v4107 = vmax.f32 %v4063, -100.0
  %v4108 = vmax.f32 %v4065, -100.0
  %v4109 = vmax.f32 %v4067, -100.0
  %v4110 = vmax.f32 %v4069, -100.0
  %v4111 = vmax.f32 %v4071, -100.0
  %v4112 = vmax.f32 %v4073, -100.0
  %v4113 = vmax.f32 %v4075, -100.0
  %v4114 = vmax.f32 %v4077, -100.0
  %v4115 = vmax.f32 %v4079, -100.0
  %v4116 = vmax.f32 %v4081, -100.0
  %v4117 = vmax.f32 %v4083, -100.0
  %v4118 = vmax.f32 %v4085, -100.0
  %v4119 = vmax.f32 %v4087, -100.0
  %v4120 = vmax.f32 %v4089, -100.0
  %v4121 = vmax.f32 %v4091, -100.0
  %v4122 = vmax.f32 %v4093, -100.0
  %v4123 = vmax.f32 %v4095, -100.0
  %v4152 = vsel %vm1509, %v3985, %v3984
  %v4153 = vsel %vm1511, %v3986, %v4152
  %v4154 = vsel %vm1513, %v3987, %v4153
  %vm4155 = vcmask 1044484
  %v4156 = vsel %vm4155, %v3988, %v4154
  %vm4157 = vcmask 1045509
  %v4158 = vsel %vm4157, %v3989, %v4156
  %vm4159 = vcmask 1046534
  %v4160 = vsel %vm4159, %v3990, %v4158
  %v4161 = vsel %vm1509, %v3992, %v3991
  %v4162 = vsel %vm1511, %v3993, %v4161
  %v4163 = vsel %vm1513, %v3994, %v4162
  %v4164 = vsel %vm4155, %v3995, %v4163
  %v4165 = vsel %vm4157, %v3996, %v4164
  %v4166 = vsel %vm4159, %v3997, %v4165
  %v4167 = vsel %vm1509, %v3999, %v3998
  %v4168 = vsel %vm1511, %v4000, %v4167
  %v4169 = vsel %vm1513, %v4001, %v4168
  %v4170 = vsel %vm4155, %v4002, %v4169
  %v4171 = vsel %vm4157, %v4003, %v4170
  %v4172 = vsel %vm4159, %v4004, %v4171
  %v4173 = vsel %vm1509, %v4006, %v4005
  %v4174 = vsel %vm1511, %v4007, %v4173
  %v4175 = vsel %vm1513, %v4008, %v4174
  %v4176 = vsel %vm4155, %v4009, %v4175
  %v4177 = vsel %vm4157, %v4010, %v4176
  %v4178 = vsel %vm4159, %v4011, %v4177
  %v4183 = vmul.f32 %v3075, %v4160
  %v4184 = vmul.f32 %v3082, %v4166
  %v4185 = vmul.f32 %v3089, %v4172
  %v4186 = vmul.f32 %v3096, %v4178
  %v4187 = vsub.f32 1.0, %v3075
  %v4188 = vsub.f32 1.0, %v3082
  %v4189 = vsub.f32 1.0, %v3089
  %v4190 = vsub.f32 1.0, %v3096
  %v4219 = vsel %vm1509, %v4097, %v4096
  %v4220 = vsel %vm1511, %v4098, %v4219
  %v4221 = vsel %vm1513, %v4099, %v4220
  %v4222 = vsel %vm4155, %v4100, %v4221
  %v4223 = vsel %vm4157, %v4101, %v4222
  %v4224 = vsel %vm4159, %v4102, %v4223
  %v4225 = vsel %vm1509, %v4104, %v4103
  %v4226 = vsel %vm1511, %v4105, %v4225
  %v4227 = vsel %vm1513, %v4106, %v4226
  %v4228 = vsel %vm4155, %v4107, %v4227
  %v4229 = vsel %vm4157, %v4108, %v4228
  %v4230 = vsel %vm4159, %v4109, %v4229
  %v4231 = vsel %vm1509, %v4111, %v4110
  %v4232 = vsel %vm1511, %v4112, %v4231
  %v4233 = vsel %vm1513, %v4113, %v4232
  %v4234 = vsel %vm4155, %v4114, %v4233
  %v4235 = vsel %vm4157, %v4115, %v4234
  %v4236 = vsel %vm4159, %v4116, %v4235
  %v4237 = vsel %vm1509, %v4118, %v4117
  %v4238 = vsel %vm1511, %v4119, %v4237
  %v4239 = vsel %vm1513, %v4120, %v4238
  %v4240 = vsel %vm4155, %v4121, %v4239
  %v4241 = vsel %vm4157, %v4122, %v4240
  %v4242 = vsel %vm4159, %v4123, %v4241
  %v4247 = vmul.f32 %v4187, %v4224
  %v4248 = vmul.f32 %v4188, %v4230
  %v4249 = vmul.f32 %v4189, %v4236
  %v4250 = vmul.f32 %v4190, %v4242
  %v4251 = vadd.f32 %v4183, %v4247
  %v4252 = vadd.f32 %v4184, %v4248
  %v4253 = vadd.f32 %v4185, %v4249
  %v4254 = vadd.f32 %v4186, %v4250
  %v4255 = vsub.f32 0.0, %v4251
  %v4256 = vsub.f32 0.0, %v4252
  %v4257 = vsub.f32 0.0, %v4253
  %v4258 = vsub.f32 0.0, %v4254
  %vm4259 = vcmask 129024
  %v4260 = vsel %vm4259, %v4255, 0.0
  %4261 = vadd.xlane.f32.xlu0 %v4260
  %v4262 = vpop.xlane.xlu0 %4261
  %v4263 = vsel %vm4259, %v4256, 0.0
  %4264 = vadd.xlane.f32.xlu0 %v4263
  %v4265 = vpop.xlane.xlu0 %4264
  %v4266 = vsel %vm4259, %v4257, 0.0
  %4267 = vadd.xlane.f32.xlu0 %v4266
  %v4268 = vpop.xlane.xlu0 %4267
  %v4269 = vsel %vm4259, %v4258, 0.0
  %4270 = vadd.xlane.f32.xlu0 %v4269
  %v4271 = vpop.xlane.xlu0 %4270
  %v4272 = vmul.f32 %v4262, 0.5
  %v4273 = vmul.f32 %v4265, 0.5
  %v4274 = vmul.f32 %v4268, 0.5
  %v4275 = vmul.f32 %v4271, 0.5
  %v4276 = vadd.f32 %v3448, %v4272
  %v4277 = vadd.f32 %v3449, %v4273
  %v4278 = vadd.f32 %v3450, %v4274
  %v4279 = vadd.f32 %v3451, %v4275
  %v4280 = vsel %vm3435, %v3374, -inf
  %4281 = vmax.xlane.f32.xlu0 %v4280
  %v4282 = vpop.xlane.xlu0 %4281
  %v4283 = vsel %vm3435, %v3375, -inf
  %4284 = vmax.xlane.f32.xlu0 %v4283
  %v4285 = vpop.xlane.xlu0 %4284
  %v4286 = vsel %vm3435, %v3376, -inf
  %4287 = vmax.xlane.f32.xlu0 %v4286
  %v4288 = vpop.xlane.xlu0 %4287
  %v4289 = vsel %vm3435, %v3377, -inf
  %4290 = vmax.xlane.f32.xlu0 %v4289
  %v4291 = vpop.xlane.xlu0 %4290
  %vm4292 = vcmp.ge.f32.partialorder %v3438, %v4282
  %vm4293 = vcmp.ge.f32.partialorder %v3441, %v4285
  %vm4294 = vcmp.ge.f32.partialorder %v3444, %v4288
  %vm4295 = vcmp.ge.f32.partialorder %v3447, %v4291
  %v4296 = vsel %vm4292, 100.0, 0.0
  %v4297 = vsel %vm4293, 100.0, 0.0
  %v4298 = vsel %vm4294, 100.0, 0.0
  %v4299 = vsel %vm4295, 100.0, 0.0
  %4301 = vrot.lane.b32.xlu0 %v405, 1
  %v4302 = vpop.permute.xlu0 %4301
  %4305 = vrot.lane.b32.xlu0 %v563, 2
  %v4306 = vpop.permute.xlu0 %4305
  %4309 = vrot.lane.b32.xlu0 %v721, 3
  %v4310 = vpop.permute.xlu0 %4309
  %4313 = vrot.lane.b32.xlu0 %v879, 4
  %v4314 = vpop.permute.xlu0 %4313
  %4317 = vrot.lane.b32.xlu0 %v1037, 5
  %v4318 = vpop.permute.xlu0 %4317
  %4321 = vrot.lane.b32.xlu0 %v1054, 6
  %v4322 = vpop.permute.xlu0 %4321
  %vm4324 = vcmask 7168
  %v4325 = vsel %vm4324, %v237, %v4302
  %vm4326 = vcmask 15360
  %v4327 = vsel %vm4326, %v4325, %v4306
  %vm4328 = vcmask 23552
  %v4329 = vsel %vm4328, %v4327, %v4310
  %vm4330 = vcmask 31744
  %v4331 = vsel %vm4330, %v4329, %v4314
  %vm4332 = vcmask 39936
  %v4333 = vsel %vm4332, %v4331, %v4318
  %vm4334 = vcmask 48128
  %v4335 = vsel %vm4334, %v4333, %v4322
  %v4336 = vadd.f32 %v4335, 0.0
  %v4337 = vadd.f32 %v4276, 0.01
  %v4338 = vadd.f32 %v4277, 0.01
  %v4339 = vadd.f32 %v4278, 0.01
  %v4340 = vadd.f32 %v4279, 0.01
  %v4342 = vlaneseq
  %v4343 = vshrl.u32 %v4342, 7
  %v4344 = vsub.s32 0, %v4343
  %v4345 = vrot.slane %v4335, %v4344
  %4347 = vbcast.lane.b32.xlu0 %v4345, 256
  %v4348 = vpop.permute.xlu0 %4347
  %v4349 = vlaneseq
  %v4350 = vshrl.u32 %v4349, 7
  %v4351 = vsub.s32 1, %v4350
  %v4352 = vrot.slane %v4335, %v4351
  %4354 = vbcast.lane.b32.xlu0 %v4352, 256
  %v4355 = vpop.permute.xlu0 %4354
  %v4356 = vlaneseq
  %v4357 = vshrl.u32 %v4356, 7
  %v4358 = vsub.s32 2, %v4357
  %v4359 = vrot.slane %v4335, %v4358
  %4361 = vbcast.lane.b32.xlu0 %v4359, 256
  %v4362 = vpop.permute.xlu0 %4361
  %v4363 = vlaneseq
  %v4364 = vshrl.u32 %v4363, 7
  %v4365 = vsub.s32 3, %v4364
  %v4366 = vrot.slane %v4335, %v4365
  %4368 = vbcast.lane.b32.xlu0 %v4366, 256
  %v4369 = vpop.permute.xlu0 %4368
  %v4374 = vmul.f32 %v4337, %v4348
  %v4375 = vmul.f32 %v4338, %v4355
  %v4376 = vmul.f32 %v4339, %v4362
  %v4377 = vmul.f32 %v4340, %v4369
  %v4378 = vadd.f32 %v4374, 0.0
  %v4379 = vadd.f32 %v4375, 0.0
  %v4380 = vadd.f32 %v4376, 0.0
  %v4381 = vadd.f32 %v4377, 0.0
  %v4382 = vmul.f32 %v4296, %v4348
  %v4383 = vmul.f32 %v4297, %v4355
  %v4384 = vmul.f32 %v4298, %v4362
  %v4385 = vmul.f32 %v4299, %v4369
  %v4386 = vadd.f32 %v4382, 0.0
  %v4387 = vadd.f32 %v4383, 0.0
  %v4388 = vadd.f32 %v4384, 0.0
  %v4389 = vadd.f32 %v4385, 0.0
  %v4390 = vsub.f32 1.0, %v4335
  %4392 = vrot.lane.b32.xlu0 %v4390, 1
  %v4393 = vpop.permute.xlu0 %4392
  %v4395 = vmul.f32 %v4335, %v4393
  %4397 = vrot.lane.b32.xlu0 %v4395, 127
  %v4398 = vpop.permute.xlu0 %4397
  %v4400 = vadd.f32 %v4336, %v4398
  %v4401 = vadd.f32 %v4276, 0.02
  %v4402 = vadd.f32 %v4277, 0.02
  %v4403 = vadd.f32 %v4278, 0.02
  %v4404 = vadd.f32 %v4279, 0.02
  %v4405 = vlaneseq
  %v4406 = vshrl.u32 %v4405, 7
  %v4407 = vsub.s32 0, %v4406
  %v4408 = vrot.slane %v4395, %v4407
  %4410 = vbcast.lane.b32.xlu0 %v4408, 256
  %v4411 = vpop.permute.xlu0 %4410
  %v4412 = vlaneseq
  %v4413 = vshrl.u32 %v4412, 7
  %v4414 = vsub.s32 1, %v4413
  %v4415 = vrot.slane %v4395, %v4414
  %4417 = vbcast.lane.b32.xlu0 %v4415, 256
  %v4418 = vpop.permute.xlu0 %4417
  %v4419 = vlaneseq
  %v4420 = vshrl.u32 %v4419, 7
  %v4421 = vsub.s32 2, %v4420
  %v4422 = vrot.slane %v4395, %v4421
  %4424 = vbcast.lane.b32.xlu0 %v4422, 256
  %v4425 = vpop.permute.xlu0 %4424
  %v4426 = vlaneseq
  %v4427 = vshrl.u32 %v4426, 7
  %v4428 = vsub.s32 3, %v4427
  %v4429 = vrot.slane %v4395, %v4428
  %4431 = vbcast.lane.b32.xlu0 %v4429, 256
  %v4432 = vpop.permute.xlu0 %4431
  %v4437 = vmul.f32 %v4401, %v4411
  %v4438 = vmul.f32 %v4402, %v4418
  %v4439 = vmul.f32 %v4403, %v4425
  %v4440 = vmul.f32 %v4404, %v4432
  %v4445 = vrot.slane %v4437, 1
  %v4446 = vrot.slane %v4438, 1
  %v4447 = vrot.slane %v4439, 1
  %v4448 = vrot.slane %v4440, 1
  %v4453 = vadd.f32 %v4378, %v4445
  %v4454 = vadd.f32 %v4379, %v4446
  %v4455 = vadd.f32 %v4380, %v4447
  %v4456 = vadd.f32 %v4381, %v4448
  %v4457 = vmul.f32 %v4395, 2.0
  %4459 = vrot.lane.b32.xlu0 %v4457, 127
  %v4460 = vpop.permute.xlu0 %4459
  %v4462 = vadd.f32 %v4336, %v4460
  %v4463 = vmul.f32 %v4296, %v4411
  %v4464 = vmul.f32 %v4297, %v4418
  %v4465 = vmul.f32 %v4298, %v4425
  %v4466 = vmul.f32 %v4299, %v4432
  %v4471 = vrot.slane %v4463, 1
  %v4472 = vrot.slane %v4464, 1
  %v4473 = vrot.slane %v4465, 1
  %v4474 = vrot.slane %v4466, 1
  %v4479 = vadd.f32 %v4386, %v4471
  %v4480 = vadd.f32 %v4387, %v4472
  %v4481 = vadd.f32 %v4388, %v4473
  %v4482 = vadd.f32 %v4389, %v4474
  %4483 = vrot.lane.b32.xlu0 %v4390, 127
  %v4484 = vpop.permute.xlu0 %4483
  %v4486 = vmul.f32 %v4390, %v4484
  %4488 = vrot.lane.b32.xlu0 %v4486, 2
  %v4489 = vpop.permute.xlu0 %4488
  %v4491 = vmul.f32 %v4335, %v4489
  %4493 = vrot.lane.b32.xlu0 %v4491, 126
  %v4494 = vpop.permute.xlu0 %4493
  %v4496 = vadd.f32 %v4400, %v4494
  %v4497 = vadd.f32 %v4276, 0.03
  %v4498 = vadd.f32 %v4277, 0.03
  %v4499 = vadd.f32 %v4278, 0.03
  %v4500 = vadd.f32 %v4279, 0.03
  %v4501 = vlaneseq
  %v4502 = vshrl.u32 %v4501, 7
  %v4503 = vsub.s32 0, %v4502
  %v4504 = vrot.slane %v4491, %v4503
  %4506 = vbcast.lane.b32.xlu0 %v4504, 256
  %v4507 = vpop.permute.xlu0 %4506
  %v4508 = vlaneseq
  %v4509 = vshrl.u32 %v4508, 7
  %v4510 = vsub.s32 1, %v4509
  %v4511 = vrot.slane %v4491, %v4510
  %4513 = vbcast.lane.b32.xlu0 %v4511, 256
  %v4514 = vpop.permute.xlu0 %4513
  %v4515 = vlaneseq
  %v4516 = vshrl.u32 %v4515, 7
  %v4517 = vsub.s32 2, %v4516
  %v4518 = vrot.slane %v4491, %v4517
  %4520 = vbcast.lane.b32.xlu0 %v4518, 256
  %v4521 = vpop.permute.xlu0 %4520
  %v4522 = vlaneseq
  %v4523 = vshrl.u32 %v4522, 7
  %v4524 = vsub.s32 3, %v4523
  %v4525 = vrot.slane %v4491, %v4524
  %4527 = vbcast.lane.b32.xlu0 %v4525, 256
  %v4528 = vpop.permute.xlu0 %4527
  %v4533 = vmul.f32 %v4497, %v4507
  %v4534 = vmul.f32 %v4498, %v4514
  %v4535 = vmul.f32 %v4499, %v4521
  %v4536 = vmul.f32 %v4500, %v4528
  %v4541 = vrot.slane %v4533, 2
  %v4542 = vrot.slane %v4534, 2
  %v4543 = vrot.slane %v4535, 2
  %v4544 = vrot.slane %v4536, 2
  %v4549 = vadd.f32 %v4453, %v4541
  %v4550 = vadd.f32 %v4454, %v4542
  %v4551 = vadd.f32 %v4455, %v4543
  %v4552 = vadd.f32 %v4456, %v4544
  %v4553 = vmul.f32 %v4491, 3.0
  %4555 = vrot.lane.b32.xlu0 %v4553, 126
  %v4556 = vpop.permute.xlu0 %4555
  %v4558 = vadd.f32 %v4462, %v4556
  %v4559 = vmul.f32 %v4296, %v4507
  %v4560 = vmul.f32 %v4297, %v4514
  %v4561 = vmul.f32 %v4298, %v4521
  %v4562 = vmul.f32 %v4299, %v4528
  %v4567 = vrot.slane %v4559, 2
  %v4568 = vrot.slane %v4560, 2
  %v4569 = vrot.slane %v4561, 2
  %v4570 = vrot.slane %v4562, 2
  %v4575 = vadd.f32 %v4479, %v4567
  %v4576 = vadd.f32 %v4480, %v4568
  %v4577 = vadd.f32 %v4481, %v4569
  %v4578 = vadd.f32 %v4482, %v4570
  %4579 = vrot.lane.b32.xlu0 %v4390, 126
  %v4580 = vpop.permute.xlu0 %4579
  %v4582 = vmul.f32 %v4486, %v4580
  %4584 = vrot.lane.b32.xlu0 %v4582, 3
  %v4585 = vpop.permute.xlu0 %4584
  %v4587 = vmul.f32 %v4335, %v4585
  %4589 = vrot.lane.b32.xlu0 %v4587, 125
  %v4590 = vpop.permute.xlu0 %4589
  %v4592 = vadd.f32 %v4496, %v4590
  %v4593 = vadd.f32 %v4276, 0.04
  %v4594 = vadd.f32 %v4277, 0.04
  %v4595 = vadd.f32 %v4278, 0.04
  %v4596 = vadd.f32 %v4279, 0.04
  %v4597 = vlaneseq
  %v4598 = vshrl.u32 %v4597, 7
  %v4599 = vsub.s32 0, %v4598
  %v4600 = vrot.slane %v4587, %v4599
  %4602 = vbcast.lane.b32.xlu0 %v4600, 256
  %v4603 = vpop.permute.xlu0 %4602
  %v4604 = vlaneseq
  %v4605 = vshrl.u32 %v4604, 7
  %v4606 = vsub.s32 1, %v4605
  %v4607 = vrot.slane %v4587, %v4606
  %4609 = vbcast.lane.b32.xlu0 %v4607, 256
  %v4610 = vpop.permute.xlu0 %4609
  %v4611 = vlaneseq
  %v4612 = vshrl.u32 %v4611, 7
  %v4613 = vsub.s32 2, %v4612
  %v4614 = vrot.slane %v4587, %v4613
  %4616 = vbcast.lane.b32.xlu0 %v4614, 256
  %v4617 = vpop.permute.xlu0 %4616
  %v4618 = vlaneseq
  %v4619 = vshrl.u32 %v4618, 7
  %v4620 = vsub.s32 3, %v4619
  %v4621 = vrot.slane %v4587, %v4620
  %4623 = vbcast.lane.b32.xlu0 %v4621, 256
  %v4624 = vpop.permute.xlu0 %4623
  %v4629 = vmul.f32 %v4593, %v4603
  %v4630 = vmul.f32 %v4594, %v4610
  %v4631 = vmul.f32 %v4595, %v4617
  %v4632 = vmul.f32 %v4596, %v4624
  %v4637 = vrot.slane %v4629, 3
  %v4638 = vrot.slane %v4630, 3
  %v4639 = vrot.slane %v4631, 3
  %v4640 = vrot.slane %v4632, 3
  %v4645 = vadd.f32 %v4549, %v4637
  %v4646 = vadd.f32 %v4550, %v4638
  %v4647 = vadd.f32 %v4551, %v4639
  %v4648 = vadd.f32 %v4552, %v4640
  %v4649 = vmul.f32 %v4587, 4.0
  %4651 = vrot.lane.b32.xlu0 %v4649, 125
  %v4652 = vpop.permute.xlu0 %4651
  %v4654 = vadd.f32 %v4558, %v4652
  %v4655 = vmul.f32 %v4296, %v4603
  %v4656 = vmul.f32 %v4297, %v4610
  %v4657 = vmul.f32 %v4298, %v4617
  %v4658 = vmul.f32 %v4299, %v4624
  %v4663 = vrot.slane %v4655, 3
  %v4664 = vrot.slane %v4656, 3
  %v4665 = vrot.slane %v4657, 3
  %v4666 = vrot.slane %v4658, 3
  %v4671 = vadd.f32 %v4575, %v4663
  %v4672 = vadd.f32 %v4576, %v4664
  %v4673 = vadd.f32 %v4577, %v4665
  %v4674 = vadd.f32 %v4578, %v4666
  %4675 = vrot.lane.b32.xlu0 %v4390, 125
  %v4676 = vpop.permute.xlu0 %4675
  %v4678 = vmul.f32 %v4582, %v4676
  %4680 = vrot.lane.b32.xlu0 %v4678, 4
  %v4681 = vpop.permute.xlu0 %4680
  %v4683 = vmul.f32 %v4335, %v4681
  %4685 = vrot.lane.b32.xlu0 %v4683, 124
  %v4686 = vpop.permute.xlu0 %4685
  %v4688 = vadd.f32 %v4592, %v4686
  %v4689 = vadd.f32 %v4276, 0.05
  %v4690 = vadd.f32 %v4277, 0.05
  %v4691 = vadd.f32 %v4278, 0.05
  %v4692 = vadd.f32 %v4279, 0.05
  %v4693 = vlaneseq
  %v4694 = vshrl.u32 %v4693, 7
  %v4695 = vsub.s32 0, %v4694
  %v4696 = vrot.slane %v4683, %v4695
  %4698 = vbcast.lane.b32.xlu0 %v4696, 256
  %v4699 = vpop.permute.xlu0 %4698
  %v4700 = vlaneseq
  %v4701 = vshrl.u32 %v4700, 7
  %v4702 = vsub.s32 1, %v4701
  %v4703 = vrot.slane %v4683, %v4702
  %4705 = vbcast.lane.b32.xlu0 %v4703, 256
  %v4706 = vpop.permute.xlu0 %4705
  %v4707 = vlaneseq
  %v4708 = vshrl.u32 %v4707, 7
  %v4709 = vsub.s32 2, %v4708
  %v4710 = vrot.slane %v4683, %v4709
  %4712 = vbcast.lane.b32.xlu0 %v4710, 256
  %v4713 = vpop.permute.xlu0 %4712
  %v4714 = vlaneseq
  %v4715 = vshrl.u32 %v4714, 7
  %v4716 = vsub.s32 3, %v4715
  %v4717 = vrot.slane %v4683, %v4716
  %4719 = vbcast.lane.b32.xlu0 %v4717, 256
  %v4720 = vpop.permute.xlu0 %4719
  %v4725 = vmul.f32 %v4689, %v4699
  %v4726 = vmul.f32 %v4690, %v4706
  %v4727 = vmul.f32 %v4691, %v4713
  %v4728 = vmul.f32 %v4692, %v4720
  %v4733 = vrot.slane %v4725, 4
  %v4734 = vrot.slane %v4726, 4
  %v4735 = vrot.slane %v4727, 4
  %v4736 = vrot.slane %v4728, 4
  %v4741 = vadd.f32 %v4645, %v4733
  %v4742 = vadd.f32 %v4646, %v4734
  %v4743 = vadd.f32 %v4647, %v4735
  %v4744 = vadd.f32 %v4648, %v4736
  %v4745 = vmul.f32 %v4683, 5.0
  %4747 = vrot.lane.b32.xlu0 %v4745, 124
  %v4748 = vpop.permute.xlu0 %4747
  %v4750 = vadd.f32 %v4654, %v4748
  %v4751 = vmul.f32 %v4296, %v4699
  %v4752 = vmul.f32 %v4297, %v4706
  %v4753 = vmul.f32 %v4298, %v4713
  %v4754 = vmul.f32 %v4299, %v4720
  %v4759 = vrot.slane %v4751, 4
  %v4760 = vrot.slane %v4752, 4
  %v4761 = vrot.slane %v4753, 4
  %v4762 = vrot.slane %v4754, 4
  %v4767 = vadd.f32 %v4671, %v4759
  %v4768 = vadd.f32 %v4672, %v4760
  %v4769 = vadd.f32 %v4673, %v4761
  %v4770 = vadd.f32 %v4674, %v4762
  %4771 = vrot.lane.b32.xlu0 %v4390, 124
  %v4772 = vpop.permute.xlu0 %4771
  %v4774 = vmul.f32 %v4678, %v4772
  %4776 = vrot.lane.b32.xlu0 %v4774, 5
  %v4777 = vpop.permute.xlu0 %4776
  %v4779 = vmul.f32 %v4335, %v4777
  %4781 = vrot.lane.b32.xlu0 %v4779, 123
  %v4782 = vpop.permute.xlu0 %4781
  %v4784 = vadd.f32 %v4688, %v4782
  %v4785 = vadd.f32 %v4276, 0.06
  %v4786 = vadd.f32 %v4277, 0.06
  %v4787 = vadd.f32 %v4278, 0.06
  %v4788 = vadd.f32 %v4279, 0.06
  %v4789 = vlaneseq
  %v4790 = vshrl.u32 %v4789, 7
  %v4791 = vsub.s32 0, %v4790
  %v4792 = vrot.slane %v4779, %v4791
  %4794 = vbcast.lane.b32.xlu0 %v4792, 256
  %v4795 = vpop.permute.xlu0 %4794
  %v4796 = vlaneseq
  %v4797 = vshrl.u32 %v4796, 7
  %v4798 = vsub.s32 1, %v4797
  %v4799 = vrot.slane %v4779, %v4798
  %4801 = vbcast.lane.b32.xlu0 %v4799, 256
  %v4802 = vpop.permute.xlu0 %4801
  %v4803 = vlaneseq
  %v4804 = vshrl.u32 %v4803, 7
  %v4805 = vsub.s32 2, %v4804
  %v4806 = vrot.slane %v4779, %v4805
  %4808 = vbcast.lane.b32.xlu0 %v4806, 256
  %v4809 = vpop.permute.xlu0 %4808
  %v4810 = vlaneseq
  %v4811 = vshrl.u32 %v4810, 7
  %v4812 = vsub.s32 3, %v4811
  %v4813 = vrot.slane %v4779, %v4812
  %4815 = vbcast.lane.b32.xlu0 %v4813, 256
  %v4816 = vpop.permute.xlu0 %4815
  %v4821 = vmul.f32 %v4785, %v4795
  %v4822 = vmul.f32 %v4786, %v4802
  %v4823 = vmul.f32 %v4787, %v4809
  %v4824 = vmul.f32 %v4788, %v4816
  %v4829 = vrot.slane %v4821, 5
  %v4830 = vrot.slane %v4822, 5
  %v4831 = vrot.slane %v4823, 5
  %v4832 = vrot.slane %v4824, 5
  %v4837 = vadd.f32 %v4741, %v4829
  %v4838 = vadd.f32 %v4742, %v4830
  %v4839 = vadd.f32 %v4743, %v4831
  %v4840 = vadd.f32 %v4744, %v4832
  %v4841 = vmul.f32 %v4779, 6.0
  %4843 = vrot.lane.b32.xlu0 %v4841, 123
  %v4844 = vpop.permute.xlu0 %4843
  %v4846 = vadd.f32 %v4750, %v4844
  %v4847 = vmul.f32 %v4296, %v4795
  %v4848 = vmul.f32 %v4297, %v4802
  %v4849 = vmul.f32 %v4298, %v4809
  %v4850 = vmul.f32 %v4299, %v4816
  %v4855 = vrot.slane %v4847, 5
  %v4856 = vrot.slane %v4848, 5
  %v4857 = vrot.slane %v4849, 5
  %v4858 = vrot.slane %v4850, 5
  %v4863 = vadd.f32 %v4767, %v4855
  %v4864 = vadd.f32 %v4768, %v4856
  %v4865 = vadd.f32 %v4769, %v4857
  %v4866 = vadd.f32 %v4770, %v4858
  %4867 = vrot.lane.b32.xlu0 %v4390, 123
  %v4868 = vpop.permute.xlu0 %4867
  %v4870 = vmul.f32 %v4774, %v4868
  %4872 = vrot.lane.b32.xlu0 %v4870, 6
  %v4873 = vpop.permute.xlu0 %4872
  %v4875 = vmul.f32 %v4335, %v4873
  %4877 = vrot.lane.b32.xlu0 %v4875, 122
  %v4878 = vpop.permute.xlu0 %4877
  %v4880 = vadd.f32 %v4784, %v4878
  %v4881 = vadd.f32 %v4276, 0.07
  %v4882 = vadd.f32 %v4277, 0.07
  %v4883 = vadd.f32 %v4278, 0.07
  %v4884 = vadd.f32 %v4279, 0.07
  %v4885 = vlaneseq
  %v4886 = vshrl.u32 %v4885, 7
  %v4887 = vsub.s32 0, %v4886
  %v4888 = vrot.slane %v4875, %v4887
  %4890 = vbcast.lane.b32.xlu0 %v4888, 256
  %v4891 = vpop.permute.xlu0 %4890
  %v4892 = vlaneseq
  %v4893 = vshrl.u32 %v4892, 7
  %v4894 = vsub.s32 1, %v4893
  %v4895 = vrot.slane %v4875, %v4894
  %4897 = vbcast.lane.b32.xlu0 %v4895, 256
  %v4898 = vpop.permute.xlu0 %4897
  %v4899 = vlaneseq
  %v4900 = vshrl.u32 %v4899, 7
  %v4901 = vsub.s32 2, %v4900
  %v4902 = vrot.slane %v4875, %v4901
  %4904 = vbcast.lane.b32.xlu0 %v4902, 256
  %v4905 = vpop.permute.xlu0 %4904
  %v4906 = vlaneseq
  %v4907 = vshrl.u32 %v4906, 7
  %v4908 = vsub.s32 3, %v4907
  %v4909 = vrot.slane %v4875, %v4908
  %4911 = vbcast.lane.b32.xlu0 %v4909, 256
  %v4912 = vpop.permute.xlu0 %4911
  %v4917 = vmul.f32 %v4881, %v4891
  %v4918 = vmul.f32 %v4882, %v4898
  %v4919 = vmul.f32 %v4883, %v4905
  %v4920 = vmul.f32 %v4884, %v4912
  %v4925 = vrot.slane %v4917, 6
  %v4926 = vrot.slane %v4918, 6
  %v4927 = vrot.slane %v4919, 6
  %v4928 = vrot.slane %v4920, 6
  %v4933 = vadd.f32 %v4837, %v4925
  %v4934 = vadd.f32 %v4838, %v4926
  %v4935 = vadd.f32 %v4839, %v4927
  %v4936 = vadd.f32 %v4840, %v4928
  %v4937 = vmul.f32 %v4875, 7.0
  %4939 = vrot.lane.b32.xlu0 %v4937, 122
  %v4940 = vpop.permute.xlu0 %4939
  %v4942 = vadd.f32 %v4846, %v4940
  %v4943 = vmul.f32 %v4296, %v4891
  %v4944 = vmul.f32 %v4297, %v4898
  %v4945 = vmul.f32 %v4298, %v4905
  %v4946 = vmul.f32 %v4299, %v4912
  %v4951 = vrot.slane %v4943, 6
  %v4952 = vrot.slane %v4944, 6
  %v4953 = vrot.slane %v4945, 6
  %v4954 = vrot.slane %v4946, 6
  %v4959 = vadd.f32 %v4863, %v4951
  %v4960 = vadd.f32 %v4864, %v4952
  %v4961 = vadd.f32 %v4865, %v4953
  %v4962 = vadd.f32 %v4866, %v4954
  %4963 = vrot.lane.b32.xlu0 %v4390, 122
  %v4964 = vpop.permute.xlu0 %4963
  %v4966 = vmul.f32 %v4870, %v4964
  %v4967 = vadd.f32 %v4880, %v4966
  %v4969 = vlaneseq
  %v4970 = vshrl.u32 %v4969, 7
  %v4971 = vsub.s32 0, %v4970
  %v4972 = vrot.slane %v4966, %v4971
  %s4974 = sor.u32 256, 250
  %4975 = vbcast.lane.b32.xlu0 %v4972, %s4974
  %v4976 = vpop.permute.xlu0 %4975
  %v4977 = vlaneseq
  %v4978 = vshrl.u32 %v4977, 7
  %v4979 = vsub.s32 1, %v4978
  %v4980 = vrot.slane %v4966, %v4979
  %s4982 = sor.u32 256, 250
  %4983 = vbcast.lane.b32.xlu0 %v4980, %s4982
  %v4984 = vpop.permute.xlu0 %4983
  %v4985 = vlaneseq
  %v4986 = vshrl.u32 %v4985, 7
  %v4987 = vsub.s32 2, %v4986
  %v4988 = vrot.slane %v4966, %v4987
  %s4990 = sor.u32 256, 250
  %4991 = vbcast.lane.b32.xlu0 %v4988, %s4990
  %v4992 = vpop.permute.xlu0 %4991
  %v4993 = vlaneseq
  %v4994 = vshrl.u32 %v4993, 7
  %v4995 = vsub.s32 3, %v4994
  %v4996 = vrot.slane %v4966, %v4995
  %s4998 = sor.u32 256, 250
  %4999 = vbcast.lane.b32.xlu0 %v4996, %s4998
  %v5000 = vpop.permute.xlu0 %4999
  %v5005 = vmul.f32 %v4881, %v4976
  %v5006 = vmul.f32 %v4882, %v4984
  %v5007 = vmul.f32 %v4883, %v4992
  %v5008 = vmul.f32 %v4884, %v5000
  %v5013 = vrot.slane %v5005, 6
  %v5014 = vrot.slane %v5006, 6
  %v5015 = vrot.slane %v5007, 6
  %v5016 = vrot.slane %v5008, 6
  %v5021 = vadd.f32 %v4933, %v5013
  %v5022 = vadd.f32 %v4934, %v5014
  %v5023 = vadd.f32 %v4935, %v5015
  %v5024 = vadd.f32 %v4936, %v5016
  %v5025 = vmul.f32 %v4966, 7.0
  %v5026 = vadd.f32 %v4942, %v5025
  %v5027 = vmul.f32 %v4296, %v4976
  %v5028 = vmul.f32 %v4297, %v4984
  %v5029 = vmul.f32 %v4298, %v4992
  %v5030 = vmul.f32 %v4299, %v5000
  %v5035 = vrot.slane %v5027, 6
  %v5036 = vrot.slane %v5028, 6
  %v5037 = vrot.slane %v5029, 6
  %v5038 = vrot.slane %v5030, 6
  %v5043 = vadd.f32 %v4959, %v5035
  %v5044 = vadd.f32 %v4960, %v5036
  %v5045 = vadd.f32 %v4961, %v5037
  %v5046 = vadd.f32 %v4962, %v5038
  %5047 = vrot.lane.b32.xlu0 %v405, 8
  %v5048 = vpop.permute.xlu0 %5047
  %5050 = vrot.lane.b32.xlu0 %v563, 16
  %v5051 = vpop.permute.xlu0 %5050
  %5053 = vrot.lane.b32.xlu0 %v721, 24
  %v5054 = vpop.permute.xlu0 %5053
  %5056 = vrot.lane.b32.xlu0 %v879, 32
  %v5057 = vpop.permute.xlu0 %5056
  %5059 = vrot.lane.b32.xlu0 %v1037, 40
  %v5060 = vpop.permute.xlu0 %5059
  %5062 = vrot.lane.b32.xlu0 %v1054, 48
  %v5063 = vpop.permute.xlu0 %5062
  %v5065 = vsel %vm255, %v237, %v5048
  %v5066 = vsel %vm55, %v5065, %v5051
  %vm5067 = vcmask 195584
  %v5068 = vsel %vm5067, %v5066, %v5054
  %v5069 = vsel %vm114, %v5068, %v5057
  %vm5070 = vcmask 326656
  %v5071 = vsel %vm5070, %v5069, %v5060
  %vm5072 = vcmask 392192
  %v5073 = vsel %vm5072, %v5071, %v5063
  %5075 = vrot.lane.b32.xlu0 %v417, 8
  %v5076 = vpop.permute.xlu0 %5075
  %5079 = vrot.lane.b32.xlu0 %v575, 16
  %v5080 = vpop.permute.xlu0 %5079
  %5083 = vrot.lane.b32.xlu0 %v733, 24
  %v5084 = vpop.permute.xlu0 %5083
  %5087 = vrot.lane.b32.xlu0 %v891, 32
  %v5088 = vpop.permute.xlu0 %5087
  %5091 = vrot.lane.b32.xlu0 %v1049, 40
  %v5092 = vpop.permute.xlu0 %5091
  %5095 = vrot.lane.b32.xlu0 %v1055, 48
  %v5096 = vpop.permute.xlu0 %5095
  %v5098 = vsel %vm255, %v249, %v5076
  %v5099 = vsel %vm55, %v5098, %v5080
  %v5100 = vsel %vm5067, %v5099, %v5084
  %v5101 = vsel %vm114, %v5100, %v5088
  %v5102 = vsel %vm5070, %v5101, %v5092
  %v5103 = vsel %vm5072, %v5102, %v5096
  %v5104 = vsel %vm1509, %v3120, %v3116
  %v5105 = vsel %vm1511, %v3124, %v5104
  %v5106 = vsel %vm1513, %v3128, %v5105
  %v5108 = vadd.s32 %v1051, 4294967292
  %v5109 = vlaneseq
  %v5110 = vshrl.u32 %v5109, 7
  %v5111 = vsub.s32 %v5108, %v5110
  %v5112 = vrot.slane %v3139, %v5111
  %v5113 = vlaneseq
  %v5114 = vshrl.u32 %v5113, 7
  %v5115 = vsub.s32 %v5108, %v5114
  %v5116 = vrot.slane %v3142, %v5115
  %v5117 = vlaneseq
  %v5118 = vshrl.u32 %v5117, 7
  %v5119 = vsub.s32 %v5108, %v5118
  %v5120 = vrot.slane %v3145, %v5119
  %v5121 = vlaneseq
  %v5122 = vshrl.u32 %v5121, 7
  %v5123 = vsub.s32 %v5108, %v5122
  %v5124 = vrot.slane %v3148, %v5123
  %v5125 = vsel %vm1509, %v5116, %v5112
  %v5126 = vsel %vm1511, %v5120, %v5125
  %v5127 = vsel %vm1513, %v5124, %v5126
  %v5129 = vadd.s32 %v1051, 4294967288
  %v5130 = vlaneseq
  %v5131 = vshrl.u32 %v5130, 7
  %v5132 = vsub.s32 %v5129, %v5131
  %v5133 = vrot.slane %v3175, %v5132
  %v5134 = vlaneseq
  %v5135 = vshrl.u32 %v5134, 7
  %v5136 = vsub.s32 %v5129, %v5135
  %v5137 = vrot.slane %v3178, %v5136
  %v5138 = vlaneseq
  %v5139 = vshrl.u32 %v5138, 7
  %v5140 = vsub.s32 %v5129, %v5139
  %v5141 = vrot.slane %v3181, %v5140
  %v5142 = vlaneseq
  %v5143 = vshrl.u32 %v5142, 7
  %v5144 = vsub.s32 %v5129, %v5143
  %v5145 = vrot.slane %v3184, %v5144
  %v5146 = vsel %vm1509, %v5137, %v5133
  %v5147 = vsel %vm1511, %v5141, %v5146
  %v5148 = vsel %vm1513, %v5145, %v5147
  %v5150 = vadd.s32 %v1051, 4294967284
  %v5151 = vlaneseq
  %v5152 = vshrl.u32 %v5151, 7
  %v5153 = vsub.s32 %v5150, %v5152
  %v5154 = vrot.slane %v3211, %v5153
  %v5155 = vlaneseq
  %v5156 = vshrl.u32 %v5155, 7
  %v5157 = vsub.s32 %v5150, %v5156
  %v5158 = vrot.slane %v3214, %v5157
  %v5159 = vlaneseq
  %v5160 = vshrl.u32 %v5159, 7
  %v5161 = vsub.s32 %v5150, %v5160
  %v5162 = vrot.slane %v3217, %v5161
  %v5163 = vlaneseq
  %v5164 = vshrl.u32 %v5163, 7
  %v5165 = vsub.s32 %v5150, %v5164
  %v5166 = vrot.slane %v3220, %v5165
  %v5167 = vsel %vm1509, %v5158, %v5154
  %v5168 = vsel %vm1511, %v5162, %v5167
  %v5169 = vsel %vm1513, %v5166, %v5168
  %v5171 = vadd.s32 %v1051, 4294967280
  %v5172 = vlaneseq
  %v5173 = vshrl.u32 %v5172, 7
  %v5174 = vsub.s32 %v5171, %v5173
  %v5175 = vrot.slane %v3247, %v5174
  %v5176 = vlaneseq
  %v5177 = vshrl.u32 %v5176, 7
  %v5178 = vsub.s32 %v5171, %v5177
  %v5179 = vrot.slane %v3250, %v5178
  %v5180 = vlaneseq
  %v5181 = vshrl.u32 %v5180, 7
  %v5182 = vsub.s32 %v5171, %v5181
  %v5183 = vrot.slane %v3253, %v5182
  %v5184 = vlaneseq
  %v5185 = vshrl.u32 %v5184, 7
  %v5186 = vsub.s32 %v5171, %v5185
  %v5187 = vrot.slane %v3256, %v5186
  %v5188 = vsel %vm1509, %v5179, %v5175
  %v5189 = vsel %vm1511, %v5183, %v5188
  %v5190 = vsel %vm1513, %v5187, %v5189
  %v5192 = vadd.s32 %v1051, 4294967276
  %v5193 = vlaneseq
  %v5194 = vshrl.u32 %v5193, 7
  %v5195 = vsub.s32 %v5192, %v5194
  %v5196 = vrot.slane %v3283, %v5195
  %v5197 = vlaneseq
  %v5198 = vshrl.u32 %v5197, 7
  %v5199 = vsub.s32 %v5192, %v5198
  %v5200 = vrot.slane %v3286, %v5199
  %v5201 = vlaneseq
  %v5202 = vshrl.u32 %v5201, 7
  %v5203 = vsub.s32 %v5192, %v5202
  %v5204 = vrot.slane %v3289, %v5203
  %v5205 = vlaneseq
  %v5206 = vshrl.u32 %v5205, 7
  %v5207 = vsub.s32 %v5192, %v5206
  %v5208 = vrot.slane %v3292, %v5207
  %v5209 = vsel %vm1509, %v5200, %v5196
  %v5210 = vsel %vm1511, %v5204, %v5209
  %v5211 = vsel %vm1513, %v5208, %v5210
  %v5213 = vadd.s32 %v1051, 4294967272
  %v5214 = vlaneseq
  %v5215 = vshrl.u32 %v5214, 7
  %v5216 = vsub.s32 %v5213, %v5215
  %v5217 = vrot.slane %v3319, %v5216
  %v5218 = vlaneseq
  %v5219 = vshrl.u32 %v5218, 7
  %v5220 = vsub.s32 %v5213, %v5219
  %v5221 = vrot.slane %v3322, %v5220
  %v5222 = vlaneseq
  %v5223 = vshrl.u32 %v5222, 7
  %v5224 = vsub.s32 %v5213, %v5223
  %v5225 = vrot.slane %v3325, %v5224
  %v5226 = vlaneseq
  %v5227 = vshrl.u32 %v5226, 7
  %v5228 = vsub.s32 %v5213, %v5227
  %v5229 = vrot.slane %v3328, %v5228
  %v5230 = vsel %vm1509, %v5221, %v5217
  %v5231 = vsel %vm1511, %v5225, %v5230
  %v5232 = vsel %vm1513, %v5229, %v5231
  %v5234 = vsel %vm4330, %v5106, %v5127
  %v5235 = vsel %vm255, %v5234, %v5148
  %vm5236 = vcmask 97280
  %v5237 = vsel %vm5236, %v5235, %v5169
  %v5238 = vsel %vm55, %v5237, %v5190
  %vm5239 = vcmask 162816
  %v5240 = vsel %vm5239, %v5238, %v5211
  %v5241 = vsel %vm5067, %v5240, %v5232
  %v5246 = vrot.slane %v5022, 7
  %v5247 = vsel %vm1509, %v5246, %v5021
  %v5248 = vrot.slane %v5023, 6
  %v5249 = vsel %vm1511, %v5248, %v5247
  %v5250 = vrot.slane %v5024, 5
  %v5251 = vsel %vm1513, %v5250, %v5249
  %5254 = vrot.lane.b32.xlu0 %v5026, 1
  %v5255 = vpop.permute.xlu0 %5254
  %5258 = vrot.lane.b32.xlu0 %v4967, 2
  %v5259 = vpop.permute.xlu0 %5258
  %v5265 = vrot.slane %v5044, 7
  %v5266 = vsel %vm1509, %v5265, %v5043
  %v5267 = vrot.slane %v5045, 6
  %v5268 = vsel %vm1511, %v5267, %v5266
  %v5269 = vrot.slane %v5046, 5
  %v5270 = vsel %vm1513, %v5269, %v5268
  %5271 = vrot.lane.b32.xlu0 %v5270, 3
  %v5272 = vpop.permute.xlu0 %5271
  %v5274 = vsel %vm4324, %v5251, %v5255
  %v5275 = vsel %vm4326, %v5274, %v5259
  %v5276 = vsel %vm4328, %v5275, %v5272
  %5278 = vrot.lane.b32.xlu0 %v5103, 56
  %v5279 = vpop.permute.xlu0 %5278
  %5282 = vrot.lane.b32.xlu0 %v5241, 112
  %v5283 = vpop.permute.xlu0 %5282
  %5286 = vrot.lane.b32.xlu0 %v5276, 12
  %v5287 = vpop.permute.xlu0 %5286
  %vm5289 = vcmask 457728
  %v5290 = vsel %vm5289, %v5073, %v5279
  %vm5291 = vcmask 916480
  %v5292 = vsel %vm5291, %v5290, %v5283
  %v5293 = vsel %vm5236, %v5283, %v5287
  %v5294 = vsel %vm55, %v5293, 0.0
  %v5297 = vcombine.low %v5292, %v5294
  %5299 = vst [vmem:[%s6] sm:$0xff] %v5297
  // Predicated region
  $region26: #{forward.1} parent=0 // pred_check
    _
  $region27: #{forward.1} parent=0 // pred_check_branch
    %5301 = sbr.rel (0) target = $region29
  $region28: #{forward.1} parent=0 // pred_region
    _
  $region29: #{forward.1} parent=0 // pred_fallthru
    _
  // Predicated region
  $region30: #{forward.1} parent=0 // pred_check
    _
  $region31: #{forward.1} parent=0 // pred_check_branch
    %5303 = sbr.rel (0) target = $region33
  $region32: #{forward.1} parent=0 // pred_region
    _
  $region33: #{forward.1} parent=0 // pred_fallthru
    _

</llo_original>
